<compile_context>
chip_gen: v7x
topology: tpu7x:2x2x1
jax: 0.10.0
libtpu: 0.0.40
codegen_flags: <defaults>
</compile_context>

<pallas_src>
import functools

import jax
import jax.numpy as jnp
import numpy as np
from jax.experimental import pallas as pl
from jax.experimental.pallas import tpu as pltpu


# ---------------------------------------------------------------------------
# Host-side operator-matrix construction (one-time weight preprocessing).
# ---------------------------------------------------------------------------
def _interp_matrix(out_size: int, in_size: int) -> np.ndarray:
    """1-D linear interpolation matrix, PyTorch bilinear align_corners=True."""
    m = np.zeros((out_size, in_size), np.float64)
    if out_size == 1:
        m[0, 0] = 1.0
    else:
        src = np.arange(out_size) * (in_size - 1) / (out_size - 1)
        i0 = np.clip(np.floor(src).astype(np.int64), 0, in_size - 1)
        i1 = np.clip(i0 + 1, 0, in_size - 1)
        frac = src - i0
        m[np.arange(out_size), i0] += 1.0 - frac
        m[np.arange(out_size), i1] += frac
    return m.astype(np.float32)


def _shift_matrix(width: int, off: int) -> np.ndarray:
    """(width, width) 0/1 matrix D with D[w + off, w] = 1 (clipped to range)."""
    d = np.zeros((width, width), np.float32)
    idx = np.arange(width)
    src = idx + off
    ok = (src >= 0) & (src < width)
    d[src[ok], idx[ok]] = 1.0
    return d


def _band_conv_matrix(k_dy, width: int, pad: int):
    """Banded 'convolution along W' matrix for one kernel row.

    k_dy: (kw, Cin, Cout).  For a packed feature row a[h, w*Cin + ci], the product
    a @ M equals the same-padded 1-D convolution along W for this kernel row
    (the W zero-padding is folded into the matrix).  Shape: (width*Cin, width*Cout).
    """
    kw = k_dy.shape[0]
    m = 0.0
    for dx in range(kw):
        m = m + jnp.kron(jnp.asarray(_shift_matrix(width, dx - pad)), k_dy[dx])
    return m


def _pool_select_matrices(w_in: int, c: int):
    """0/1 matrices selecting the even / odd W-blocks of a packed (.., w_in*c) row."""
    w_out = w_in // 2
    e = np.zeros((w_in * c, w_out * c), np.float32)
    o = np.zeros((w_in * c, w_out * c), np.float32)
    for j in range(w_out):
        for cc in range(c):
            e[(2 * j) * c + cc, j * c + cc] = 1.0
            o[(2 * j + 1) * c + cc, j * c + cc] = 1.0
    return e, o


# ---------------------------------------------------------------------------
# Fused kernel: whole DED4_noupin forward for one batch element.
# Packed layout everywhere: a (Hf, Wf, Cf) feature map is a 2-D (Hf, Wf*Cf) tile.
# ---------------------------------------------------------------------------
def _ded4_kernel(x_ref, small_ref,
                 a1_ref, bk1_ref, a2_ref, bk2_ref,
                 m5_ref, b5_ref, m3_ref, b3_ref, w1_ref, b1_ref,
                 s5e_ref, s5o_ref, s1e_ref, s1o_ref,
                 out_ref,
                 uph_ref, cath_ref, *, C, H, W):
    f32 = jnp.float32
    Hq, Wq, H2, W2 = H // 2, W // 2, 2 * H, 2 * W
    KW2, KW, KWq = W2 * C, W * C, Wq * C          # packed lane widths

    def pool2x2(a, rows, se_ref, so_ref):
        # a: (rows, cols) packed (w, c)  ->  (rows//2, cols//2)
        p = a.reshape(rows // 2, 2, a.shape[-1])
        p = jnp.maximum(p[:, 0, :], p[:, 1, :])                 # pool along H
        return jnp.maximum(                                      # pool along W (0/1 selects)
            jnp.dot(p, se_ref[...], preferred_element_type=f32),
            jnp.dot(p, so_ref[...], preferred_element_type=f32))

    x = x_ref[...]                                               # (H, W*C)

    # ---- bilinear x2 upsample of x (separable matmuls; channels packed on lanes) ----
    up = jnp.dot(a1_ref[...], x, preferred_element_type=f32)     # (H2, W*C)
    up = jnp.dot(up, bk1_ref[...], preferred_element_type=f32)   # (H2, W2*C)

    # ---- conv5x5 (same pad) = 5 row-shifted banded matmuls; then ReLU + maxpool ----
    uph_ref[...] = jnp.zeros_like(uph_ref)                       # zero the H halo
    uph_ref[2:2 + H2, :] = up
    t0 = jnp.dot(uph_ref[0:H2, :], m5_ref[0 * KW2:1 * KW2, :], preferred_element_type=f32)
    t1 = jnp.dot(uph_ref[1:1 + H2, :], m5_ref[1 * KW2:2 * KW2, :], preferred_element_type=f32)
    t2 = jnp.dot(uph_ref[2:2 + H2, :], m5_ref[2 * KW2:3 * KW2, :], preferred_element_type=f32)
    t3 = jnp.dot(uph_ref[3:3 + H2, :], m5_ref[3 * KW2:4 * KW2, :], preferred_element_type=f32)
    t4 = jnp.dot(uph_ref[4:4 + H2, :], m5_ref[4 * KW2:5 * KW2, :], preferred_element_type=f32)
    conv5 = jnp.maximum(((t0 + t1) + (t2 + t3)) + t4 + b5_ref[...], 0.0)   # (H2, W2*C)
    f1 = pool2x2(conv5, H2, s5e_ref, s5o_ref)                    # (H, W*C)

    # ---- conv3x3 over cat([pool(x), pool(f1), small]) = 3 banded matmuls; then ReLU ----
    cath_ref[...] = jnp.zeros_like(cath_ref)                     # (Hq+2, Wq*4C), zero halo
    cath_ref[1:1 + Hq, 0:KWq] = pool2x2(x, H, s1e_ref, s1o_ref)
    cath_ref[1:1 + Hq, KWq:2 * KWq] = pool2x2(f1, H, s1e_ref, s1o_ref)
    cath_ref[1:1 + Hq, 2 * KWq:4 * KWq] = small_ref[...]
    K3 = 4 * KWq
    u0 = jnp.dot(cath_ref[0:Hq, :], m3_ref[0 * K3:1 * K3, :], preferred_element_type=f32)
    u1 = jnp.dot(cath_ref[1:1 + Hq, :], m3_ref[1 * K3:2 * K3, :], preferred_element_type=f32)
    u2 = jnp.dot(cath_ref[2:2 + Hq, :], m3_ref[2 * K3:3 * K3, :], preferred_element_type=f32)
    g = jnp.maximum((u0 + u1) + u2 + b3_ref[...], 0.0)           # (Hq, Wq*C)

    # ---- bilinear x2 upsample of g ----
    f2 = jnp.dot(a2_ref[...], g, preferred_element_type=f32)     # (H, Wq*C)
    f2 = jnp.dot(f2, bk2_ref[...], preferred_element_type=f32)   # (H, W*C)

    # ---- 1x1 conv over cat([x, f1, f2]) via split block-diagonal weights ----
    y = jnp.dot(x, w1_ref[0:KW, :], preferred_element_type=f32)
    y = y + jnp.dot(f1, w1_ref[KW:2 * KW, :], preferred_element_type=f32)
    y = y + jnp.dot(f2, w1_ref[2 * KW:3 * KW, :], preferred_element_type=f32)
    out_ref[...] = y + b1_ref[...]                               # (H, W*C), lane-dense


# ---------------------------------------------------------------------------
# Forward wrapper: boundary layout + one-time operator matrices, one pallas_call.
# ---------------------------------------------------------------------------
def ded4_forward(x, small, params):
    """x: (N, C, H, W), small: (N, 2C, H/2, W/2)  ->  (N, C, H, W)."""
    N, C, H, W = x.shape
    Ns, C2s, Hq, Wq = small.shape
    assert Ns == N and C2s == 2 * C and Hq * 2 == H and Wq * 2 == W
    H2, W2 = 2 * H, 2 * W
    KW2, KW, KWq = W2 * C, W * C, Wq * C
    k5, b5, k3, b3, w1, b1 = params   # k5 (5,5,C,C), k3 (3,3,4C,C), w1 (3C,C)

    f32 = jnp.float32
    x = x.astype(f32)
    small = small.astype(f32)

    # ---- one-time operator matrices (constant-folded under jit) ----
    eye_c = np.eye(C, dtype=np.float32)
    a1 = jnp.asarray(_interp_matrix(H2, H))                                  # (H2, H)
    bk1 = jnp.asarray(np.kron(_interp_matrix(W2, W), eye_c).T)               # (W*C, W2*C)
    a2 = jnp.asarray(_interp_matrix(H, Hq))                                  # (H, Hq)
    bk2 = jnp.asarray(np.kron(_interp_matrix(W, Wq), eye_c).T)               # (Wq*C, W*C)

    m5 = jnp.concatenate([_band_conv_matrix(k5[dy], W2, 2) for dy in range(5)], axis=0)
    m3 = jnp.concatenate(
        [jnp.concatenate([_band_conv_matrix(k3[dy, :, 0:C, :], Wq, 1),
                          _band_conv_matrix(k3[dy, :, C:2 * C, :], Wq, 1),
                          _band_conv_matrix(k3[dy, :, 2 * C:4 * C, :], Wq, 1)], axis=0)
         for dy in range(3)], axis=0)                                        # (3*Wq*4C, Wq*C)
    w1s = jnp.concatenate(
        [jnp.kron(jnp.asarray(np.eye(W, dtype=np.float32)), w1[i * C:(i + 1) * C, :])
         for i in range(3)], axis=0)                                         # (3*W*C, W*C)
    b5r = jnp.tile(b5, W2).reshape(1, KW2)
    b3r = jnp.tile(b3, Wq).reshape(1, KWq)
    b1r = jnp.tile(b1, W).reshape(1, KW)
    s5e, s5o = map(jnp.asarray, _pool_select_matrices(W2, C))                # (W2*C, W*C)
    s1e, s1o = map(jnp.asarray, _pool_select_matrices(W, C))                 # (W*C, Wq*C)

    # ---- boundary layout: NCHW -> packed rows (H, W*C) ----
    x_p = jnp.transpose(x, (0, 2, 3, 1)).reshape(N, H, KW)
    small_p = jnp.transpose(small, (0, 2, 3, 1)).reshape(N, Hq, Wq * 2 * C)

    const = lambda n: (0, 0)
    out_p = pl.pallas_call(
        functools.partial(_ded4_kernel, C=C, H=H, W=W),
        out_shape=jax.ShapeDtypeStruct((N, H, KW), f32),
        grid=(N,),
        in_specs=[
            pl.BlockSpec((None, H, KW), lambda n: (n, 0, 0)),
            pl.BlockSpec((None, Hq, Wq * 2 * C), lambda n: (n, 0, 0)),
            pl.BlockSpec((H2, H), const),
            pl.BlockSpec((KW, KW2), const),
            pl.BlockSpec((H, Hq), const),
            pl.BlockSpec((KWq, KW), const),
            pl.BlockSpec((5 * KW2, KW2), const),
            pl.BlockSpec((1, KW2), const),
            pl.BlockSpec((3 * 4 * KWq, KWq), const),
            pl.BlockSpec((1, KWq), const),
            pl.BlockSpec((3 * KW, KW), const),
            pl.BlockSpec((1, KW), const),
            pl.BlockSpec((KW2, KW), const),
            pl.BlockSpec((KW2, KW), const),
            pl.BlockSpec((KW, KWq), const),
            pl.BlockSpec((KW, KWq), const),
        ],
        out_specs=pl.BlockSpec((None, H, KW), lambda n: (n, 0, 0)),
        scratch_shapes=[pltpu.VMEM((H2 + 4, KW2), f32),      # H-padded upsampled image
                        pltpu.VMEM((Hq + 2, 4 * KWq), f32)],  # H-padded conv3 input
        compiler_params=pltpu.CompilerParams(dimension_semantics=("parallel",)),
    )(x_p, small_p, a1, bk1, a2, bk2, m5, b5r, m3, b3r, w1s, b1r, s5e, s5o, s1e, s1o)

    out = out_p.reshape(N, H, W, C)
    return jnp.transpose(out, (0, 3, 1, 2))                                   # NCHW


# ---------------------------------------------------------------------------
# Pure-JAX reference (same math / weight layout), for validation.
# ---------------------------------------------------------------------------
def _upsample_ref(t):   # (N, C, h, w) -> (N, C, 2h, 2w)
    _, _, h, w = t.shape
    A = jnp.asarray(_interp_matrix(2 * h, h))
    B = jnp.asarray(_interp_matrix(2 * w, w))
    t = jnp.einsum('Hh,nchw->ncHw', A, t)
    return jnp.einsum('Ww,ncHw->ncHW', B, t)


def _conv2d_ref(t, k, b, pad):   # NHWC, k: (kh, kw, Ci, Co)
    n, h, w, _ = t.shape
    kh, kw, _, co = k.shape
    tp = jnp.pad(t, ((0, 0), (pad, pad), (pad, pad), (0, 0)))
    out = jnp.zeros((n, h, w, co), jnp.float32) + b
    for dy in range(kh):
        for dx in range(kw):
            out = out + tp[:, dy:dy + h, dx:dx + w, :] @ k[dy, dx]
    return out


def _maxpool_ref(t):   # NHWC, 2x2 stride 2
    n, h, w, c = t.shape
    return jnp.max(t.reshape(n, h // 2, 2, w // 2, 2, c), axis=(2, 4))


def ded4_reference(x, small, params):
    k5, b5, k3, b3, w1, b1 = params
    x_cl = jnp.transpose(x, (0, 2, 3, 1))
    big_cl = jnp.transpose(_upsample_ref(x), (0, 2, 3, 1))
    f1 = _maxpool_ref(jnp.maximum(_conv2d_ref(big_cl, k5, b5, 2), 0.0))
    f1cat = jnp.concatenate([x_cl, f1], axis=-1)
    pooled = _maxpool_ref(f1cat)
    small_cl = jnp.transpose(small, (0, 2, 3, 1))
    f2in = jnp.concatenate([pooled, small_cl], axis=-1)
    gg = jnp.maximum(_conv2d_ref(f2in, k3, b3, 1), 0.0)
    f2_cl = jnp.transpose(_upsample_ref(jnp.transpose(gg, (0, 3, 1, 2))), (0, 2, 3, 1))
    out = jnp.concatenate([f1cat, f2_cl], axis=-1) @ w1 + b1
    return jnp.transpose(out, (0, 3, 1, 2))


if __name__ == "__main__":
    key = jax.random.PRNGKey(0)
    N, ch, H, W = 2, 4, 16, 16
    Hq, Wq = H // 2, W // 2

    ks = jax.random.split(key, 8)
    x = jax.random.normal(ks[0], (N, ch, H, W), jnp.float32)
    small = jax.random.normal(ks[1], (N, 2 * ch, Hq, Wq), jnp.float32)

    # Conv weights stored as (kh, kw, in_ch, out_ch); 1x1 conv as (in_ch, out_ch).
    k5 = jax.random.normal(ks[2], (5, 5, ch, ch), jnp.float32) * 0.1
    b5 = jax.random.normal(ks[3], (ch,), jnp.float32) * 0.1
    k3 = jax.random.normal(ks[4], (3, 3, 4 * ch, ch), jnp.float32) * 0.1
    b3 = jax.random.normal(ks[5], (ch,), jnp.float32) * 0.1
    w1 = jax.random.normal(ks[6], (3 * ch, ch), jnp.float32) * 0.1
    b1 = jax.random.normal(ks[7], (ch,), jnp.float32) * 0.1
    params = (k5, b5, k3, b3, w1, b1)

    out = jax.block_until_ready(jax.jit(ded4_forward)(x, small, params))
    ref = jax.block_until_ready(ded4_reference(x, small, params))
    assert out.shape == (N, ch, H, W)
    np.testing.assert_allclose(np.asarray(out), np.asarray(ref), atol=1e-3, rtol=1e-3)
    print("KERNEL_OK")
</pallas_src>

<mosaic_0001>
module attributes {stable_mosaic.version = 11 : i64} {
  func.func @_ded4_kernel(%arg0: i32, %arg1: memref<1x16x64xf32, #tpu.memory_space<vmem>>, %arg2: memref<1x8x64xf32, #tpu.memory_space<vmem>>, %arg3: memref<32x16xf32, #tpu.memory_space<vmem>>, %arg4: memref<64x128xf32, #tpu.memory_space<vmem>>, %arg5: memref<16x8xf32, #tpu.memory_space<vmem>>, %arg6: memref<32x64xf32, #tpu.memory_space<vmem>>, %arg7: memref<640x128xf32, #tpu.memory_space<vmem>>, %arg8: memref<1x128xf32, #tpu.memory_space<vmem>>, %arg9: memref<384x32xf32, #tpu.memory_space<vmem>>, %arg10: memref<1x32xf32, #tpu.memory_space<vmem>>, %arg11: memref<192x64xf32, #tpu.memory_space<vmem>>, %arg12: memref<1x64xf32, #tpu.memory_space<vmem>>, %arg13: memref<128x64xf32, #tpu.memory_space<vmem>>, %arg14: memref<128x64xf32, #tpu.memory_space<vmem>>, %arg15: memref<64x32xf32, #tpu.memory_space<vmem>>, %arg16: memref<64x32xf32, #tpu.memory_space<vmem>>, %arg17: memref<1x16x64xf32, #tpu.memory_space<vmem>>, %arg18: memref<36x128xf32, #tpu.memory_space<vmem>>, %arg19: memref<10x128xf32, #tpu.memory_space<vmem>>) attributes {dimension_semantics = [#tpu.dimension_semantics<parallel>], iteration_bounds = array<i64: 2>, scalar_prefetch = 0 : i64, scratch_operands = 2 : i64, tpu.core_type = #tpu.core_type<tc>, window_params = [{transform_indices = @transform_0, window_bounds = array<i64: 1, 16, 64>}, {transform_indices = @transform_1, window_bounds = array<i64: 1, 8, 64>}, {pipeline_mode = #tpu.pipeline_mode<synchronous>, transform_indices = @transform_2, window_bounds = array<i64: 32, 16>}, {pipeline_mode = #tpu.pipeline_mode<synchronous>, transform_indices = @transform_3, window_bounds = array<i64: 64, 128>}, {pipeline_mode = #tpu.pipeline_mode<synchronous>, transform_indices = @transform_4, window_bounds = array<i64: 16, 8>}, {pipeline_mode = #tpu.pipeline_mode<synchronous>, transform_indices = @transform_5, window_bounds = array<i64: 32, 64>}, {pipeline_mode = #tpu.pipeline_mode<synchronous>, transform_indices = @transform_6, window_bounds = array<i64: 640, 128>}, {pipeline_mode = #tpu.pipeline_mode<synchronous>, transform_indices = @transform_7, window_bounds = array<i64: 1, 128>}, {pipeline_mode = #tpu.pipeline_mode<synchronous>, transform_indices = @transform_8, window_bounds = array<i64: 384, 32>}, {pipeline_mode = #tpu.pipeline_mode<synchronous>, transform_indices = @transform_9, window_bounds = array<i64: 1, 32>}, {pipeline_mode = #tpu.pipeline_mode<synchronous>, transform_indices = @transform_10, window_bounds = array<i64: 192, 64>}, {pipeline_mode = #tpu.pipeline_mode<synchronous>, transform_indices = @transform_11, window_bounds = array<i64: 1, 64>}, {pipeline_mode = #tpu.pipeline_mode<synchronous>, transform_indices = @transform_12, window_bounds = array<i64: 128, 64>}, {pipeline_mode = #tpu.pipeline_mode<synchronous>, transform_indices = @transform_13, window_bounds = array<i64: 128, 64>}, {pipeline_mode = #tpu.pipeline_mode<synchronous>, transform_indices = @transform_14, window_bounds = array<i64: 64, 32>}, {pipeline_mode = #tpu.pipeline_mode<synchronous>, transform_indices = @transform_15, window_bounds = array<i64: 64, 32>}, {transform_indices = @transform_16, window_bounds = array<i64: 1, 16, 64>}]} {
    %c0 = arith.constant 0 : index
    %c0_0 = arith.constant 0 : index
    %c0_1 = arith.constant 0 : index
    %0 = vector.load %arg1[%c0, %c0_0, %c0_1] : memref<1x16x64xf32, #tpu.memory_space<vmem>>, vector<1x16x64xf32>
    %1 = vector.shape_cast %0 : vector<1x16x64xf32> to vector<16x64xf32>
    %c0_2 = arith.constant 0 : index
    %c0_3 = arith.constant 0 : index
    %2 = vector.load %arg3[%c0_2, %c0_3] : memref<32x16xf32, #tpu.memory_space<vmem>>, vector<32x16xf32>
    %cst = arith.constant dense<0.000000e+00> : vector<32x64xf32>
    %3 = tpu.matmul %2, %1, %cst {dimension_numbers = #tpu.dot_dimension_numbers<[1], [0], [0], [1], [0, 0, 1, 1], [], []>} : vector<32x16xf32>, vector<16x64xf32>, vector<32x64xf32> -> vector<32x64xf32>
    %c0_4 = arith.constant 0 : index
    %c0_5 = arith.constant 0 : index
    %4 = vector.load %arg4[%c0_4, %c0_5] : memref<64x128xf32, #tpu.memory_space<vmem>>, vector<64x128xf32>
    %cst_6 = arith.constant dense<0.000000e+00> : vector<32x128xf32>
    %5 = tpu.matmul %3, %4, %cst_6 {dimension_numbers = #tpu.dot_dimension_numbers<[1], [0], [0], [1], [0, 0, 1, 1], [], []>} : vector<32x64xf32>, vector<64x128xf32>, vector<32x128xf32> -> vector<32x128xf32>
    %cst_7 = arith.constant 0.000000e+00 : f32
    %6 = vector.broadcast %cst_7 : f32 to vector<36x128xf32>
    %c0_8 = arith.constant 0 : index
    %c0_9 = arith.constant 0 : index
    %7 = vector.load %arg18[%c0_8, %c0_9] : memref<36x128xf32, #tpu.memory_space<vmem>>, vector<36x128xf32>
    tpu.vector_store %arg18[%c0_8, %c0_9], %6 {strides = array<i32>} : memref<36x128xf32, #tpu.memory_space<vmem>>, vector<36x128xf32>,
    %c2 = arith.constant 2 : index
    %c0_10 = arith.constant 0 : index
    %8 = vector.load %arg18[%c2, %c0_10] : memref<36x128xf32, #tpu.memory_space<vmem>>, vector<32x128xf32>
    tpu.vector_store %arg18[%c2, %c0_10], %5 {strides = array<i32>} : memref<36x128xf32, #tpu.memory_space<vmem>>, vector<32x128xf32>,
    %c0_11 = arith.constant 0 : index
    %c0_12 = arith.constant 0 : index
    %9 = vector.load %arg18[%c0_11, %c0_12] : memref<36x128xf32, #tpu.memory_space<vmem>>, vector<32x128xf32>
    %c0_13 = arith.constant 0 : index
    %c0_14 = arith.constant 0 : index
    %10 = vector.load %arg7[%c0_13, %c0_14] : memref<640x128xf32, #tpu.memory_space<vmem>>, vector<128x128xf32>
    %cst_15 = arith.constant dense<0.000000e+00> : vector<32x128xf32>
    %11 = tpu.matmul %9, %10, %cst_15 {dimension_numbers = #tpu.dot_dimension_numbers<[1], [0], [0], [1], [0, 0, 1, 1], [], []>} : vector<32x128xf32>, vector<128x128xf32>, vector<32x128xf32> -> vector<32x128xf32>
    %c1 = arith.constant 1 : index
    %c0_16 = arith.constant 0 : index
    %12 = vector.load %arg18[%c1, %c0_16] : memref<36x128xf32, #tpu.memory_space<vmem>>, vector<32x128xf32>
    %c128 = arith.constant 128 : index
    %c0_17 = arith.constant 0 : index
    %13 = vector.load %arg7[%c128, %c0_17] : memref<640x128xf32, #tpu.memory_space<vmem>>, vector<128x128xf32>
    %cst_18 = arith.constant dense<0.000000e+00> : vector<32x128xf32>
    %14 = tpu.matmul %12, %13, %cst_18 {dimension_numbers = #tpu.dot_dimension_numbers<[1], [0], [0], [1], [0, 0, 1, 1], [], []>} : vector<32x128xf32>, vector<128x128xf32>, vector<32x128xf32> -> vector<32x128xf32>
    %c2_19 = arith.constant 2 : index
    %c0_20 = arith.constant 0 : index
    %15 = vector.load %arg18[%c2_19, %c0_20] : memref<36x128xf32, #tpu.memory_space<vmem>>, vector<32x128xf32>
    %c256 = arith.constant 256 : index
    %c0_21 = arith.constant 0 : index
    %16 = vector.load %arg7[%c256, %c0_21] : memref<640x128xf32, #tpu.memory_space<vmem>>, vector<128x128xf32>
    %cst_22 = arith.constant dense<0.000000e+00> : vector<32x128xf32>
    %17 = tpu.matmul %15, %16, %cst_22 {dimension_numbers = #tpu.dot_dimension_numbers<[1], [0], [0], [1], [0, 0, 1, 1], [], []>} : vector<32x128xf32>, vector<128x128xf32>, vector<32x128xf32> -> vector<32x128xf32>
    %c3 = arith.constant 3 : index
    %c0_23 = arith.constant 0 : index
    %18 = vector.load %arg18[%c3, %c0_23] : memref<36x128xf32, #tpu.memory_space<vmem>>, vector<32x128xf32>
    %c384 = arith.constant 384 : index
    %c0_24 = arith.constant 0 : index
    %19 = vector.load %arg7[%c384, %c0_24] : memref<640x128xf32, #tpu.memory_space<vmem>>, vector<128x128xf32>
    %cst_25 = arith.constant dense<0.000000e+00> : vector<32x128xf32>
    %20 = tpu.matmul %18, %19, %cst_25 {dimension_numbers = #tpu.dot_dimension_numbers<[1], [0], [0], [1], [0, 0, 1, 1], [], []>} : vector<32x128xf32>, vector<128x128xf32>, vector<32x128xf32> -> vector<32x128xf32>
    %c4 = arith.constant 4 : index
    %c0_26 = arith.constant 0 : index
    %21 = vector.load %arg18[%c4, %c0_26] : memref<36x128xf32, #tpu.memory_space<vmem>>, vector<32x128xf32>
    %c512 = arith.constant 512 : index
    %c0_27 = arith.constant 0 : index
    %22 = vector.load %arg7[%c512, %c0_27] : memref<640x128xf32, #tpu.memory_space<vmem>>, vector<128x128xf32>
    %cst_28 = arith.constant dense<0.000000e+00> : vector<32x128xf32>
    %23 = tpu.matmul %21, %22, %cst_28 {dimension_numbers = #tpu.dot_dimension_numbers<[1], [0], [0], [1], [0, 0, 1, 1], [], []>} : vector<32x128xf32>, vector<128x128xf32>, vector<32x128xf32> -> vector<32x128xf32>
    %24 = arith.addf %11, %14 : vector<32x128xf32>
    %25 = arith.addf %17, %20 : vector<32x128xf32>
    %26 = arith.addf %24, %25 : vector<32x128xf32>
    %27 = arith.addf %26, %23 : vector<32x128xf32>
    %c0_29 = arith.constant 0 : index
    %c0_30 = arith.constant 0 : index
    %28 = vector.load %arg8[%c0_29, %c0_30] : memref<1x128xf32, #tpu.memory_space<vmem>>, vector<1x128xf32>
    %29 = vector.broadcast %28 : vector<1x128xf32> to vector<32x128xf32>
    %30 = arith.addf %27, %29 : vector<32x128xf32>
    %cst_31 = arith.constant 0.000000e+00 : f32
    %31 = vector.broadcast %cst_31 : f32 to vector<32x128xf32>
    %32 = arith.maximumf %30, %31 : vector<32x128xf32>
    %33 = vector.shape_cast %32 : vector<32x128xf32> to vector<16x2x128xf32>
    %34 = vector.extract_strided_slice %33 {offsets = [0, 0, 0], sizes = [16, 1, 128], strides = [1, 1, 1]} : vector<16x2x128xf32> to vector<16x1x128xf32>
    %35 = vector.shape_cast %34 : vector<16x1x128xf32> to vector<16x128xf32>
    %36 = vector.extract_strided_slice %33 {offsets = [0, 1, 0], sizes = [16, 1, 128], strides = [1, 1, 1]} : vector<16x2x128xf32> to vector<16x1x128xf32>
    %37 = vector.shape_cast %36 : vector<16x1x128xf32> to vector<16x128xf32>
    %38 = arith.maximumf %35, %37 : vector<16x128xf32>
    %c0_32 = arith.constant 0 : index
    %c0_33 = arith.constant 0 : index
    %39 = vector.load %arg13[%c0_32, %c0_33] : memref<128x64xf32, #tpu.memory_space<vmem>>, vector<128x64xf32>
    %cst_34 = arith.constant dense<0.000000e+00> : vector<16x64xf32>
    %40 = tpu.matmul %38, %39, %cst_34 {dimension_numbers = #tpu.dot_dimension_numbers<[1], [0], [0], [1], [0, 0, 1, 1], [], []>} : vector<16x128xf32>, vector<128x64xf32>, vector<16x64xf32> -> vector<16x64xf32>
    %c0_35 = arith.constant 0 : index
    %c0_36 = arith.constant 0 : index
    %41 = vector.load %arg14[%c0_35, %c0_36] : memref<128x64xf32, #tpu.memory_space<vmem>>, vector<128x64xf32>
    %cst_37 = arith.constant dense<0.000000e+00> : vector<16x64xf32>
    %42 = tpu.matmul %38, %41, %cst_37 {dimension_numbers = #tpu.dot_dimension_numbers<[1], [0], [0], [1], [0, 0, 1, 1], [], []>} : vector<16x128xf32>, vector<128x64xf32>, vector<16x64xf32> -> vector<16x64xf32>
    %43 = arith.maximumf %40, %42 : vector<16x64xf32>
    %cst_38 = arith.constant 0.000000e+00 : f32
    %44 = vector.broadcast %cst_38 : f32 to vector<10x128xf32>
    %c0_39 = arith.constant 0 : index
    %c0_40 = arith.constant 0 : index
    %45 = vector.load %arg19[%c0_39, %c0_40] : memref<10x128xf32, #tpu.memory_space<vmem>>, vector<10x128xf32>
    tpu.vector_store %arg19[%c0_39, %c0_40], %44 {strides = array<i32>} : memref<10x128xf32, #tpu.memory_space<vmem>>, vector<10x128xf32>,
    %46 = vector.shape_cast %1 : vector<16x64xf32> to vector<8x2x64xf32>
    %47 = vector.extract_strided_slice %46 {offsets = [0, 0, 0], sizes = [8, 1, 64], strides = [1, 1, 1]} : vector<8x2x64xf32> to vector<8x1x64xf32>
    %48 = vector.shape_cast %47 : vector<8x1x64xf32> to vector<8x64xf32>
    %49 = vector.extract_strided_slice %46 {offsets = [0, 1, 0], sizes = [8, 1, 64], strides = [1, 1, 1]} : vector<8x2x64xf32> to vector<8x1x64xf32>
    %50 = vector.shape_cast %49 : vector<8x1x64xf32> to vector<8x64xf32>
    %51 = arith.maximumf %48, %50 : vector<8x64xf32>
    %c0_41 = arith.constant 0 : index
    %c0_42 = arith.constant 0 : index
    %52 = vector.load %arg15[%c0_41, %c0_42] : memref<64x32xf32, #tpu.memory_space<vmem>>, vector<64x32xf32>
    %cst_43 = arith.constant dense<0.000000e+00> : vector<8x32xf32>
    %53 = tpu.matmul %51, %52, %cst_43 {dimension_numbers = #tpu.dot_dimension_numbers<[1], [0], [0], [1], [0, 0, 1, 1], [], []>} : vector<8x64xf32>, vector<64x32xf32>, vector<8x32xf32> -> vector<8x32xf32>
    %c0_44 = arith.constant 0 : index
    %c0_45 = arith.constant 0 : index
    %54 = vector.load %arg16[%c0_44, %c0_45] : memref<64x32xf32, #tpu.memory_space<vmem>>, vector<64x32xf32>
    %cst_46 = arith.constant dense<0.000000e+00> : vector<8x32xf32>
    %55 = tpu.matmul %51, %54, %cst_46 {dimension_numbers = #tpu.dot_dimension_numbers<[1], [0], [0], [1], [0, 0, 1, 1], [], []>} : vector<8x64xf32>, vector<64x32xf32>, vector<8x32xf32> -> vector<8x32xf32>
    %56 = arith.maximumf %53, %55 : vector<8x32xf32>
    %c1_47 = arith.constant 1 : index
    %c0_48 = arith.constant 0 : index
    %57 = vector.load %arg19[%c1_47, %c0_48] : memref<10x128xf32, #tpu.memory_space<vmem>>, vector<8x32xf32>
    tpu.vector_store %arg19[%c1_47, %c0_48], %56 {strides = array<i32>} : memref<10x128xf32, #tpu.memory_space<vmem>>, vector<8x32xf32>,
    %58 = vector.shape_cast %43 : vector<16x64xf32> to vector<8x2x64xf32>
    %59 = vector.extract_strided_slice %58 {offsets = [0, 0, 0], sizes = [8, 1, 64], strides = [1, 1, 1]} : vector<8x2x64xf32> to vector<8x1x64xf32>
    %60 = vector.shape_cast %59 : vector<8x1x64xf32> to vector<8x64xf32>
    %61 = vector.extract_strided_slice %58 {offsets = [0, 1, 0], sizes = [8, 1, 64], strides = [1, 1, 1]} : vector<8x2x64xf32> to vector<8x1x64xf32>
    %62 = vector.shape_cast %61 : vector<8x1x64xf32> to vector<8x64xf32>
    %63 = arith.maximumf %60, %62 : vector<8x64xf32>
    %c0_49 = arith.constant 0 : index
    %c0_50 = arith.constant 0 : index
    %64 = vector.load %arg15[%c0_49, %c0_50] : memref<64x32xf32, #tpu.memory_space<vmem>>, vector<64x32xf32>
    %cst_51 = arith.constant dense<0.000000e+00> : vector<8x32xf32>
    %65 = tpu.matmul %63, %64, %cst_51 {dimension_numbers = #tpu.dot_dimension_numbers<[1], [0], [0], [1], [0, 0, 1, 1], [], []>} : vector<8x64xf32>, vector<64x32xf32>, vector<8x32xf32> -> vector<8x32xf32>
    %c0_52 = arith.constant 0 : index
    %c0_53 = arith.constant 0 : index
    %66 = vector.load %arg16[%c0_52, %c0_53] : memref<64x32xf32, #tpu.memory_space<vmem>>, vector<64x32xf32>
    %cst_54 = arith.constant dense<0.000000e+00> : vector<8x32xf32>
    %67 = tpu.matmul %63, %66, %cst_54 {dimension_numbers = #tpu.dot_dimension_numbers<[1], [0], [0], [1], [0, 0, 1, 1], [], []>} : vector<8x64xf32>, vector<64x32xf32>, vector<8x32xf32> -> vector<8x32xf32>
    %68 = arith.maximumf %65, %67 : vector<8x32xf32>
    %c1_55 = arith.constant 1 : index
    %c32 = arith.constant 32 : index
    %69 = vector.load %arg19[%c1_55, %c32] : memref<10x128xf32, #tpu.memory_space<vmem>>, vector<8x32xf32>
    tpu.vector_store %arg19[%c1_55, %c32], %68 {strides = array<i32>} : memref<10x128xf32, #tpu.memory_space<vmem>>, vector<8x32xf32>,
    %c0_56 = arith.constant 0 : index
    %c0_57 = arith.constant 0 : index
    %c0_58 = arith.constant 0 : index
    %70 = vector.load %arg2[%c0_56, %c0_57, %c0_58] : memref<1x8x64xf32, #tpu.memory_space<vmem>>, vector<1x8x64xf32>
    %71 = vector.shape_cast %70 : vector<1x8x64xf32> to vector<8x64xf32>
    %c1_59 = arith.constant 1 : index
    %c64 = arith.constant 64 : index
    %72 = vector.load %arg19[%c1_59, %c64] : memref<10x128xf32, #tpu.memory_space<vmem>>, vector<8x64xf32>
    tpu.vector_store %arg19[%c1_59, %c64], %71 {strides = array<i32>} : memref<10x128xf32, #tpu.memory_space<vmem>>, vector<8x64xf32>,
    %c0_60 = arith.constant 0 : index
    %c0_61 = arith.constant 0 : index
    %73 = vector.load %arg19[%c0_60, %c0_61] : memref<10x128xf32, #tpu.memory_space<vmem>>, vector<8x128xf32>
    %c0_62 = arith.constant 0 : index
    %c0_63 = arith.constant 0 : index
    %74 = vector.load %arg9[%c0_62, %c0_63] : memref<384x32xf32, #tpu.memory_space<vmem>>, vector<128x32xf32>
    %cst_64 = arith.constant dense<0.000000e+00> : vector<8x32xf32>
    %75 = tpu.matmul %73, %74, %cst_64 {dimension_numbers = #tpu.dot_dimension_numbers<[1], [0], [0], [1], [0, 0, 1, 1], [], []>} : vector<8x128xf32>, vector<128x32xf32>, vector<8x32xf32> -> vector<8x32xf32>
    %c1_65 = arith.constant 1 : index
    %c0_66 = arith.constant 0 : index
    %76 = vector.load %arg19[%c1_65, %c0_66] : memref<10x128xf32, #tpu.memory_space<vmem>>, vector<8x128xf32>
    %c128_67 = arith.constant 128 : index
    %c0_68 = arith.constant 0 : index
    %77 = vector.load %arg9[%c128_67, %c0_68] : memref<384x32xf32, #tpu.memory_space<vmem>>, vector<128x32xf32>
    %cst_69 = arith.constant dense<0.000000e+00> : vector<8x32xf32>
    %78 = tpu.matmul %76, %77, %cst_69 {dimension_numbers = #tpu.dot_dimension_numbers<[1], [0], [0], [1], [0, 0, 1, 1], [], []>} : vector<8x128xf32>, vector<128x32xf32>, vector<8x32xf32> -> vector<8x32xf32>
    %c2_70 = arith.constant 2 : index
    %c0_71 = arith.constant 0 : index
    %79 = vector.load %arg19[%c2_70, %c0_71] : memref<10x128xf32, #tpu.memory_space<vmem>>, vector<8x128xf32>
    %c256_72 = arith.constant 256 : index
    %c0_73 = arith.constant 0 : index
    %80 = vector.load %arg9[%c256_72, %c0_73] : memref<384x32xf32, #tpu.memory_space<vmem>>, vector<128x32xf32>
    %cst_74 = arith.constant dense<0.000000e+00> : vector<8x32xf32>
    %81 = tpu.matmul %79, %80, %cst_74 {dimension_numbers = #tpu.dot_dimension_numbers<[1], [0], [0], [1], [0, 0, 1, 1], [], []>} : vector<8x128xf32>, vector<128x32xf32>, vector<8x32xf32> -> vector<8x32xf32>
    %82 = arith.addf %75, %78 : vector<8x32xf32>
    %83 = arith.addf %82, %81 : vector<8x32xf32>
    %c0_75 = arith.constant 0 : index
    %c0_76 = arith.constant 0 : index
    %84 = vector.load %arg10[%c0_75, %c0_76] : memref<1x32xf32, #tpu.memory_space<vmem>>, vector<1x32xf32>
    %85 = vector.broadcast %84 : vector<1x32xf32> to vector<8x32xf32>
    %86 = arith.addf %83, %85 : vector<8x32xf32>
    %cst_77 = arith.constant 0.000000e+00 : f32
    %87 = vector.broadcast %cst_77 : f32 to vector<8x32xf32>
    %88 = arith.maximumf %86, %87 : vector<8x32xf32>
    %c0_78 = arith.constant 0 : index
    %c0_79 = arith.constant 0 : index
    %89 = vector.load %arg5[%c0_78, %c0_79] : memref<16x8xf32, #tpu.memory_space<vmem>>, vector<16x8xf32>
    %cst_80 = arith.constant dense<0.000000e+00> : vector<16x32xf32>
    %90 = tpu.matmul %89, %88, %cst_80 {dimension_numbers = #tpu.dot_dimension_numbers<[1], [0], [0], [1], [0, 0, 1, 1], [], []>} : vector<16x8xf32>, vector<8x32xf32>, vector<16x32xf32> -> vector<16x32xf32>
    %c0_81 = arith.constant 0 : index
    %c0_82 = arith.constant 0 : index
    %91 = vector.load %arg6[%c0_81, %c0_82] : memref<32x64xf32, #tpu.memory_space<vmem>>, vector<32x64xf32>
    %cst_83 = arith.constant dense<0.000000e+00> : vector<16x64xf32>
    %92 = tpu.matmul %90, %91, %cst_83 {dimension_numbers = #tpu.dot_dimension_numbers<[1], [0], [0], [1], [0, 0, 1, 1], [], []>} : vector<16x32xf32>, vector<32x64xf32>, vector<16x64xf32> -> vector<16x64xf32>
    %c0_84 = arith.constant 0 : index
    %c0_85 = arith.constant 0 : index
    %93 = vector.load %arg11[%c0_84, %c0_85] : memref<192x64xf32, #tpu.memory_space<vmem>>, vector<64x64xf32>
    %cst_86 = arith.constant dense<0.000000e+00> : vector<16x64xf32>
    %94 = tpu.matmul %1, %93, %cst_86 {dimension_numbers = #tpu.dot_dimension_numbers<[1], [0], [0], [1], [0, 0, 1, 1], [], []>} : vector<16x64xf32>, vector<64x64xf32>, vector<16x64xf32> -> vector<16x64xf32>
    %c64_87 = arith.constant 64 : index
    %c0_88 = arith.constant 0 : index
    %95 = vector.load %arg11[%c64_87, %c0_88] : memref<192x64xf32, #tpu.memory_space<vmem>>, vector<64x64xf32>
    %cst_89 = arith.constant dense<0.000000e+00> : vector<16x64xf32>
    %96 = tpu.matmul %43, %95, %cst_89 {dimension_numbers = #tpu.dot_dimension_numbers<[1], [0], [0], [1], [0, 0, 1, 1], [], []>} : vector<16x64xf32>, vector<64x64xf32>, vector<16x64xf32> -> vector<16x64xf32>
    %97 = arith.addf %94, %96 : vector<16x64xf32>
    %c128_90 = arith.constant 128 : index
    %c0_91 = arith.constant 0 : index
    %98 = vector.load %arg11[%c128_90, %c0_91] : memref<192x64xf32, #tpu.memory_space<vmem>>, vector<64x64xf32>
    %cst_92 = arith.constant dense<0.000000e+00> : vector<16x64xf32>
    %99 = tpu.matmul %92, %98, %cst_92 {dimension_numbers = #tpu.dot_dimension_numbers<[1], [0], [0], [1], [0, 0, 1, 1], [], []>} : vector<16x64xf32>, vector<64x64xf32>, vector<16x64xf32> -> vector<16x64xf32>
    %100 = arith.addf %97, %99 : vector<16x64xf32>
    %c0_93 = arith.constant 0 : index
    %c0_94 = arith.constant 0 : index
    %101 = vector.load %arg12[%c0_93, %c0_94] : memref<1x64xf32, #tpu.memory_space<vmem>>, vector<1x64xf32>
    %102 = vector.broadcast %101 : vector<1x64xf32> to vector<16x64xf32>
    %103 = arith.addf %100, %102 : vector<16x64xf32>
    %c0_95 = arith.constant 0 : index
    %c0_96 = arith.constant 0 : index
    %c0_97 = arith.constant 0 : index
    %104 = vector.load %arg17[%c0_95, %c0_96, %c0_97] : memref<1x16x64xf32, #tpu.memory_space<vmem>>, vector<1x16x64xf32>
    %105 = vector.shape_cast %104 : vector<1x16x64xf32> to vector<16x64xf32>
    %106 = vector.shape_cast %103 : vector<16x64xf32> to vector<1x16x64xf32>
    tpu.vector_store %arg17[%c0_95, %c0_96, %c0_97], %106 {strides = array<i32>} : memref<1x16x64xf32, #tpu.memory_space<vmem>>, vector<1x16x64xf32>,
    return
  }
  func.func @transform_0(%arg0: i32) -> (i32, i32, i32) {
    %c0_i32 = arith.constant 0 : i32
    %c0_i32_0 = arith.constant 0 : i32
    %c0_i32_1 = arith.constant 0 : i32
    return %arg0, %c0_i32, %c0_i32_0 : i32, i32, i32
  }
  func.func @transform_1(%arg0: i32) -> (i32, i32, i32) {
    %c0_i32 = arith.constant 0 : i32
    %c0_i32_0 = arith.constant 0 : i32
    %c0_i32_1 = arith.constant 0 : i32
    return %arg0, %c0_i32, %c0_i32_0 : i32, i32, i32
  }
  func.func @transform_2(%arg0: i32) -> (i32, i32) {
    %c0_i32 = arith.constant 0 : i32
    %c0_i32_0 = arith.constant 0 : i32
    %c0_i32_1 = arith.constant 0 : i32
    return %c0_i32, %c0_i32_0 : i32, i32
  }
  func.func @transform_3(%arg0: i32) -> (i32, i32) {
    %c0_i32 = arith.constant 0 : i32
    %c0_i32_0 = arith.constant 0 : i32
    %c0_i32_1 = arith.constant 0 : i32
    return %c0_i32, %c0_i32_0 : i32, i32
  }
  func.func @transform_4(%arg0: i32) -> (i32, i32) {
    %c0_i32 = arith.constant 0 : i32
    %c0_i32_0 = arith.constant 0 : i32
    %c0_i32_1 = arith.constant 0 : i32
    return %c0_i32, %c0_i32_0 : i32, i32
  }
  func.func @transform_5(%arg0: i32) -> (i32, i32) {
    %c0_i32 = arith.constant 0 : i32
    %c0_i32_0 = arith.constant 0 : i32
    %c0_i32_1 = arith.constant 0 : i32
    return %c0_i32, %c0_i32_0 : i32, i32
  }
  func.func @transform_6(%arg0: i32) -> (i32, i32) {
    %c0_i32 = arith.constant 0 : i32
    %c0_i32_0 = arith.constant 0 : i32
    %c0_i32_1 = arith.constant 0 : i32
    return %c0_i32, %c0_i32_0 : i32, i32
  }
  func.func @transform_7(%arg0: i32) -> (i32, i32) {
    %c0_i32 = arith.constant 0 : i32
    %c0_i32_0 = arith.constant 0 : i32
    %c0_i32_1 = arith.constant 0 : i32
    return %c0_i32, %c0_i32_0 : i32, i32
  }
  func.func @transform_8(%arg0: i32) -> (i32, i32) {
    %c0_i32 = arith.constant 0 : i32
    %c0_i32_0 = arith.constant 0 : i32
    %c0_i32_1 = arith.constant 0 : i32
    return %c0_i32, %c0_i32_0 : i32, i32
  }
  func.func @transform_9(%arg0: i32) -> (i32, i32) {
    %c0_i32 = arith.constant 0 : i32
    %c0_i32_0 = arith.constant 0 : i32
    %c0_i32_1 = arith.constant 0 : i32
    return %c0_i32, %c0_i32_0 : i32, i32
  }
  func.func @transform_10(%arg0: i32) -> (i32, i32) {
    %c0_i32 = arith.constant 0 : i32
    %c0_i32_0 = arith.constant 0 : i32
    %c0_i32_1 = arith.constant 0 : i32
    return %c0_i32, %c0_i32_0 : i32, i32
  }
  func.func @transform_11(%arg0: i32) -> (i32, i32) {
    %c0_i32 = arith.constant 0 : i32
    %c0_i32_0 = arith.constant 0 : i32
    %c0_i32_1 = arith.constant 0 : i32
    return %c0_i32, %c0_i32_0 : i32, i32
  }
  func.func @transform_12(%arg0: i32) -> (i32, i32) {
    %c0_i32 = arith.constant 0 : i32
    %c0_i32_0 = arith.constant 0 : i32
    %c0_i32_1 = arith.constant 0 : i32
    return %c0_i32, %c0_i32_0 : i32, i32
  }
  func.func @transform_13(%arg0: i32) -> (i32, i32) {
    %c0_i32 = arith.constant 0 : i32
    %c0_i32_0 = arith.constant 0 : i32
    %c0_i32_1 = arith.constant 0 : i32
    return %c0_i32, %c0_i32_0 : i32, i32
  }
  func.func @transform_14(%arg0: i32) -> (i32, i32) {
    %c0_i32 = arith.constant 0 : i32
    %c0_i32_0 = arith.constant 0 : i32
    %c0_i32_1 = arith.constant 0 : i32
    return %c0_i32, %c0_i32_0 : i32, i32
  }
  func.func @transform_15(%arg0: i32) -> (i32, i32) {
    %c0_i32 = arith.constant 0 : i32
    %c0_i32_0 = arith.constant 0 : i32
    %c0_i32_1 = arith.constant 0 : i32
    return %c0_i32, %c0_i32_0 : i32, i32
  }
  func.func @transform_16(%arg0: i32) -> (i32, i32, i32) {
    %c0_i32 = arith.constant 0 : i32
    %c0_i32_0 = arith.constant 0 : i32
    %c0_i32_1 = arith.constant 0 : i32
    return %arg0, %c0_i32, %c0_i32_0 : i32, i32, i32
  }
}

</mosaic_0001>

<llo_original>
// kernel: tile.23
$region0: #{tile.23}
  #allocation2 [shape = 's32[1]{0}', space=sflag, size = 0x4, scoped, tag = 'scoped memory for tile.23']
  %s0 = inlined_call_operand.hbm [shape: f32[4], index: 0, kind: input, shape index: {}]
  %s1 = inlined_call_operand.vmem [shape: f32[8,4], index: 1, kind: output, shape index: {}]
  $region1: #{tile.23} parent=0
    #allocation0 [shape = 'u8[512]{0}', space=vmem, size = 0x400, scoped, tag = 'operand span for operand 0']
    #allocation1 [shape = 's32[1]{0}', space=sflag, size = 0x4, scoped, tag = 'scoped memory for tile.23']
    %2 = vsyncpa [#allocation1], 0
    // Predicated region
    $region2: #{tile.23} parent=1 // pred_check
      _
    $region3: #{tile.23} parent=1 // pred_check_branch
      %4 = sbr.rel (0) target = $region5
    $region4: #{tile.23} parent=1 // pred_region
      %s6 = ssub.s32 16, 16
      %7 = vsyncadd [#allocation1], %s6
      %s9 = sshll.u32 [#allocation0], 4
      %s10 = int_to_ptr.vmem [resolvable:$true] %s9
      %12 = dma.hbm_to_vmem [thread:$0]  %s0, 16, %s10, [#allocation1]
    $region5: #{tile.23} parent=1 // pred_fallthru
      _
    // Predicated region
    $region6: #{tile.23} parent=1 // pred_check
      _
    $region7: #{tile.23} parent=1 // pred_check_branch
      %14 = sbr.rel (0) target = $region9
    $region8: #{tile.23} parent=1 // pred_region
      %15 = dma.done [#allocation1], 16
    $region9: #{tile.23} parent=1 // pred_fallthru
      _
    %v16 = vld [vmem:[#allocation0] ss:$0 sm:$0xff]
    %17 = vst [vmem:[%s1] sm:$0xff] %v16
    %18 = vsyncpa [#allocation1], 1

// kernel: tile.24
$region0: #{tile.24}
  %s0 = inlined_call_operand.vmem [shape: f32[8,4], index: 0, kind: input, shape index: {}]
  %s1 = inlined_call_operand.vmem [shape: f32[1,32], index: 1, kind: output, shape index: {}]
  $region1: #{tile.24} parent=0
    #allocation0 [shape = 'u8[4096]{0}', space=vmem, size = 0x1000, scoped, tag = 'scoped mem for output reshape']
    %v2 = vld [vmem:[%s0] sm:$0x1]
    %vm3 = vcmask 31744
    %4 = vst.msk [vmem:[#allocation0] sm:$0x1] %vm3, %v2
    %s5 = scalar_lea.vmem %s0, 7
    %v6 = vld [vmem:[%s5] sm:$0x1]
    %7 = vrot.lane.b32.xlu0 %v6, 28
    %v8 = vpop.permute.xlu0 %7
    %vm9 = vcmask 261344
    %10 = vst.msk [vmem:[#allocation0] sm:$0x1] %vm9, %v8
    %s11 = scalar_lea.vmem %s0, 6
    %v12 = vld [vmem:[%s11] sm:$0x1]
    %13 = vrot.lane.b32.xlu0 %v12, 24
    %v14 = vpop.permute.xlu0 %13
    %vm15 = vcmask 228544
    %16 = vst.msk [vmem:[#allocation0] sm:$0x1] %vm15, %v14
    %s17 = scalar_lea.vmem %s0, 5
    %v18 = vld [vmem:[%s17] sm:$0x1]
    %19 = vrot.lane.b32.xlu0 %v18, 20
    %v20 = vpop.permute.xlu0 %19
    %vm21 = vcmask 195744
    %22 = vst.msk [vmem:[#allocation0] sm:$0x1] %vm21, %v20
    %s23 = scalar_lea.vmem %s0, 4
    %v24 = vld [vmem:[%s23] sm:$0x1]
    %25 = vrot.lane.b32.xlu0 %v24, 16
    %v26 = vpop.permute.xlu0 %25
    %vm27 = vcmask 162944
    %28 = vst.msk [vmem:[#allocation0] sm:$0x1] %vm27, %v26
    %s29 = scalar_lea.vmem %s0, 3
    %v30 = vld [vmem:[%s29] sm:$0x1]
    %31 = vrot.lane.b32.xlu0 %v30, 12
    %v32 = vpop.permute.xlu0 %31
    %vm33 = vcmask 130144
    %34 = vst.msk [vmem:[#allocation0] sm:$0x1] %vm33, %v32
    %s35 = scalar_lea.vmem %s0, 2
    %v36 = vld [vmem:[%s35] sm:$0x1]
    %37 = vrot.lane.b32.xlu0 %v36, 8
    %v38 = vpop.permute.xlu0 %37
    %vm39 = vcmask 97344
    %40 = vst.msk [vmem:[#allocation0] sm:$0x1] %vm39, %v38
    %s41 = scalar_lea.vmem %s0, 1
    %v42 = vld [vmem:[%s41] sm:$0x1]
    %43 = vrot.lane.b32.xlu0 %v42, 4
    %v44 = vpop.permute.xlu0 %43
    %vm45 = vcmask 64544
    %46 = vst.msk [vmem:[#allocation0] sm:$0x1] %vm45, %v44
    %s48 = sshllo.u32 0, 1
    %v50 = vld [vmem:[#allocation0] sm:%s48]
    %s51 = sshllo.u32 0, 1
    %52 = vst [vmem:[%s1] sm:%s51] %v50

// kernel: tile.28
$region0: #{tile.28}
  #allocation2 [shape = 's32[1]{0}', space=sflag, size = 0x4, scoped, tag = 'scoped memory for tile.28']
  %s0 = inlined_call_operand.hbm [shape: f32[4], index: 0, kind: input, shape index: {}]
  %s1 = inlined_call_operand.vmem [shape: f32[16,4], index: 1, kind: output, shape index: {}]
  $region1: #{tile.28} parent=0
    #allocation0 [shape = 'u8[512]{0}', space=vmem, size = 0x400, scoped, tag = 'operand span for operand 0']
    #allocation1 [shape = 's32[1]{0}', space=sflag, size = 0x4, scoped, tag = 'scoped memory for tile.28']
    %2 = vsyncpa [#allocation1], 0
    // Predicated region
    $region2: #{tile.28} parent=1 // pred_check
      _
    $region3: #{tile.28} parent=1 // pred_check_branch
      %4 = sbr.rel (0) target = $region5
    $region4: #{tile.28} parent=1 // pred_region
      %s6 = ssub.s32 16, 16
      %7 = vsyncadd [#allocation1], %s6
      %s9 = sshll.u32 [#allocation0], 4
      %s10 = int_to_ptr.vmem [resolvable:$true] %s9
      %12 = dma.hbm_to_vmem [thread:$0]  %s0, 16, %s10, [#allocation1]
    $region5: #{tile.28} parent=1 // pred_fallthru
      _
    // Predicated region
    $region6: #{tile.28} parent=1 // pred_check
      _
    $region7: #{tile.28} parent=1 // pred_check_branch
      %14 = sbr.rel (0) target = $region9
    $region8: #{tile.28} parent=1 // pred_region
      %15 = dma.done [#allocation1], 16
    $region9: #{tile.28} parent=1 // pred_fallthru
      _
    %v16 = vld [vmem:[#allocation0] ss:$0 sm:$0xff]
    %17 = vst [vmem:[%s1] sm:$0xff] %v16
    %s18 = scalar_lea.vmem %s1, 8
    %19 = vst [vmem:[%s18] sm:$0xff] %v16
    %20 = vsyncpa [#allocation1], 1

// kernel: tile.29
$region0: #{tile.29}
  %s0 = inlined_call_operand.vmem [shape: f32[16,4], index: 0, kind: input, shape index: {}]
  %s1 = inlined_call_operand.vmem [shape: f32[1,64], index: 1, kind: output, shape index: {}]
  $region1: #{tile.29} parent=0
    #allocation0 [shape = 'u8[4096]{0}', space=vmem, size = 0x1000, scoped, tag = 'scoped mem for output reshape']
    %v2 = vld [vmem:[%s0] sm:$0x1]
    %vm3 = vcmask 31744
    %4 = vst.msk [vmem:[#allocation0] sm:$0x1] %vm3, %v2
    %s5 = scalar_lea.vmem %s0, 15
    %v6 = vld [vmem:[%s5] sm:$0x1]
    %7 = vrot.lane.b32.xlu0 %v6, 60
    %v8 = vpop.permute.xlu0 %7
    %vm9 = vcmask 523744
    %10 = vst.msk [vmem:[#allocation0] sm:$0x1] %vm9, %v8
    %s11 = scalar_lea.vmem %s0, 14
    %v12 = vld [vmem:[%s11] sm:$0x1]
    %13 = vrot.lane.b32.xlu0 %v12, 56
    %v14 = vpop.permute.xlu0 %13
    %vm15 = vcmask 490944
    %16 = vst.msk [vmem:[#allocation0] sm:$0x1] %vm15, %v14
    %s17 = scalar_lea.vmem %s0, 13
    %v18 = vld [vmem:[%s17] sm:$0x1]
    %19 = vrot.lane.b32.xlu0 %v18, 52
    %v20 = vpop.permute.xlu0 %19
    %vm21 = vcmask 458144
    %22 = vst.msk [vmem:[#allocation0] sm:$0x1] %vm21, %v20
    %s23 = scalar_lea.vmem %s0, 12
    %v24 = vld [vmem:[%s23] sm:$0x1]
    %25 = vrot.lane.b32.xlu0 %v24, 48
    %v26 = vpop.permute.xlu0 %25
    %vm27 = vcmask 425344
    %28 = vst.msk [vmem:[#allocation0] sm:$0x1] %vm27, %v26
    %s29 = scalar_lea.vmem %s0, 11
    %v30 = vld [vmem:[%s29] sm:$0x1]
    %31 = vrot.lane.b32.xlu0 %v30, 44
    %v32 = vpop.permute.xlu0 %31
    %vm33 = vcmask 392544
    %34 = vst.msk [vmem:[#allocation0] sm:$0x1] %vm33, %v32
    %s35 = scalar_lea.vmem %s0, 10
    %v36 = vld [vmem:[%s35] sm:$0x1]
    %37 = vrot.lane.b32.xlu0 %v36, 40
    %v38 = vpop.permute.xlu0 %37
    %vm39 = vcmask 359744
    %40 = vst.msk [vmem:[#allocation0] sm:$0x1] %vm39, %v38
    %s41 = scalar_lea.vmem %s0, 9
    %v42 = vld [vmem:[%s41] sm:$0x1]
    %43 = vrot.lane.b32.xlu0 %v42, 36
    %v44 = vpop.permute.xlu0 %43
    %vm45 = vcmask 326944
    %46 = vst.msk [vmem:[#allocation0] sm:$0x1] %vm45, %v44
    %s47 = scalar_lea.vmem %s0, 8
    %v48 = vld [vmem:[%s47] sm:$0x1]
    %49 = vrot.lane.b32.xlu0 %v48, 32
    %v50 = vpop.permute.xlu0 %49
    %vm51 = vcmask 294144
    %52 = vst.msk [vmem:[#allocation0] sm:$0x1] %vm51, %v50
    %s53 = scalar_lea.vmem %s0, 7
    %v54 = vld [vmem:[%s53] sm:$0x1]
    %55 = vrot.lane.b32.xlu0 %v54, 28
    %v56 = vpop.permute.xlu0 %55
    %vm57 = vcmask 261344
    %58 = vst.msk [vmem:[#allocation0] sm:$0x1] %vm57, %v56
    %s59 = scalar_lea.vmem %s0, 6
    %v60 = vld [vmem:[%s59] sm:$0x1]
    %61 = vrot.lane.b32.xlu0 %v60, 24
    %v62 = vpop.permute.xlu0 %61
    %vm63 = vcmask 228544
    %64 = vst.msk [vmem:[#allocation0] sm:$0x1] %vm63, %v62
    %s65 = scalar_lea.vmem %s0, 5
    %v66 = vld [vmem:[%s65] sm:$0x1]
    %67 = vrot.lane.b32.xlu0 %v66, 20
    %v68 = vpop.permute.xlu0 %67
    %vm69 = vcmask 195744
    %70 = vst.msk [vmem:[#allocation0] sm:$0x1] %vm69, %v68
    %s71 = scalar_lea.vmem %s0, 4
    %v72 = vld [vmem:[%s71] sm:$0x1]
    %73 = vrot.lane.b32.xlu0 %v72, 16
    %v74 = vpop.permute.xlu0 %73
    %vm75 = vcmask 162944
    %76 = vst.msk [vmem:[#allocation0] sm:$0x1] %vm75, %v74
    %s77 = scalar_lea.vmem %s0, 3
    %v78 = vld [vmem:[%s77] sm:$0x1]
    %79 = vrot.lane.b32.xlu0 %v78, 12
    %v80 = vpop.permute.xlu0 %79
    %vm81 = vcmask 130144
    %82 = vst.msk [vmem:[#allocation0] sm:$0x1] %vm81, %v80
    %s83 = scalar_lea.vmem %s0, 2
    %v84 = vld [vmem:[%s83] sm:$0x1]
    %85 = vrot.lane.b32.xlu0 %v84, 8
    %v86 = vpop.permute.xlu0 %85
    %vm87 = vcmask 97344
    %88 = vst.msk [vmem:[#allocation0] sm:$0x1] %vm87, %v86
    %s89 = scalar_lea.vmem %s0, 1
    %v90 = vld [vmem:[%s89] sm:$0x1]
    %91 = vrot.lane.b32.xlu0 %v90, 4
    %v92 = vpop.permute.xlu0 %91
    %vm93 = vcmask 64544
    %94 = vst.msk [vmem:[#allocation0] sm:$0x1] %vm93, %v92
    %s96 = sshllo.u32 0, 1
    %v98 = vld [vmem:[#allocation0] sm:%s96]
    %s99 = sshllo.u32 0, 1
    %100 = vst [vmem:[%s1] sm:%s99] %v98

// kernel: tile.18
$region0: #{tile.18}
  #allocation2 [shape = 's32[1]{0}', space=sflag, size = 0x4, scoped, tag = 'scoped memory for tile.18']
  %s0 = inlined_call_operand.hbm [shape: f32[4], index: 0, kind: input, shape index: {}]
  %s1 = inlined_call_operand.vmem [shape: f32[32,4], index: 1, kind: output, shape index: {}]
  $region1: #{tile.18} parent=0
    #allocation0 [shape = 'u8[512]{0}', space=vmem, size = 0x400, scoped, tag = 'operand span for operand 0']
    #allocation1 [shape = 's32[1]{0}', space=sflag, size = 0x4, scoped, tag = 'scoped memory for tile.18']
    %2 = vsyncpa [#allocation1], 0
    // Predicated region
    $region2: #{tile.18} parent=1 // pred_check
      _
    $region3: #{tile.18} parent=1 // pred_check_branch
      %4 = sbr.rel (0) target = $region5
    $region4: #{tile.18} parent=1 // pred_region
      %s6 = ssub.s32 16, 16
      %7 = vsyncadd [#allocation1], %s6
      %s9 = sshll.u32 [#allocation0], 4
      %s10 = int_to_ptr.vmem [resolvable:$true] %s9
      %12 = dma.hbm_to_vmem [thread:$0]  %s0, 16, %s10, [#allocation1]
    $region5: #{tile.18} parent=1 // pred_fallthru
      _
    // Predicated region
    $region6: #{tile.18} parent=1 // pred_check
      _
    $region7: #{tile.18} parent=1 // pred_check_branch
      %14 = sbr.rel (0) target = $region9
    $region8: #{tile.18} parent=1 // pred_region
      %15 = dma.done [#allocation1], 16
    $region9: #{tile.18} parent=1 // pred_fallthru
      _
    %v16 = vld [vmem:[#allocation0] ss:$0 sm:$0xff]
    %17 = vst [vmem:[%s1] sm:$0xff] %v16
    %s18 = scalar_lea.vmem %s1, 8
    %19 = vst [vmem:[%s18] sm:$0xff] %v16
    %s20 = scalar_lea.vmem %s1, 16
    %21 = vst [vmem:[%s20] sm:$0xff] %v16
    %s22 = scalar_lea.vmem %s1, 24
    %23 = vst [vmem:[%s22] sm:$0xff] %v16
    %24 = vsyncpa [#allocation1], 1

// kernel: tile.19
$region0: #{tile.19}
  %s0 = inlined_call_operand.vmem [shape: f32[32,4], index: 0, kind: input, shape index: {}]
  %s1 = inlined_call_operand.vmem [shape: f32[1,128], index: 1, kind: output, shape index: {}]
  $region1: #{tile.19} parent=0
    #allocation0 [shape = 'u8[4096]{0}', space=vmem, size = 0x1000, scoped, tag = 'scoped mem for output reshape']
    %v2 = vld [vmem:[%s0] sm:$0x1]
    %vm3 = vcmask 31744
    %4 = vst.msk [vmem:[#allocation0] sm:$0x1] %vm3, %v2
    %s5 = scalar_lea.vmem %s0, 31
    %v6 = vld [vmem:[%s5] sm:$0x1]
    %7 = vrot.lane.b32.xlu0 %v6, 124
    %v8 = vpop.permute.xlu0 %7
    %vm9 = vcmask 1048544
    %10 = vst.msk [vmem:[#allocation0] sm:$0x1] %vm9, %v8
    %s11 = scalar_lea.vmem %s0, 30
    %v12 = vld [vmem:[%s11] sm:$0x1]
    %13 = vrot.lane.b32.xlu0 %v12, 120
    %v14 = vpop.permute.xlu0 %13
    %vm15 = vcmask 1015744
    %16 = vst.msk [vmem:[#allocation0] sm:$0x1] %vm15, %v14
    %s17 = scalar_lea.vmem %s0, 29
    %v18 = vld [vmem:[%s17] sm:$0x1]
    %19 = vrot.lane.b32.xlu0 %v18, 116
    %v20 = vpop.permute.xlu0 %19
    %vm21 = vcmask 982944
    %22 = vst.msk [vmem:[#allocation0] sm:$0x1] %vm21, %v20
    %s23 = scalar_lea.vmem %s0, 28
    %v24 = vld [vmem:[%s23] sm:$0x1]
    %25 = vrot.lane.b32.xlu0 %v24, 112
    %v26 = vpop.permute.xlu0 %25
    %vm27 = vcmask 950144
    %28 = vst.msk [vmem:[#allocation0] sm:$0x1] %vm27, %v26
    %s29 = scalar_lea.vmem %s0, 27
    %v30 = vld [vmem:[%s29] sm:$0x1]
    %31 = vrot.lane.b32.xlu0 %v30, 108
    %v32 = vpop.permute.xlu0 %31
    %vm33 = vcmask 917344
    %34 = vst.msk [vmem:[#allocation0] sm:$0x1] %vm33, %v32
    %s35 = scalar_lea.vmem %s0, 26
    %v36 = vld [vmem:[%s35] sm:$0x1]
    %37 = vrot.lane.b32.xlu0 %v36, 104
    %v38 = vpop.permute.xlu0 %37
    %vm39 = vcmask 884544
    %40 = vst.msk [vmem:[#allocation0] sm:$0x1] %vm39, %v38
    %s41 = scalar_lea.vmem %s0, 25
    %v42 = vld [vmem:[%s41] sm:$0x1]
    %43 = vrot.lane.b32.xlu0 %v42, 100
    %v44 = vpop.permute.xlu0 %43
    %vm45 = vcmask 851744
    %46 = vst.msk [vmem:[#allocation0] sm:$0x1] %vm45, %v44
    %s47 = scalar_lea.vmem %s0, 24
    %v48 = vld [vmem:[%s47] sm:$0x1]
    %49 = vrot.lane.b32.xlu0 %v48, 96
    %v50 = vpop.permute.xlu0 %49
    %vm51 = vcmask 818944
    %52 = vst.msk [vmem:[#allocation0] sm:$0x1] %vm51, %v50
    %s53 = scalar_lea.vmem %s0, 23
    %v54 = vld [vmem:[%s53] sm:$0x1]
    %55 = vrot.lane.b32.xlu0 %v54, 92
    %v56 = vpop.permute.xlu0 %55
    %vm57 = vcmask 786144
    %58 = vst.msk [vmem:[#allocation0] sm:$0x1] %vm57, %v56
    %s59 = scalar_lea.vmem %s0, 22
    %v60 = vld [vmem:[%s59] sm:$0x1]
    %61 = vrot.lane.b32.xlu0 %v60, 88
    %v62 = vpop.permute.xlu0 %61
    %vm63 = vcmask 753344
    %64 = vst.msk [vmem:[#allocation0] sm:$0x1] %vm63, %v62
    %s65 = scalar_lea.vmem %s0, 21
    %v66 = vld [vmem:[%s65] sm:$0x1]
    %67 = vrot.lane.b32.xlu0 %v66, 84
    %v68 = vpop.permute.xlu0 %67
    %vm69 = vcmask 720544
    %70 = vst.msk [vmem:[#allocation0] sm:$0x1] %vm69, %v68
    %s71 = scalar_lea.vmem %s0, 20
    %v72 = vld [vmem:[%s71] sm:$0x1]
    %73 = vrot.lane.b32.xlu0 %v72, 80
    %v74 = vpop.permute.xlu0 %73
    %vm75 = vcmask 687744
    %76 = vst.msk [vmem:[#allocation0] sm:$0x1] %vm75, %v74
    %s77 = scalar_lea.vmem %s0, 19
    %v78 = vld [vmem:[%s77] sm:$0x1]
    %79 = vrot.lane.b32.xlu0 %v78, 76
    %v80 = vpop.permute.xlu0 %79
    %vm81 = vcmask 654944
    %82 = vst.msk [vmem:[#allocation0] sm:$0x1] %vm81, %v80
    %s83 = scalar_lea.vmem %s0, 18
    %v84 = vld [vmem:[%s83] sm:$0x1]
    %85 = vrot.lane.b32.xlu0 %v84, 72
    %v86 = vpop.permute.xlu0 %85
    %vm87 = vcmask 622144
    %88 = vst.msk [vmem:[#allocation0] sm:$0x1] %vm87, %v86
    %s89 = scalar_lea.vmem %s0, 17
    %v90 = vld [vmem:[%s89] sm:$0x1]
    %91 = vrot.lane.b32.xlu0 %v90, 68
    %v92 = vpop.permute.xlu0 %91
    %vm93 = vcmask 589344
    %94 = vst.msk [vmem:[#allocation0] sm:$0x1] %vm93, %v92
    %s95 = scalar_lea.vmem %s0, 16
    %v96 = vld [vmem:[%s95] sm:$0x1]
    %97 = vrot.lane.b32.xlu0 %v96, 64
    %v98 = vpop.permute.xlu0 %97
    %vm99 = vcmask 556544
    %100 = vst.msk [vmem:[#allocation0] sm:$0x1] %vm99, %v98
    %s101 = scalar_lea.vmem %s0, 15
    %v102 = vld [vmem:[%s101] sm:$0x1]
    %103 = vrot.lane.b32.xlu0 %v102, 60
    %v104 = vpop.permute.xlu0 %103
    %vm105 = vcmask 523744
    %106 = vst.msk [vmem:[#allocation0] sm:$0x1] %vm105, %v104
    %s107 = scalar_lea.vmem %s0, 14
    %v108 = vld [vmem:[%s107] sm:$0x1]
    %109 = vrot.lane.b32.xlu0 %v108, 56
    %v110 = vpop.permute.xlu0 %109
    %vm111 = vcmask 490944
    %112 = vst.msk [vmem:[#allocation0] sm:$0x1] %vm111, %v110
    %s113 = scalar_lea.vmem %s0, 13
    %v114 = vld [vmem:[%s113] sm:$0x1]
    %115 = vrot.lane.b32.xlu0 %v114, 52
    %v116 = vpop.permute.xlu0 %115
    %vm117 = vcmask 458144
    %118 = vst.msk [vmem:[#allocation0] sm:$0x1] %vm117, %v116
    %s119 = scalar_lea.vmem %s0, 12
    %v120 = vld [vmem:[%s119] sm:$0x1]
    %121 = vrot.lane.b32.xlu0 %v120, 48
    %v122 = vpop.permute.xlu0 %121
    %vm123 = vcmask 425344
    %124 = vst.msk [vmem:[#allocation0] sm:$0x1] %vm123, %v122
    %s125 = scalar_lea.vmem %s0, 11
    %v126 = vld [vmem:[%s125] sm:$0x1]
    %127 = vrot.lane.b32.xlu0 %v126, 44
    %v128 = vpop.permute.xlu0 %127
    %vm129 = vcmask 392544
    %130 = vst.msk [vmem:[#allocation0] sm:$0x1] %vm129, %v128
    %s131 = scalar_lea.vmem %s0, 10
    %v132 = vld [vmem:[%s131] sm:$0x1]
    %133 = vrot.lane.b32.xlu0 %v132, 40
    %v134 = vpop.permute.xlu0 %133
    %vm135 = vcmask 359744
    %136 = vst.msk [vmem:[#allocation0] sm:$0x1] %vm135, %v134
    %s137 = scalar_lea.vmem %s0, 9
    %v138 = vld [vmem:[%s137] sm:$0x1]
    %139 = vrot.lane.b32.xlu0 %v138, 36
    %v140 = vpop.permute.xlu0 %139
    %vm141 = vcmask 326944
    %142 = vst.msk [vmem:[#allocation0] sm:$0x1] %vm141, %v140
    %s143 = scalar_lea.vmem %s0, 8
    %v144 = vld [vmem:[%s143] sm:$0x1]
    %145 = vrot.lane.b32.xlu0 %v144, 32
    %v146 = vpop.permute.xlu0 %145
    %vm147 = vcmask 294144
    %148 = vst.msk [vmem:[#allocation0] sm:$0x1] %vm147, %v146
    %s149 = scalar_lea.vmem %s0, 7
    %v150 = vld [vmem:[%s149] sm:$0x1]
    %151 = vrot.lane.b32.xlu0 %v150, 28
    %v152 = vpop.permute.xlu0 %151
    %vm153 = vcmask 261344
    %154 = vst.msk [vmem:[#allocation0] sm:$0x1] %vm153, %v152
    %s155 = scalar_lea.vmem %s0, 6
    %v156 = vld [vmem:[%s155] sm:$0x1]
    %157 = vrot.lane.b32.xlu0 %v156, 24
    %v158 = vpop.permute.xlu0 %157
    %vm159 = vcmask 228544
    %160 = vst.msk [vmem:[#allocation0] sm:$0x1] %vm159, %v158
    %s161 = scalar_lea.vmem %s0, 5
    %v162 = vld [vmem:[%s161] sm:$0x1]
    %163 = vrot.lane.b32.xlu0 %v162, 20
    %v164 = vpop.permute.xlu0 %163
    %vm165 = vcmask 195744
    %166 = vst.msk [vmem:[#allocation0] sm:$0x1] %vm165, %v164
    %s167 = scalar_lea.vmem %s0, 4
    %v168 = vld [vmem:[%s167] sm:$0x1]
    %169 = vrot.lane.b32.xlu0 %v168, 16
    %v170 = vpop.permute.xlu0 %169
    %vm171 = vcmask 162944
    %172 = vst.msk [vmem:[#allocation0] sm:$0x1] %vm171, %v170
    %s173 = scalar_lea.vmem %s0, 3
    %v174 = vld [vmem:[%s173] sm:$0x1]
    %175 = vrot.lane.b32.xlu0 %v174, 12
    %v176 = vpop.permute.xlu0 %175
    %vm177 = vcmask 130144
    %178 = vst.msk [vmem:[#allocation0] sm:$0x1] %vm177, %v176
    %s179 = scalar_lea.vmem %s0, 2
    %v180 = vld [vmem:[%s179] sm:$0x1]
    %181 = vrot.lane.b32.xlu0 %v180, 8
    %v182 = vpop.permute.xlu0 %181
    %vm183 = vcmask 97344
    %184 = vst.msk [vmem:[#allocation0] sm:$0x1] %vm183, %v182
    %s185 = scalar_lea.vmem %s0, 1
    %v186 = vld [vmem:[%s185] sm:$0x1]
    %187 = vrot.lane.b32.xlu0 %v186, 4
    %v188 = vpop.permute.xlu0 %187
    %vm189 = vcmask 64544
    %190 = vst.msk [vmem:[#allocation0] sm:$0x1] %vm189, %v188
    %s192 = sshllo.u32 0, 1
    %v194 = vld [vmem:[#allocation0] sm:%s192]
    %s195 = sshllo.u32 0, 1
    %196 = vst [vmem:[%s1] sm:%s195] %v194

// kernel: ded4_forward.1
$region0: #{ded4_forward.1}
  #allocation0 [shape = 'u32[]', space=smem, size = 0x4, offset = 0x4, fixed_abs, tag = 'smem constant byte address 0x4 - core index']
  #allocation1 [shape = 'u32[144,128]{1,0:T(1,128)}', space=vmem, size = 0x12000, scoped, tag = 'internal scratch']
  #allocation2 [shape = 'f32[36,128]{1,0:T(8,128)}', space=vmem, size = 0x5000, scoped, tag = 'scratch operand']
  #allocation3 [shape = 'f32[10,128]{1,0:T(8,128)}', space=vmem, size = 0x2000, scoped, tag = 'scratch operand']
  %s0 = inlined_call_operand.vmem [shape: f32[2,16,64], index: 0, kind: input, shape index: {}]
  %s1 = inlined_call_operand.vmem [shape: f32[2,8,64], index: 1, kind: input, shape index: {}]
  %s2 = inlined_call_operand.vmem [shape: f32[32,16], index: 2, kind: input, shape index: {}]
  %s3 = inlined_call_operand.vmem [shape: f32[64,128], index: 3, kind: input, shape index: {}]
  %s4 = inlined_call_operand.vmem [shape: f32[16,8], index: 4, kind: input, shape index: {}]
  %s5 = inlined_call_operand.vmem [shape: f32[32,64], index: 5, kind: input, shape index: {}]
  %s6 = inlined_call_operand.vmem [shape: f32[640,128], index: 6, kind: input, shape index: {}]
  %s7 = inlined_call_operand.vmem [shape: f32[1,128], index: 7, kind: input, shape index: {}]
  %s8 = inlined_call_operand.vmem [shape: f32[384,32], index: 8, kind: input, shape index: {}]
  %s9 = inlined_call_operand.vmem [shape: f32[1,32], index: 9, kind: input, shape index: {}]
  %s10 = inlined_call_operand.vmem [shape: f32[192,64], index: 10, kind: input, shape index: {}]
  %s11 = inlined_call_operand.vmem [shape: f32[1,64], index: 11, kind: input, shape index: {}]
  %s12 = inlined_call_operand.vmem [shape: f32[128,64], index: 12, kind: input, shape index: {}]
  %s13 = inlined_call_operand.vmem [shape: f32[128,64], index: 13, kind: input, shape index: {}]
  %s14 = inlined_call_operand.vmem [shape: f32[64,32], index: 14, kind: input, shape index: {}]
  %s15 = inlined_call_operand.vmem [shape: f32[64,32], index: 15, kind: input, shape index: {}]
  %s16 = inlined_call_operand.vmem [shape: f32[2,16,64], index: 16, kind: output, shape index: {}]
  %s17 = sld [smem:[#allocation0]]
  $region97: #{ded4_forward.1} parent=0
    _
  %s19 = ssub.s32 1, %s17
  %s20 = scalar_select 0, %s19, %s17
  loop: start=0, step=1, limit=4
  $region2: #{ded4_forward.1} parent=0 // loop_pre_header
    _
  $region3: #{ded4_forward.1} parent=0 // loop_header
    %s22 = sphi 0, %s26
    %p23 = scmp.ge.s32.totalorder %s22, 4
    %s32 = sphi 0, %s34
    %s35 = sphi 0, %s32
    %s36 = sphi 0, %s35
    %s52 = sphi 0, %s36
    %s58 = sphi 0, %s60
    %s61 = sphi 0, %s58
    %s62 = sphi 0, %s61
    %s78 = sphi 0, %s62
    %s82 = sphi 0, %s82
    %s84 = sphi 0, %s82
    %s85 = sphi 0, %s84
    %s99 = sphi 0, %s85
    %s103 = sphi 0, %s103
    %s105 = sphi 0, %s103
    %s106 = sphi 0, %s105
    %s120 = sphi 0, %s106
    %s124 = sphi 0, %s124
    %s126 = sphi 0, %s124
    %s127 = sphi 0, %s126
    %s141 = sphi 0, %s127
    %s145 = sphi 0, %s145
    %s147 = sphi 0, %s145
    %s148 = sphi 0, %s147
    %s162 = sphi 0, %s148
    %s166 = sphi 0, %s166
    %s168 = sphi 0, %s166
    %s169 = sphi 0, %s168
    %s183 = sphi 0, %s169
    %s187 = sphi 0, %s187
    %s189 = sphi 0, %s187
    %s190 = sphi 0, %s189
    %s204 = sphi 0, %s190
    %s208 = sphi 0, %s208
    %s210 = sphi 0, %s208
    %s211 = sphi 0, %s210
    %s225 = sphi 0, %s211
    %s229 = sphi 0, %s229
    %s231 = sphi 0, %s229
    %s232 = sphi 0, %s231
    %s246 = sphi 0, %s232
    %s250 = sphi 0, %s250
    %s252 = sphi 0, %s250
    %s253 = sphi 0, %s252
    %s267 = sphi 0, %s253
    %s271 = sphi 0, %s271
    %s273 = sphi 0, %s271
    %s274 = sphi 0, %s273
    %s288 = sphi 0, %s274
    %s292 = sphi 0, %s292
    %s294 = sphi 0, %s292
    %s295 = sphi 0, %s294
    %s309 = sphi 0, %s295
    %s313 = sphi 0, %s313
    %s315 = sphi 0, %s313
    %s316 = sphi 0, %s315
    %s330 = sphi 0, %s316
    %s334 = sphi 0, %s334
    %s336 = sphi 0, %s334
    %s337 = sphi 0, %s336
    %s351 = sphi 0, %s337
    %s355 = sphi 0, %s355
    %s357 = sphi 0, %s355
    %s358 = sphi 0, %s357
    %s372 = sphi 0, %s358
    %s378 = sphi 0, %s380
    %s381 = sphi 0, %s378
    %s382 = sphi 0, %s381
    %s398 = sphi 0, %s382
  $region4: #{ded4_forward.1} parent=0 // loop_header_branch
    %25 = sbr.rel (%p23) target = $region8
  $region5: #{ded4_forward.1} parent=0 // loop_body
    %s27 = ssub.s32 %s22, 1
    %s28 = ssub.s32 %s22, 2
    %s29 = sadd.s32 %s22, 1
    %s30 = ssub.s32 %s22, %s29
    %p31 = scmp.eq.s32.totalorder %s30, 0
    %s33 = sadd.s32 %s32, 1
    %s34 = scalar_select %p31, %s32, %s33
    %p37 = pneg %p31
    %p38 = scmp.eq.s32.totalorder %s22, 1
    %p39 = por %p37, %p38
    %p40 = scmp.ne.s32.totalorder %s32, %s35
    %p41 = scmp.eq.s32.totalorder %s22, 0
    %p42 = por %p40, %p41
    %p43 = scmp.ne.s32.totalorder %s32, %s35
    %p44 = scmp.eq.s32.totalorder %s27, 1
    %p45 = por %p43, %p44
    %p46 = scmp.ne.s32.totalorder %s35, %s36
    %p47 = scmp.eq.s32.totalorder %s27, 0
    %p48 = por %p46, %p47
    %p49 = scmp.ne.s32.totalorder %s35, %s36
    %p50 = scmp.eq.s32.totalorder %s28, 1
    %p51 = por %p49, %p50
    %p53 = scmp.ne.s32.totalorder %s36, %s52
    %p54 = scmp.eq.s32.totalorder %s28, 0
    %p55 = por %p53, %p54
    %s56 = ssub.s32 %s22, %s29
    %p57 = scmp.eq.s32.totalorder %s56, 0
    %s59 = sadd.s32 %s58, 1
    %s60 = scalar_select %p57, %s58, %s59
    %p63 = pneg %p57
    %p64 = scmp.eq.s32.totalorder %s22, 1
    %p65 = por %p63, %p64
    %p66 = scmp.ne.s32.totalorder %s58, %s61
    %p67 = scmp.eq.s32.totalorder %s22, 0
    %p68 = por %p66, %p67
    %p69 = scmp.ne.s32.totalorder %s58, %s61
    %p70 = scmp.eq.s32.totalorder %s27, 1
    %p71 = por %p69, %p70
    %p72 = scmp.ne.s32.totalorder %s61, %s62
    %p73 = scmp.eq.s32.totalorder %s27, 0
    %p74 = por %p72, %p73
    %p75 = scmp.ne.s32.totalorder %s61, %s62
    %p76 = scmp.eq.s32.totalorder %s28, 1
    %p77 = por %p75, %p76
    %p79 = scmp.ne.s32.totalorder %s62, %s78
    %p80 = scmp.eq.s32.totalorder %s28, 0
    %p81 = por %p79, %p80
    %s83 = sadd.s32 %s82, 1
    %p86 = scmp.eq.s32.totalorder %s22, 1
    %p87 = scmp.ne.s32.totalorder %s82, %s84
    %p88 = scmp.eq.s32.totalorder %s22, 0
    %p89 = por %p87, %p88
    %p90 = scmp.ne.s32.totalorder %s82, %s84
    %p91 = scmp.eq.s32.totalorder %s27, 1
    %p92 = por %p90, %p91
    %p93 = scmp.ne.s32.totalorder %s84, %s85
    %p94 = scmp.eq.s32.totalorder %s27, 0
    %p95 = por %p93, %p94
    %p96 = scmp.ne.s32.totalorder %s84, %s85
    %p97 = scmp.eq.s32.totalorder %s28, 1
    %p98 = por %p96, %p97
    %p100 = scmp.ne.s32.totalorder %s85, %s99
    %p101 = scmp.eq.s32.totalorder %s28, 0
    %p102 = por %p100, %p101
    %s104 = sadd.s32 %s103, 1
    %p107 = scmp.eq.s32.totalorder %s22, 1
    %p108 = scmp.ne.s32.totalorder %s103, %s105
    %p109 = scmp.eq.s32.totalorder %s22, 0
    %p110 = por %p108, %p109
    %p111 = scmp.ne.s32.totalorder %s103, %s105
    %p112 = scmp.eq.s32.totalorder %s27, 1
    %p113 = por %p111, %p112
    %p114 = scmp.ne.s32.totalorder %s105, %s106
    %p115 = scmp.eq.s32.totalorder %s27, 0
    %p116 = por %p114, %p115
    %p117 = scmp.ne.s32.totalorder %s105, %s106
    %p118 = scmp.eq.s32.totalorder %s28, 1
    %p119 = por %p117, %p118
    %p121 = scmp.ne.s32.totalorder %s106, %s120
    %p122 = scmp.eq.s32.totalorder %s28, 0
    %p123 = por %p121, %p122
    %s125 = sadd.s32 %s124, 1
    %p128 = scmp.eq.s32.totalorder %s22, 1
    %p129 = scmp.ne.s32.totalorder %s124, %s126
    %p130 = scmp.eq.s32.totalorder %s22, 0
    %p131 = por %p129, %p130
    %p132 = scmp.ne.s32.totalorder %s124, %s126
    %p133 = scmp.eq.s32.totalorder %s27, 1
    %p134 = por %p132, %p133
    %p135 = scmp.ne.s32.totalorder %s126, %s127
    %p136 = scmp.eq.s32.totalorder %s27, 0
    %p137 = por %p135, %p136
    %p138 = scmp.ne.s32.totalorder %s126, %s127
    %p139 = scmp.eq.s32.totalorder %s28, 1
    %p140 = por %p138, %p139
    %p142 = scmp.ne.s32.totalorder %s127, %s141
    %p143 = scmp.eq.s32.totalorder %s28, 0
    %p144 = por %p142, %p143
    %s146 = sadd.s32 %s145, 1
    %p149 = scmp.eq.s32.totalorder %s22, 1
    %p150 = scmp.ne.s32.totalorder %s145, %s147
    %p151 = scmp.eq.s32.totalorder %s22, 0
    %p152 = por %p150, %p151
    %p153 = scmp.ne.s32.totalorder %s145, %s147
    %p154 = scmp.eq.s32.totalorder %s27, 1
    %p155 = por %p153, %p154
    %p156 = scmp.ne.s32.totalorder %s147, %s148
    %p157 = scmp.eq.s32.totalorder %s27, 0
    %p158 = por %p156, %p157
    %p159 = scmp.ne.s32.totalorder %s147, %s148
    %p160 = scmp.eq.s32.totalorder %s28, 1
    %p161 = por %p159, %p160
    %p163 = scmp.ne.s32.totalorder %s148, %s162
    %p164 = scmp.eq.s32.totalorder %s28, 0
    %p165 = por %p163, %p164
    %s167 = sadd.s32 %s166, 1
    %p170 = scmp.eq.s32.totalorder %s22, 1
    %p171 = scmp.ne.s32.totalorder %s166, %s168
    %p172 = scmp.eq.s32.totalorder %s22, 0
    %p173 = por %p171, %p172
    %p174 = scmp.ne.s32.totalorder %s166, %s168
    %p175 = scmp.eq.s32.totalorder %s27, 1
    %p176 = por %p174, %p175
    %p177 = scmp.ne.s32.totalorder %s168, %s169
    %p178 = scmp.eq.s32.totalorder %s27, 0
    %p179 = por %p177, %p178
    %p180 = scmp.ne.s32.totalorder %s168, %s169
    %p181 = scmp.eq.s32.totalorder %s28, 1
    %p182 = por %p180, %p181
    %p184 = scmp.ne.s32.totalorder %s169, %s183
    %p185 = scmp.eq.s32.totalorder %s28, 0
    %p186 = por %p184, %p185
    %s188 = sadd.s32 %s187, 1
    %p191 = scmp.eq.s32.totalorder %s22, 1
    %p192 = scmp.ne.s32.totalorder %s187, %s189
    %p193 = scmp.eq.s32.totalorder %s22, 0
    %p194 = por %p192, %p193
    %p195 = scmp.ne.s32.totalorder %s187, %s189
    %p196 = scmp.eq.s32.totalorder %s27, 1
    %p197 = por %p195, %p196
    %p198 = scmp.ne.s32.totalorder %s189, %s190
    %p199 = scmp.eq.s32.totalorder %s27, 0
    %p200 = por %p198, %p199
    %p201 = scmp.ne.s32.totalorder %s189, %s190
    %p202 = scmp.eq.s32.totalorder %s28, 1
    %p203 = por %p201, %p202
    %p205 = scmp.ne.s32.totalorder %s190, %s204
    %p206 = scmp.eq.s32.totalorder %s28, 0
    %p207 = por %p205, %p206
    %s209 = sadd.s32 %s208, 1
    %p212 = scmp.eq.s32.totalorder %s22, 1
    %p213 = scmp.ne.s32.totalorder %s208, %s210
    %p214 = scmp.eq.s32.totalorder %s22, 0
    %p215 = por %p213, %p214
    %p216 = scmp.ne.s32.totalorder %s208, %s210
    %p217 = scmp.eq.s32.totalorder %s27, 1
    %p218 = por %p216, %p217
    %p219 = scmp.ne.s32.totalorder %s210, %s211
    %p220 = scmp.eq.s32.totalorder %s27, 0
    %p221 = por %p219, %p220
    %p222 = scmp.ne.s32.totalorder %s210, %s211
    %p223 = scmp.eq.s32.totalorder %s28, 1
    %p224 = por %p222, %p223
    %p226 = scmp.ne.s32.totalorder %s211, %s225
    %p227 = scmp.eq.s32.totalorder %s28, 0
    %p228 = por %p226, %p227
    %s230 = sadd.s32 %s229, 1
    %p233 = scmp.eq.s32.totalorder %s22, 1
    %p234 = scmp.ne.s32.totalorder %s229, %s231
    %p235 = scmp.eq.s32.totalorder %s22, 0
    %p236 = por %p234, %p235
    %p237 = scmp.ne.s32.totalorder %s229, %s231
    %p238 = scmp.eq.s32.totalorder %s27, 1
    %p239 = por %p237, %p238
    %p240 = scmp.ne.s32.totalorder %s231, %s232
    %p241 = scmp.eq.s32.totalorder %s27, 0
    %p242 = por %p240, %p241
    %p243 = scmp.ne.s32.totalorder %s231, %s232
    %p244 = scmp.eq.s32.totalorder %s28, 1
    %p245 = por %p243, %p244
    %p247 = scmp.ne.s32.totalorder %s232, %s246
    %p248 = scmp.eq.s32.totalorder %s28, 0
    %p249 = por %p247, %p248
    %s251 = sadd.s32 %s250, 1
    %p254 = scmp.eq.s32.totalorder %s22, 1
    %p255 = scmp.ne.s32.totalorder %s250, %s252
    %p256 = scmp.eq.s32.totalorder %s22, 0
    %p257 = por %p255, %p256
    %p258 = scmp.ne.s32.totalorder %s250, %s252
    %p259 = scmp.eq.s32.totalorder %s27, 1
    %p260 = por %p258, %p259
    %p261 = scmp.ne.s32.totalorder %s252, %s253
    %p262 = scmp.eq.s32.totalorder %s27, 0
    %p263 = por %p261, %p262
    %p264 = scmp.ne.s32.totalorder %s252, %s253
    %p265 = scmp.eq.s32.totalorder %s28, 1
    %p266 = por %p264, %p265
    %p268 = scmp.ne.s32.totalorder %s253, %s267
    %p269 = scmp.eq.s32.totalorder %s28, 0
    %p270 = por %p268, %p269
    %s272 = sadd.s32 %s271, 1
    %p275 = scmp.eq.s32.totalorder %s22, 1
    %p276 = scmp.ne.s32.totalorder %s271, %s273
    %p277 = scmp.eq.s32.totalorder %s22, 0
    %p278 = por %p276, %p277
    %p279 = scmp.ne.s32.totalorder %s271, %s273
    %p280 = scmp.eq.s32.totalorder %s27, 1
    %p281 = por %p279, %p280
    %p282 = scmp.ne.s32.totalorder %s273, %s274
    %p283 = scmp.eq.s32.totalorder %s27, 0
    %p284 = por %p282, %p283
    %p285 = scmp.ne.s32.totalorder %s273, %s274
    %p286 = scmp.eq.s32.totalorder %s28, 1
    %p287 = por %p285, %p286
    %p289 = scmp.ne.s32.totalorder %s274, %s288
    %p290 = scmp.eq.s32.totalorder %s28, 0
    %p291 = por %p289, %p290
    %s293 = sadd.s32 %s292, 1
    %p296 = scmp.eq.s32.totalorder %s22, 1
    %p297 = scmp.ne.s32.totalorder %s292, %s294
    %p298 = scmp.eq.s32.totalorder %s22, 0
    %p299 = por %p297, %p298
    %p300 = scmp.ne.s32.totalorder %s292, %s294
    %p301 = scmp.eq.s32.totalorder %s27, 1
    %p302 = por %p300, %p301
    %p303 = scmp.ne.s32.totalorder %s294, %s295
    %p304 = scmp.eq.s32.totalorder %s27, 0
    %p305 = por %p303, %p304
    %p306 = scmp.ne.s32.totalorder %s294, %s295
    %p307 = scmp.eq.s32.totalorder %s28, 1
    %p308 = por %p306, %p307
    %p310 = scmp.ne.s32.totalorder %s295, %s309
    %p311 = scmp.eq.s32.totalorder %s28, 0
    %p312 = por %p310, %p311
    %s314 = sadd.s32 %s313, 1
    %p317 = scmp.eq.s32.totalorder %s22, 1
    %p318 = scmp.ne.s32.totalorder %s313, %s315
    %p319 = scmp.eq.s32.totalorder %s22, 0
    %p320 = por %p318, %p319
    %p321 = scmp.ne.s32.totalorder %s313, %s315
    %p322 = scmp.eq.s32.totalorder %s27, 1
    %p323 = por %p321, %p322
    %p324 = scmp.ne.s32.totalorder %s315, %s316
    %p325 = scmp.eq.s32.totalorder %s27, 0
    %p326 = por %p324, %p325
    %p327 = scmp.ne.s32.totalorder %s315, %s316
    %p328 = scmp.eq.s32.totalorder %s28, 1
    %p329 = por %p327, %p328
    %p331 = scmp.ne.s32.totalorder %s316, %s330
    %p332 = scmp.eq.s32.totalorder %s28, 0
    %p333 = por %p331, %p332
    %s335 = sadd.s32 %s334, 1
    %p338 = scmp.eq.s32.totalorder %s22, 1
    %p339 = scmp.ne.s32.totalorder %s334, %s336
    %p340 = scmp.eq.s32.totalorder %s22, 0
    %p341 = por %p339, %p340
    %p342 = scmp.ne.s32.totalorder %s334, %s336
    %p343 = scmp.eq.s32.totalorder %s27, 1
    %p344 = por %p342, %p343
    %p345 = scmp.ne.s32.totalorder %s336, %s337
    %p346 = scmp.eq.s32.totalorder %s27, 0
    %p347 = por %p345, %p346
    %p348 = scmp.ne.s32.totalorder %s336, %s337
    %p349 = scmp.eq.s32.totalorder %s28, 1
    %p350 = por %p348, %p349
    %p352 = scmp.ne.s32.totalorder %s337, %s351
    %p353 = scmp.eq.s32.totalorder %s28, 0
    %p354 = por %p352, %p353
    %s356 = sadd.s32 %s355, 1
    %p359 = scmp.eq.s32.totalorder %s22, 1
    %p360 = scmp.ne.s32.totalorder %s355, %s357
    %p361 = scmp.eq.s32.totalorder %s22, 0
    %p362 = por %p360, %p361
    %p363 = scmp.ne.s32.totalorder %s355, %s357
    %p364 = scmp.eq.s32.totalorder %s27, 1
    %p365 = por %p363, %p364
    %p366 = scmp.ne.s32.totalorder %s357, %s358
    %p367 = scmp.eq.s32.totalorder %s27, 0
    %p368 = por %p366, %p367
    %p369 = scmp.ne.s32.totalorder %s357, %s358
    %p370 = scmp.eq.s32.totalorder %s28, 1
    %p371 = por %p369, %p370
    %p373 = scmp.ne.s32.totalorder %s358, %s372
    %p374 = scmp.eq.s32.totalorder %s28, 0
    %p375 = por %p373, %p374
    %s376 = ssub.s32 %s22, %s29
    %p377 = scmp.eq.s32.totalorder %s376, 0
    %s379 = sadd.s32 %s378, 1
    %s380 = scalar_select %p377, %s378, %s379
    %p383 = pneg %p377
    %p384 = scmp.eq.s32.totalorder %s22, 1
    %p385 = por %p383, %p384
    %p386 = scmp.ne.s32.totalorder %s378, %s381
    %p387 = scmp.eq.s32.totalorder %s22, 0
    %p388 = por %p386, %p387
    %p389 = scmp.ne.s32.totalorder %s378, %s381
    %p390 = scmp.eq.s32.totalorder %s27, 1
    %p391 = por %p389, %p390
    %p392 = scmp.ne.s32.totalorder %s381, %s382
    %p393 = scmp.eq.s32.totalorder %s27, 0
    %p394 = por %p392, %p393
    %p395 = scmp.ne.s32.totalorder %s381, %s382
    %p396 = scmp.eq.s32.totalorder %s28, 1
    %p397 = por %p395, %p396
    %p399 = scmp.ne.s32.totalorder %s382, %s398
    %p400 = scmp.eq.s32.totalorder %s28, 0
    %p401 = por %p399, %p400
    %p402 = scmp.le.s32.totalorder 1, %s22
    %p403 = scmp.lt.s32.totalorder %s22, 3
    %p404 = pnand %p402, %p403
    %p405 = pneg %p404
    // Predicated region
    $region9: #{ded4_forward.1} parent=5 // pred_check
      _
    $region10: #{ded4_forward.1} parent=5 // pred_check_branch
      %407 = sbr.rel (%p404) target = $region12
    $region11: #{ded4_forward.1} parent=5 // pred_region
      %s408 = ssub.s32 %s22, 1
      // Predicated region
      $region13: #{ded4_forward.1} parent=11 // pred_check
        %p409 = pneg %p95
      $region14: #{ded4_forward.1} parent=11 // pred_check_branch
        %411 = sbr.rel (%p409) target = $region16
      $region15: #{ded4_forward.1} parent=11 // pred_region
        _
      $region16: #{ded4_forward.1} parent=11 // pred_fallthru
        _
      // Predicated region
      $region17: #{ded4_forward.1} parent=11 // pred_check
        %p412 = pneg %p116
      $region18: #{ded4_forward.1} parent=11 // pred_check_branch
        %414 = sbr.rel (%p412) target = $region20
      $region19: #{ded4_forward.1} parent=11 // pred_region
        _
      $region20: #{ded4_forward.1} parent=11 // pred_fallthru
        _
      // Predicated region
      $region21: #{ded4_forward.1} parent=11 // pred_check
        %p415 = pneg %p137
      $region22: #{ded4_forward.1} parent=11 // pred_check_branch
        %417 = sbr.rel (%p415) target = $region24
      $region23: #{ded4_forward.1} parent=11 // pred_region
        _
      $region24: #{ded4_forward.1} parent=11 // pred_fallthru
        _
      // Predicated region
      $region25: #{ded4_forward.1} parent=11 // pred_check
        %p418 = pneg %p158
      $region26: #{ded4_forward.1} parent=11 // pred_check_branch
        %420 = sbr.rel (%p418) target = $region28
      $region27: #{ded4_forward.1} parent=11 // pred_region
        _
      $region28: #{ded4_forward.1} parent=11 // pred_fallthru
        _
      // Predicated region
      $region29: #{ded4_forward.1} parent=11 // pred_check
        %p421 = pneg %p179
      $region30: #{ded4_forward.1} parent=11 // pred_check_branch
        %423 = sbr.rel (%p421) target = $region32
      $region31: #{ded4_forward.1} parent=11 // pred_region
        _
      $region32: #{ded4_forward.1} parent=11 // pred_fallthru
        _
      // Predicated region
      $region33: #{ded4_forward.1} parent=11 // pred_check
        %p424 = pneg %p200
      $region34: #{ded4_forward.1} parent=11 // pred_check_branch
        %426 = sbr.rel (%p424) target = $region36
      $region35: #{ded4_forward.1} parent=11 // pred_region
        _
      $region36: #{ded4_forward.1} parent=11 // pred_fallthru
        _
      // Predicated region
      $region37: #{ded4_forward.1} parent=11 // pred_check
        %p427 = pneg %p221
      $region38: #{ded4_forward.1} parent=11 // pred_check_branch
        %429 = sbr.rel (%p427) target = $region40
      $region39: #{ded4_forward.1} parent=11 // pred_region
        _
      $region40: #{ded4_forward.1} parent=11 // pred_fallthru
        _
      // Predicated region
      $region41: #{ded4_forward.1} parent=11 // pred_check
        %p430 = pneg %p242
      $region42: #{ded4_forward.1} parent=11 // pred_check_branch
        %432 = sbr.rel (%p430) target = $region44
      $region43: #{ded4_forward.1} parent=11 // pred_region
        _
      $region44: #{ded4_forward.1} parent=11 // pred_fallthru
        _
      // Predicated region
      $region45: #{ded4_forward.1} parent=11 // pred_check
        %p433 = pneg %p263
      $region46: #{ded4_forward.1} parent=11 // pred_check_branch
        %435 = sbr.rel (%p433) target = $region48
      $region47: #{ded4_forward.1} parent=11 // pred_region
        _
      $region48: #{ded4_forward.1} parent=11 // pred_fallthru
        _
      // Predicated region
      $region49: #{ded4_forward.1} parent=11 // pred_check
        %p436 = pneg %p284
      $region50: #{ded4_forward.1} parent=11 // pred_check_branch
        %438 = sbr.rel (%p436) target = $region52
      $region51: #{ded4_forward.1} parent=11 // pred_region
        _
      $region52: #{ded4_forward.1} parent=11 // pred_fallthru
        _
      // Predicated region
      $region53: #{ded4_forward.1} parent=11 // pred_check
        %p439 = pneg %p305
      $region54: #{ded4_forward.1} parent=11 // pred_check_branch
        %441 = sbr.rel (%p439) target = $region56
      $region55: #{ded4_forward.1} parent=11 // pred_region
        _
      $region56: #{ded4_forward.1} parent=11 // pred_fallthru
        _
      // Predicated region
      $region57: #{ded4_forward.1} parent=11 // pred_check
        %p442 = pneg %p326
      $region58: #{ded4_forward.1} parent=11 // pred_check_branch
        %444 = sbr.rel (%p442) target = $region60
      $region59: #{ded4_forward.1} parent=11 // pred_region
        _
      $region60: #{ded4_forward.1} parent=11 // pred_fallthru
        _
      // Predicated region
      $region61: #{ded4_forward.1} parent=11 // pred_check
        %p445 = pneg %p347
      $region62: #{ded4_forward.1} parent=11 // pred_check_branch
        %447 = sbr.rel (%p445) target = $region64
      $region63: #{ded4_forward.1} parent=11 // pred_region
        _
      $region64: #{ded4_forward.1} parent=11 // pred_fallthru
        _
      // Predicated region
      $region65: #{ded4_forward.1} parent=11 // pred_check
        %p448 = pneg %p368
      $region66: #{ded4_forward.1} parent=11 // pred_check_branch
        %450 = sbr.rel (%p448) target = $region68
      $region67: #{ded4_forward.1} parent=11 // pred_region
        _
      $region68: #{ded4_forward.1} parent=11 // pred_fallthru
        _
    $region12: #{ded4_forward.1} parent=5 // pred_fallthru
      _
    %p451 = scmp.lt.s32.totalorder %s22, 2
    // Predicated region
    $region69: #{ded4_forward.1} parent=5 // pred_check
      %p452 = pneg %p451
    $region70: #{ded4_forward.1} parent=5 // pred_check_branch
      %454 = sbr.rel (%p452) target = $region72
    $region71: #{ded4_forward.1} parent=5 // pred_region
      // Predicated region
      $region73: #{ded4_forward.1} parent=71 // pred_check
        %p455 = pneg %p42
      $region74: #{ded4_forward.1} parent=71 // pred_check_branch
        %457 = sbr.rel (%p455) target = $region76
      $region75: #{ded4_forward.1} parent=71 // pred_region
        %p458 = scmp.lt.s32.totalorder %s22, 1
        %s459 = scalar_select %p458, %s22, 1
        %s460 = smul.addr %s459, 2
        %s461 = smul.addr %s460, 8
        %s462 = scalar_lea.vmem %s0, %s461
      $region76: #{ded4_forward.1} parent=71 // pred_fallthru
        _
      // Predicated region
      $region77: #{ded4_forward.1} parent=71 // pred_check
        %p463 = pneg %p68
      $region78: #{ded4_forward.1} parent=71 // pred_check_branch
        %465 = sbr.rel (%p463) target = $region80
      $region79: #{ded4_forward.1} parent=71 // pred_region
        %p466 = scmp.lt.s32.totalorder %s22, 1
        %s467 = scalar_select %p466, %s22, 1
        %s468 = smul.addr %s467, 8
        %s469 = scalar_lea.vmem %s1, %s468
      $region80: #{ded4_forward.1} parent=71 // pred_fallthru
        _
    $region72: #{ded4_forward.1} parent=5 // pred_fallthru
      _
    %p470 = scmp.le.s32.totalorder 1, %s22
    %p471 = scmp.lt.s32.totalorder %s22, 3
    %p472 = pnand %p470, %p471
    %p473 = pneg %p472
    // Predicated region
    $region81: #{ded4_forward.1} parent=5 // pred_check
      _
    $region82: #{ded4_forward.1} parent=5 // pred_check_branch
      %475 = sbr.rel (%p472) target = $region84
    $region83: #{ded4_forward.1} parent=5 // pred_region
      %s476 = ssub.s32 %s22, 1
      %p477 = scmp.lt.s32.totalorder %s27, 1
      %s478 = scalar_select %p477, %s27, 1
      %s479 = smul.addr %s478, 2
      %s480 = smul.addr %s479, 8
      %s481 = scalar_lea.vmem %s0, %s480
      %p482 = pneg %p48
      %p483 = pneg %p45
      %p484 = scmp.lt.s32.totalorder %s27, 1
      %s485 = scalar_select %p484, %s27, 1
      %s486 = smul.addr %s485, 8
      %s487 = scalar_lea.vmem %s1, %s486
      %p488 = pneg %p74
      %p489 = pneg %p71
      %p490 = pneg %p95
      %p491 = pneg %p92
      %p492 = pneg %p116
      %p493 = pneg %p113
      %p494 = pneg %p137
      %p495 = pneg %p134
      %p496 = pneg %p158
      %p497 = pneg %p155
      %p498 = pneg %p179
      %p499 = pneg %p176
      %p500 = pneg %p200
      %p501 = pneg %p197
      %p502 = pneg %p221
      %p503 = pneg %p218
      %p504 = pneg %p242
      %p505 = pneg %p239
      %p506 = pneg %p263
      %p507 = pneg %p260
      %p508 = pneg %p284
      %p509 = pneg %p281
      %p510 = pneg %p305
      %p511 = pneg %p302
      %p512 = pneg %p326
      %p513 = pneg %p323
      %p514 = pneg %p347
      %p515 = pneg %p344
      %p516 = pneg %p368
      %p517 = pneg %p365
      %p518 = pneg %p394
      %p519 = pneg %p391
      %p520 = scmp.lt.s32.totalorder %s27, 1
      %s521 = scalar_select %p520, %s27, 1
      %s522 = smul.addr %s521, 2
      %s523 = smul.addr %s522, 8
      %s524 = scalar_lea.vmem %s16, %s523
      %p525 = scmp.lt.s32.totalorder %s27, 1
      %s526 = scalar_select %p525, %s27, 1
      %s527 = smul.addr %s526, 2
      %s528 = smul.addr %s527, 8
      %s529 = scalar_lea.vmem %s0, %s528
      %p530 = scmp.lt.s32.totalorder %s27, 1
      %s531 = scalar_select %p530, %s27, 1
      %s532 = smul.addr %s531, 8
      %s533 = scalar_lea.vmem %s1, %s532
      %p534 = scmp.lt.s32.totalorder %s27, 1
      %s535 = scalar_select %p534, %s27, 1
      %s536 = smul.addr %s535, 2
      %s537 = smul.addr %s536, 8
      %s538 = scalar_lea.vmem %s16, %s537
      %v539 = vld [vmem:[%s529] sm:$0xff]
      %v540 = vld [vmem:[%s529 + $0x8] sm:$0xff]
      %v541 = vld [vmem:[%s2] sm:$0xff]
      %v542 = vld [vmem:[%s2 + $0x8] sm:$0xff]
      %v543 = vld [vmem:[%s2 + $0x10] sm:$0xff]
      %v544 = vld [vmem:[%s2 + $0x18] sm:$0xff]
      %vm545 = vcmask 130048
      %v547 = vsel %vm545, %v541, 0
      %v550 = vsel %vm545, %v542, 0
      %v553 = vsel %vm545, %v543, 0
      %v556 = vsel %vm545, %v544, 0
      %558 = vmatprep.subr.mxu0 0.0
      %559 = vmatpush1.msra.mxu0 %v539
      %560 = vmatprep.subr.mxu0 0.0
      %561 = vmatpush1.msra.mxu0 %v540
      %562 = vmatprep.subr.mxu0 0.0
      %563 = vmatpush1.msra.mxu0 0.0
      %564 = vmatprep.subr.mxu0 0.0
      %565 = vmatpush1.msra.mxu0 0.0
      %566 = vmatprep.subr.mxu0 0.0
      %567 = vmatpush1.msra.mxu0 0.0
      %568 = vmatprep.subr.mxu0 0.0
      %569 = vmatpush1.msra.mxu0 0.0
      %570 = vmatprep.subr.mxu0 0.0
      %571 = vmatpush1.msra.mxu0 0.0
      %572 = vmatprep.subr.mxu0 0.0
      %573 = vmatpush1.msra.mxu0 0.0
      %574 = vmatprep.subr.mxu0 0.0
      %575 = vmatpush1.msra.mxu0 0.0
      %576 = vmatprep.subr.mxu0 0.0
      %577 = vmatpush1.msra.mxu0 0.0
      %578 = vmatprep.subr.mxu0 0.0
      %579 = vmatpush1.msra.mxu0 0.0
      %580 = vmatprep.subr.mxu0 0.0
      %581 = vmatpush1.msra.mxu0 0.0
      %582 = vmatprep.subr.mxu0 0.0
      %583 = vmatpush1.msra.mxu0 0.0
      %584 = vmatprep.subr.mxu0 0.0
      %585 = vmatpush1.msra.mxu0 0.0
      %586 = vmatprep.subr.mxu0 0.0
      %587 = vmatpush1.msra.mxu0 0.0
      %588 = vmatprep.subr.mxu0 0.0
      %589 = vmatpush1.msra.mxu0 0.0
      %590 = vmatprep.subr.mxu0 0.0
      %591 = vmatpush1.msra.mxu0 0.0
      %592 = vmatprep.subr.mxu0 0.0
      %593 = vmatpush1.msra.mxu0 0.0
      %594 = vmatprep.subr.mxu0 0.0
      %595 = vmatpush1.msra.mxu0 0.0
      %596 = vmatprep.subr.mxu0 0.0
      %597 = vmatpush1.msra.mxu0 0.0
      %598 = vmatprep.subr.mxu0 0.0
      %599 = vmatpush1.msra.mxu0 0.0
      %600 = vmatprep.subr.mxu0 0.0
      %601 = vmatpush1.msra.mxu0 0.0
      %602 = vmatprep.subr.mxu0 0.0
      %603 = vmatpush1.msra.mxu0 0.0
      %604 = vmatprep.subr.mxu0 0.0
      %605 = vmatpush1.msra.mxu0 0.0
      %606 = vmatprep.subr.mxu0 0.0
      %607 = vmatpush1.msra.mxu0 0.0
      %608 = vmatprep.subr.mxu0 0.0
      %609 = vmatpush1.msra.mxu0 0.0
      %610 = vmatprep.subr.mxu0 0.0
      %611 = vmatpush1.msra.mxu0 0.0
      %612 = vmatprep.subr.mxu0 0.0
      %613 = vmatpush1.msra.mxu0 0.0
      %614 = vmatprep.subr.mxu0 0.0
      %615 = vmatpush1.msra.mxu0 0.0
      %616 = vmatprep.subr.mxu0 0.0
      %617 = vmatpush1.msra.mxu0 0.0
      %618 = vmatprep.subr.mxu0 0.0
      %619 = vmatpush1.msra.mxu0 0.0
      %620 = vmatprep.subr.mxu0 0.0
      %621 = vmatpush1.msra.mxu0 0.0
      %622 = vmatprep.mubr.f32.mxu0 0.0
      %623 = vmatmul.mubr.f32.gmra.mrb[0].mxu0 %v547
      %v624 = vpop.f32.mrb[0].mxu0
      %v625 = vadd.f32 0.0, %v624
      %v626 = vpop.f32.mrb[0].mxu0
      %627 = vmatprep.mubr.f32.mxu0 0.0
      %628 = vmatmul.mubr.f32.gmra.mrb[0].mxu0 %v550
      %v629 = vpop.f32.mrb[0].mxu0
      %v630 = vadd.f32 0.0, %v629
      %v631 = vpop.f32.mrb[0].mxu0
      %632 = vmatprep.mubr.f32.mxu0 0.0
      %633 = vmatmul.mubr.f32.gmra.mrb[0].mxu0 %v553
      %v634 = vpop.f32.mrb[0].mxu0
      %v635 = vadd.f32 0.0, %v634
      %v636 = vpop.f32.mrb[0].mxu0
      %637 = vmatprep.mubr.f32.mxu0 0.0
      %638 = vmatmul.mubr.f32.gmra.mrb[0].mxu0 %v556
      %v639 = vpop.f32.mrb[0].mxu0
      %v640 = vadd.f32 0.0, %v639
      %v641 = vpop.f32.mrb[0].mxu0
      %642 = vdwg.mxu0
      %v643 = vld [vmem:[%s3] sm:$0xff]
      %v644 = vld [vmem:[%s3 + $0x8] sm:$0xff]
      %v645 = vld [vmem:[%s3 + $0x10] sm:$0xff]
      %v646 = vld [vmem:[%s3 + $0x18] sm:$0xff]
      %v647 = vld [vmem:[%s3 + $0x20] sm:$0xff]
      %v648 = vld [vmem:[%s3 + $0x28] sm:$0xff]
      %v649 = vld [vmem:[%s3 + $0x30] sm:$0xff]
      %v650 = vld [vmem:[%s3 + $0x38] sm:$0xff]
      %vm651 = vcmask 523264
      %v653 = vsel %vm651, %v625, 0
      %v656 = vsel %vm651, %v630, 0
      %v659 = vsel %vm651, %v635, 0
      %v662 = vsel %vm651, %v640, 0
      %664 = vmatprep.subr.mxu0 0.0
      %665 = vmatpush1.msra.mxu0 %v643
      %666 = vmatprep.subr.mxu0 0.0
      %667 = vmatpush1.msra.mxu0 %v644
      %668 = vmatprep.subr.mxu0 0.0
      %669 = vmatpush1.msra.mxu0 %v645
      %670 = vmatprep.subr.mxu0 0.0
      %671 = vmatpush1.msra.mxu0 %v646
      %672 = vmatprep.subr.mxu0 0.0
      %673 = vmatpush1.msra.mxu0 %v647
      %674 = vmatprep.subr.mxu0 0.0
      %675 = vmatpush1.msra.mxu0 %v648
      %676 = vmatprep.subr.mxu0 0.0
      %677 = vmatpush1.msra.mxu0 %v649
      %678 = vmatprep.subr.mxu0 0.0
      %679 = vmatpush1.msra.mxu0 %v650
      %680 = vmatprep.subr.mxu0 0.0
      %681 = vmatpush1.msra.mxu0 0.0
      %682 = vmatprep.subr.mxu0 0.0
      %683 = vmatpush1.msra.mxu0 0.0
      %684 = vmatprep.subr.mxu0 0.0
      %685 = vmatpush1.msra.mxu0 0.0
      %686 = vmatprep.subr.mxu0 0.0
      %687 = vmatpush1.msra.mxu0 0.0
      %688 = vmatprep.subr.mxu0 0.0
      %689 = vmatpush1.msra.mxu0 0.0
      %690 = vmatprep.subr.mxu0 0.0
      %691 = vmatpush1.msra.mxu0 0.0
      %692 = vmatprep.subr.mxu0 0.0
      %693 = vmatpush1.msra.mxu0 0.0
      %694 = vmatprep.subr.mxu0 0.0
      %695 = vmatpush1.msra.mxu0 0.0
      %696 = vmatprep.subr.mxu0 0.0
      %697 = vmatpush1.msra.mxu0 0.0
      %698 = vmatprep.subr.mxu0 0.0
      %699 = vmatpush1.msra.mxu0 0.0
      %700 = vmatprep.subr.mxu0 0.0
      %701 = vmatpush1.msra.mxu0 0.0
      %702 = vmatprep.subr.mxu0 0.0
      %703 = vmatpush1.msra.mxu0 0.0
      %704 = vmatprep.subr.mxu0 0.0
      %705 = vmatpush1.msra.mxu0 0.0
      %706 = vmatprep.subr.mxu0 0.0
      %707 = vmatpush1.msra.mxu0 0.0
      %708 = vmatprep.subr.mxu0 0.0
      %709 = vmatpush1.msra.mxu0 0.0
      %710 = vmatprep.subr.mxu0 0.0
      %711 = vmatpush1.msra.mxu0 0.0
      %712 = vmatprep.subr.mxu0 0.0
      %713 = vmatpush1.msra.mxu0 0.0
      %714 = vmatprep.subr.mxu0 0.0
      %715 = vmatpush1.msra.mxu0 0.0
      %716 = vmatprep.subr.mxu0 0.0
      %717 = vmatpush1.msra.mxu0 0.0
      %718 = vmatprep.subr.mxu0 0.0
      %719 = vmatpush1.msra.mxu0 0.0
      %720 = vmatprep.subr.mxu0 0.0
      %721 = vmatpush1.msra.mxu0 0.0
      %722 = vmatprep.subr.mxu0 0.0
      %723 = vmatpush1.msra.mxu0 0.0
      %724 = vmatprep.subr.mxu0 0.0
      %725 = vmatpush1.msra.mxu0 0.0
      %726 = vmatprep.subr.mxu0 0.0
      %727 = vmatpush1.msra.mxu0 0.0
      %728 = vmatprep.mubr.f32.mxu0 0.0
      %729 = vmatmul.mubr.f32.gmra.mrb[0].mxu0 %v653
      %v730 = vpop.f32.mrb[0].mxu0
      %v731 = vadd.f32 0.0, %v730
      %v732 = vpop.f32.mrb[0].mxu0
      %733 = vmatprep.mubr.f32.mxu0 0.0
      %734 = vmatmul.mubr.f32.gmra.mrb[0].mxu0 %v656
      %v735 = vpop.f32.mrb[0].mxu0
      %v736 = vadd.f32 0.0, %v735
      %v737 = vpop.f32.mrb[0].mxu0
      %738 = vmatprep.mubr.f32.mxu0 0.0
      %739 = vmatmul.mubr.f32.gmra.mrb[0].mxu0 %v659
      %v740 = vpop.f32.mrb[0].mxu0
      %v741 = vadd.f32 0.0, %v740
      %v742 = vpop.f32.mrb[0].mxu0
      %743 = vmatprep.mubr.f32.mxu0 0.0
      %744 = vmatmul.mubr.f32.gmra.mrb[0].mxu0 %v662
      %v745 = vpop.f32.mrb[0].mxu0
      %v746 = vadd.f32 0.0, %v745
      %v747 = vpop.f32.mrb[0].mxu0
      %748 = vdwg.mxu0
      %749 = vst [vmem:[#allocation2] sm:$0xff] 0.0
      %750 = vst [vmem:[#allocation2 + $0x8] sm:$0xff] 0.0
      %751 = vst [vmem:[#allocation2 + $0x10] sm:$0xff] 0.0
      %752 = vst [vmem:[#allocation2 + $0x18] sm:$0xff] 0.0
      %753 = vst [vmem:[#allocation2 + $0x20] sm:$0xf] 0.0
      %754 = vst [vmem:[#allocation2 + $0x2] sm:$0xff] %v731
      %755 = vst [vmem:[#allocation2 + $0xa] sm:$0xff] %v736
      %756 = vst [vmem:[#allocation2 + $0x12] sm:$0xff] %v741
      %757 = vst [vmem:[#allocation2 + $0x1a] sm:$0xff] %v746
      %v758 = vld [vmem:[#allocation2] sm:$0xff]
      %v759 = vld [vmem:[#allocation2 + $0x8] sm:$0xff]
      %v760 = vld [vmem:[#allocation2 + $0x10] sm:$0xff]
      %v761 = vld [vmem:[#allocation2 + $0x18] sm:$0xff]
      %v762 = vld [vmem:[%s6] sm:$0xff]
      %v763 = vld [vmem:[%s6 + $0x8] sm:$0xff]
      %v764 = vld [vmem:[%s6 + $0x10] sm:$0xff]
      %v765 = vld [vmem:[%s6 + $0x18] sm:$0xff]
      %v766 = vld [vmem:[%s6 + $0x20] sm:$0xff]
      %v767 = vld [vmem:[%s6 + $0x28] sm:$0xff]
      %v768 = vld [vmem:[%s6 + $0x30] sm:$0xff]
      %v769 = vld [vmem:[%s6 + $0x38] sm:$0xff]
      %v770 = vld [vmem:[%s6 + $0x40] sm:$0xff]
      %v771 = vld [vmem:[%s6 + $0x48] sm:$0xff]
      %v772 = vld [vmem:[%s6 + $0x50] sm:$0xff]
      %v773 = vld [vmem:[%s6 + $0x58] sm:$0xff]
      %v774 = vld [vmem:[%s6 + $0x60] sm:$0xff]
      %v775 = vld [vmem:[%s6 + $0x68] sm:$0xff]
      %v776 = vld [vmem:[%s6 + $0x70] sm:$0xff]
      %v777 = vld [vmem:[%s6 + $0x78] sm:$0xff]
      %v778 = vld [vmem:[#allocation2 + $0x1] sm:$0xff]
      %v779 = vld [vmem:[#allocation2 + $0x9] sm:$0xff]
      %v780 = vld [vmem:[#allocation2 + $0x11] sm:$0xff]
      %v781 = vld [vmem:[#allocation2 + $0x19] sm:$0xff]
      %v782 = vld [vmem:[%s6 + $0x80] sm:$0xff]
      %v783 = vld [vmem:[%s6 + $0x88] sm:$0xff]
      %v784 = vld [vmem:[%s6 + $0x90] sm:$0xff]
      %v785 = vld [vmem:[%s6 + $0x98] sm:$0xff]
      %v786 = vld [vmem:[%s6 + $0xa0] sm:$0xff]
      %v787 = vld [vmem:[%s6 + $0xa8] sm:$0xff]
      %v788 = vld [vmem:[%s6 + $0xb0] sm:$0xff]
      %v789 = vld [vmem:[%s6 + $0xb8] sm:$0xff]
      %v790 = vld [vmem:[%s6 + $0xc0] sm:$0xff]
      %v791 = vld [vmem:[%s6 + $0xc8] sm:$0xff]
      %v792 = vld [vmem:[%s6 + $0xd0] sm:$0xff]
      %v793 = vld [vmem:[%s6 + $0xd8] sm:$0xff]
      %v794 = vld [vmem:[%s6 + $0xe0] sm:$0xff]
      %v795 = vld [vmem:[%s6 + $0xe8] sm:$0xff]
      %v796 = vld [vmem:[%s6 + $0xf0] sm:$0xff]
      %v797 = vld [vmem:[%s6 + $0xf8] sm:$0xff]
      %798 = vmatprep.subr.mxu0 0.0
      %799 = vmatpush1.msra.mxu0 %v782
      %800 = vmatprep.subr.mxu0 0.0
      %801 = vmatpush1.msra.mxu0 %v783
      %802 = vmatprep.subr.mxu0 0.0
      %803 = vmatpush1.msra.mxu0 %v784
      %804 = vmatprep.subr.mxu0 0.0
      %805 = vmatpush1.msra.mxu0 %v785
      %806 = vmatprep.subr.mxu0 0.0
      %807 = vmatpush1.msra.mxu0 %v786
      %808 = vmatprep.subr.mxu0 0.0
      %809 = vmatpush1.msra.mxu0 %v787
      %810 = vmatprep.subr.mxu0 0.0
      %811 = vmatpush1.msra.mxu0 %v788
      %812 = vmatprep.subr.mxu0 0.0
      %813 = vmatpush1.msra.mxu0 %v789
      %814 = vmatprep.subr.mxu0 0.0
      %815 = vmatpush1.msra.mxu0 %v790
      %816 = vmatprep.subr.mxu0 0.0
      %817 = vmatpush1.msra.mxu0 %v791
      %818 = vmatprep.subr.mxu0 0.0
      %819 = vmatpush1.msra.mxu0 %v792
      %820 = vmatprep.subr.mxu0 0.0
      %821 = vmatpush1.msra.mxu0 %v793
      %822 = vmatprep.subr.mxu0 0.0
      %823 = vmatpush1.msra.mxu0 %v794
      %824 = vmatprep.subr.mxu0 0.0
      %825 = vmatpush1.msra.mxu0 %v795
      %826 = vmatprep.subr.mxu0 0.0
      %827 = vmatpush1.msra.mxu0 %v796
      %828 = vmatprep.subr.mxu0 0.0
      %829 = vmatpush1.msra.mxu0 %v797
      %830 = vmatprep.subr.mxu0 0.0
      %831 = vmatpush1.msra.mxu0 0.0
      %832 = vmatprep.subr.mxu0 0.0
      %833 = vmatpush1.msra.mxu0 0.0
      %834 = vmatprep.subr.mxu0 0.0
      %835 = vmatpush1.msra.mxu0 0.0
      %836 = vmatprep.subr.mxu0 0.0
      %837 = vmatpush1.msra.mxu0 0.0
      %838 = vmatprep.subr.mxu0 0.0
      %839 = vmatpush1.msra.mxu0 0.0
      %840 = vmatprep.subr.mxu0 0.0
      %841 = vmatpush1.msra.mxu0 0.0
      %842 = vmatprep.subr.mxu0 0.0
      %843 = vmatpush1.msra.mxu0 0.0
      %844 = vmatprep.subr.mxu0 0.0
      %845 = vmatpush1.msra.mxu0 0.0
      %846 = vmatprep.subr.mxu0 0.0
      %847 = vmatpush1.msra.mxu0 0.0
      %848 = vmatprep.subr.mxu0 0.0
      %849 = vmatpush1.msra.mxu0 0.0
      %850 = vmatprep.subr.mxu0 0.0
      %851 = vmatpush1.msra.mxu0 0.0
      %852 = vmatprep.subr.mxu0 0.0
      %853 = vmatpush1.msra.mxu0 0.0
      %854 = vmatprep.subr.mxu0 0.0
      %855 = vmatpush1.msra.mxu0 0.0
      %856 = vmatprep.subr.mxu0 0.0
      %857 = vmatpush1.msra.mxu0 0.0
      %858 = vmatprep.subr.mxu0 0.0
      %859 = vmatpush1.msra.mxu0 0.0
      %860 = vmatprep.subr.mxu0 0.0
      %861 = vmatpush1.msra.mxu0 0.0
      %862 = vmatprep.mubr.f32.mxu0 0.0
      %863 = vmatmul.mubr.f32.gmra.mrb[0].mxu0 %v778
      %v864 = vpop.f32.mrb[0].mxu0
      %v865 = vadd.f32 0.0, %v864
      %v866 = vpop.f32.mrb[0].mxu0
      %867 = vmatprep.mubr.f32.mxu0 0.0
      %868 = vmatmul.mubr.f32.gmra.mrb[0].mxu0 %v779
      %v869 = vpop.f32.mrb[0].mxu0
      %v870 = vadd.f32 0.0, %v869
      %v871 = vpop.f32.mrb[0].mxu0
      %872 = vmatprep.mubr.f32.mxu0 0.0
      %873 = vmatmul.mubr.f32.gmra.mrb[0].mxu0 %v780
      %v874 = vpop.f32.mrb[0].mxu0
      %v875 = vadd.f32 0.0, %v874
      %v876 = vpop.f32.mrb[0].mxu0
      %877 = vmatprep.mubr.f32.mxu0 0.0
      %878 = vmatmul.mubr.f32.gmra.mrb[0].mxu0 %v781
      %v879 = vpop.f32.mrb[0].mxu0
      %v880 = vadd.f32 0.0, %v879
      %v881 = vpop.f32.mrb[0].mxu0
      %882 = vdwg.mxu0
      %v883 = vld [vmem:[#allocation2 + $0x2] sm:$0xff]
      %v884 = vld [vmem:[#allocation2 + $0xa] sm:$0xff]
      %v885 = vld [vmem:[#allocation2 + $0x12] sm:$0xff]
      %v886 = vld [vmem:[#allocation2 + $0x1a] sm:$0xff]
      %v887 = vld [vmem:[%s6 + $0x100] sm:$0xff]
      %v888 = vld [vmem:[%s6 + $0x108] sm:$0xff]
      %v889 = vld [vmem:[%s6 + $0x110] sm:$0xff]
      %v890 = vld [vmem:[%s6 + $0x118] sm:$0xff]
      %v891 = vld [vmem:[%s6 + $0x120] sm:$0xff]
      %v892 = vld [vmem:[%s6 + $0x128] sm:$0xff]
      %v893 = vld [vmem:[%s6 + $0x130] sm:$0xff]
      %v894 = vld [vmem:[%s6 + $0x138] sm:$0xff]
      %v895 = vld [vmem:[%s6 + $0x140] sm:$0xff]
      %v896 = vld [vmem:[%s6 + $0x148] sm:$0xff]
      %v897 = vld [vmem:[%s6 + $0x150] sm:$0xff]
      %v898 = vld [vmem:[%s6 + $0x158] sm:$0xff]
      %v899 = vld [vmem:[%s6 + $0x160] sm:$0xff]
      %v900 = vld [vmem:[%s6 + $0x168] sm:$0xff]
      %v901 = vld [vmem:[%s6 + $0x170] sm:$0xff]
      %v902 = vld [vmem:[%s6 + $0x178] sm:$0xff]
      %v903 = vld [vmem:[#allocation2 + $0x3] sm:$0xff]
      %v904 = vld [vmem:[#allocation2 + $0xb] sm:$0xff]
      %v905 = vld [vmem:[#allocation2 + $0x13] sm:$0xff]
      %v906 = vld [vmem:[#allocation2 + $0x1b] sm:$0xff]
      %v907 = vld [vmem:[%s6 + $0x180] sm:$0xff]
      %v908 = vld [vmem:[%s6 + $0x188] sm:$0xff]
      %v909 = vld [vmem:[%s6 + $0x190] sm:$0xff]
      %v910 = vld [vmem:[%s6 + $0x198] sm:$0xff]
      %v911 = vld [vmem:[%s6 + $0x1a0] sm:$0xff]
      %v912 = vld [vmem:[%s6 + $0x1a8] sm:$0xff]
      %v913 = vld [vmem:[%s6 + $0x1b0] sm:$0xff]
      %v914 = vld [vmem:[%s6 + $0x1b8] sm:$0xff]
      %v915 = vld [vmem:[%s6 + $0x1c0] sm:$0xff]
      %v916 = vld [vmem:[%s6 + $0x1c8] sm:$0xff]
      %v917 = vld [vmem:[%s6 + $0x1d0] sm:$0xff]
      %v918 = vld [vmem:[%s6 + $0x1d8] sm:$0xff]
      %v919 = vld [vmem:[%s6 + $0x1e0] sm:$0xff]
      %v920 = vld [vmem:[%s6 + $0x1e8] sm:$0xff]
      %v921 = vld [vmem:[%s6 + $0x1f0] sm:$0xff]
      %v922 = vld [vmem:[%s6 + $0x1f8] sm:$0xff]
      %923 = vmatprep.subr.mxu0 0.0
      %924 = vmatpush1.msra.mxu0 %v907
      %925 = vmatprep.subr.mxu0 0.0
      %926 = vmatpush1.msra.mxu0 %v908
      %927 = vmatprep.subr.mxu0 0.0
      %928 = vmatpush1.msra.mxu0 %v909
      %929 = vmatprep.subr.mxu0 0.0
      %930 = vmatpush1.msra.mxu0 %v910
      %931 = vmatprep.subr.mxu0 0.0
      %932 = vmatpush1.msra.mxu0 %v911
      %933 = vmatprep.subr.mxu0 0.0
      %934 = vmatpush1.msra.mxu0 %v912
      %935 = vmatprep.subr.mxu0 0.0
      %936 = vmatpush1.msra.mxu0 %v913
      %937 = vmatprep.subr.mxu0 0.0
      %938 = vmatpush1.msra.mxu0 %v914
      %939 = vmatprep.subr.mxu0 0.0
      %940 = vmatpush1.msra.mxu0 %v915
      %941 = vmatprep.subr.mxu0 0.0
      %942 = vmatpush1.msra.mxu0 %v916
      %943 = vmatprep.subr.mxu0 0.0
      %944 = vmatpush1.msra.mxu0 %v917
      %945 = vmatprep.subr.mxu0 0.0
      %946 = vmatpush1.msra.mxu0 %v918
      %947 = vmatprep.subr.mxu0 0.0
      %948 = vmatpush1.msra.mxu0 %v919
      %949 = vmatprep.subr.mxu0 0.0
      %950 = vmatpush1.msra.mxu0 %v920
      %951 = vmatprep.subr.mxu0 0.0
      %952 = vmatpush1.msra.mxu0 %v921
      %953 = vmatprep.subr.mxu0 0.0
      %954 = vmatpush1.msra.mxu0 %v922
      %955 = vmatprep.subr.mxu0 0.0
      %956 = vmatpush1.msra.mxu0 0.0
      %957 = vmatprep.subr.mxu0 0.0
      %958 = vmatpush1.msra.mxu0 0.0
      %959 = vmatprep.subr.mxu0 0.0
      %960 = vmatpush1.msra.mxu0 0.0
      %961 = vmatprep.subr.mxu0 0.0
      %962 = vmatpush1.msra.mxu0 0.0
      %963 = vmatprep.subr.mxu0 0.0
      %964 = vmatpush1.msra.mxu0 0.0
      %965 = vmatprep.subr.mxu0 0.0
      %966 = vmatpush1.msra.mxu0 0.0
      %967 = vmatprep.subr.mxu0 0.0
      %968 = vmatpush1.msra.mxu0 0.0
      %969 = vmatprep.subr.mxu0 0.0
      %970 = vmatpush1.msra.mxu0 0.0
      %971 = vmatprep.subr.mxu0 0.0
      %972 = vmatpush1.msra.mxu0 0.0
      %973 = vmatprep.subr.mxu0 0.0
      %974 = vmatpush1.msra.mxu0 0.0
      %975 = vmatprep.subr.mxu0 0.0
      %976 = vmatpush1.msra.mxu0 0.0
      %977 = vmatprep.subr.mxu0 0.0
      %978 = vmatpush1.msra.mxu0 0.0
      %979 = vmatprep.subr.mxu0 0.0
      %980 = vmatpush1.msra.mxu0 0.0
      %981 = vmatprep.subr.mxu0 0.0
      %982 = vmatpush1.msra.mxu0 0.0
      %983 = vmatprep.subr.mxu0 0.0
      %984 = vmatpush1.msra.mxu0 0.0
      %985 = vmatprep.subr.mxu0 0.0
      %986 = vmatpush1.msra.mxu0 0.0
      %987 = vmatprep.mubr.f32.mxu0 0.0
      %988 = vmatmul.mubr.f32.gmra.mrb[0].mxu0 %v903
      %v989 = vpop.f32.mrb[0].mxu0
      %v990 = vadd.f32 0.0, %v989
      %v991 = vpop.f32.mrb[0].mxu0
      %992 = vmatprep.mubr.f32.mxu0 0.0
      %993 = vmatmul.mubr.f32.gmra.mrb[0].mxu0 %v904
      %v994 = vpop.f32.mrb[0].mxu0
      %v995 = vadd.f32 0.0, %v994
      %v996 = vpop.f32.mrb[0].mxu0
      %997 = vmatprep.mubr.f32.mxu0 0.0
      %998 = vmatmul.mubr.f32.gmra.mrb[0].mxu0 %v905
      %v999 = vpop.f32.mrb[0].mxu0
      %v1000 = vadd.f32 0.0, %v999
      %v1001 = vpop.f32.mrb[0].mxu0
      %1002 = vmatprep.mubr.f32.mxu0 0.0
      %1003 = vmatmul.mubr.f32.gmra.mrb[0].mxu0 %v906
      %v1004 = vpop.f32.mrb[0].mxu0
      %v1005 = vadd.f32 0.0, %v1004
      %v1006 = vpop.f32.mrb[0].mxu0
      %1007 = vdwg.mxu0
      %v1008 = vld [vmem:[#allocation2 + $0x4] sm:$0xff]
      %v1009 = vld [vmem:[#allocation2 + $0xc] sm:$0xff]
      %v1010 = vld [vmem:[#allocation2 + $0x14] sm:$0xff]
      %v1011 = vld [vmem:[#allocation2 + $0x1c] sm:$0xff]
      %v1012 = vld [vmem:[%s6 + $0x200] sm:$0xff]
      %v1013 = vld [vmem:[%s6 + $0x208] sm:$0xff]
      %v1014 = vld [vmem:[%s6 + $0x210] sm:$0xff]
      %v1015 = vld [vmem:[%s6 + $0x218] sm:$0xff]
      %v1016 = vld [vmem:[%s6 + $0x220] sm:$0xff]
      %v1017 = vld [vmem:[%s6 + $0x228] sm:$0xff]
      %v1018 = vld [vmem:[%s6 + $0x230] sm:$0xff]
      %v1019 = vld [vmem:[%s6 + $0x238] sm:$0xff]
      %v1020 = vld [vmem:[%s6 + $0x240] sm:$0xff]
      %v1021 = vld [vmem:[%s6 + $0x248] sm:$0xff]
      %v1022 = vld [vmem:[%s6 + $0x250] sm:$0xff]
      %v1023 = vld [vmem:[%s6 + $0x258] sm:$0xff]
      %v1024 = vld [vmem:[%s6 + $0x260] sm:$0xff]
      %v1025 = vld [vmem:[%s6 + $0x268] sm:$0xff]
      %v1026 = vld [vmem:[%s6 + $0x270] sm:$0xff]
      %v1027 = vld [vmem:[%s6 + $0x278] sm:$0xff]
      %1028 = vmatprep.subr.mxu0 0.0
      %1029 = vmatpush1.msra.mxu0 %v1012
      %1030 = vmatprep.subr.mxu0 0.0
      %1031 = vmatpush1.msra.mxu0 %v1013
      %1032 = vmatprep.subr.mxu0 0.0
      %1033 = vmatpush1.msra.mxu0 %v1014
      %1034 = vmatprep.subr.mxu0 0.0
      %1035 = vmatpush1.msra.mxu0 %v1015
      %1036 = vmatprep.subr.mxu0 0.0
      %1037 = vmatpush1.msra.mxu0 %v1016
      %1038 = vmatprep.subr.mxu0 0.0
      %1039 = vmatpush1.msra.mxu0 %v1017
      %1040 = vmatprep.subr.mxu0 0.0
      %1041 = vmatpush1.msra.mxu0 %v1018
      %1042 = vmatprep.subr.mxu0 0.0
      %1043 = vmatpush1.msra.mxu0 %v1019
      %1044 = vmatprep.subr.mxu0 0.0
      %1045 = vmatpush1.msra.mxu0 %v1020
      %1046 = vmatprep.subr.mxu0 0.0
      %1047 = vmatpush1.msra.mxu0 %v1021
      %1048 = vmatprep.subr.mxu0 0.0
      %1049 = vmatpush1.msra.mxu0 %v1022
      %1050 = vmatprep.subr.mxu0 0.0
      %1051 = vmatpush1.msra.mxu0 %v1023
      %1052 = vmatprep.subr.mxu0 0.0
      %1053 = vmatpush1.msra.mxu0 %v1024
      %1054 = vmatprep.subr.mxu0 0.0
      %1055 = vmatpush1.msra.mxu0 %v1025
      %1056 = vmatprep.subr.mxu0 0.0
      %1057 = vmatpush1.msra.mxu0 %v1026
      %1058 = vmatprep.subr.mxu0 0.0
      %1059 = vmatpush1.msra.mxu0 %v1027
      %1060 = vmatprep.subr.mxu0 0.0
      %1061 = vmatpush1.msra.mxu0 0.0
      %1062 = vmatprep.subr.mxu0 0.0
      %1063 = vmatpush1.msra.mxu0 0.0
      %1064 = vmatprep.subr.mxu0 0.0
      %1065 = vmatpush1.msra.mxu0 0.0
      %1066 = vmatprep.subr.mxu0 0.0
      %1067 = vmatpush1.msra.mxu0 0.0
      %1068 = vmatprep.subr.mxu0 0.0
      %1069 = vmatpush1.msra.mxu0 0.0
      %1070 = vmatprep.subr.mxu0 0.0
      %1071 = vmatpush1.msra.mxu0 0.0
      %1072 = vmatprep.subr.mxu0 0.0
      %1073 = vmatpush1.msra.mxu0 0.0
      %1074 = vmatprep.subr.mxu0 0.0
      %1075 = vmatpush1.msra.mxu0 0.0
      %1076 = vmatprep.subr.mxu0 0.0
      %1077 = vmatpush1.msra.mxu0 0.0
      %1078 = vmatprep.subr.mxu0 0.0
      %1079 = vmatpush1.msra.mxu0 0.0
      %1080 = vmatprep.subr.mxu0 0.0
      %1081 = vmatpush1.msra.mxu0 0.0
      %1082 = vmatprep.subr.mxu0 0.0
      %1083 = vmatpush1.msra.mxu0 0.0
      %1084 = vmatprep.subr.mxu0 0.0
      %1085 = vmatpush1.msra.mxu0 0.0
      %1086 = vmatprep.subr.mxu0 0.0
      %1087 = vmatpush1.msra.mxu0 0.0
      %1088 = vmatprep.subr.mxu0 0.0
      %1089 = vmatpush1.msra.mxu0 0.0
      %1090 = vmatprep.subr.mxu0 0.0
      %1091 = vmatpush1.msra.mxu0 0.0
      %1092 = vmatprep.mubr.f32.mxu0 0.0
      %1093 = vmatmul.mubr.f32.gmra.mrb[0].mxu0 %v1008
      %v1094 = vpop.f32.mrb[0].mxu0
      %v1095 = vadd.f32 0.0, %v1094
      %v1096 = vpop.f32.mrb[0].mxu0
      %1097 = vmatprep.mubr.f32.mxu0 0.0
      %1098 = vmatmul.mubr.f32.gmra.mrb[0].mxu0 %v1009
      %v1099 = vpop.f32.mrb[0].mxu0
      %v1100 = vadd.f32 0.0, %v1099
      %v1101 = vpop.f32.mrb[0].mxu0
      %1102 = vmatprep.mubr.f32.mxu0 0.0
      %1103 = vmatmul.mubr.f32.gmra.mrb[0].mxu0 %v1010
      %v1104 = vpop.f32.mrb[0].mxu0
      %v1105 = vadd.f32 0.0, %v1104
      %v1106 = vpop.f32.mrb[0].mxu0
      %1107 = vmatprep.mubr.f32.mxu0 0.0
      %1108 = vmatmul.mubr.f32.gmra.mrb[0].mxu0 %v1011
      %v1109 = vpop.f32.mrb[0].mxu0
      %v1110 = vadd.f32 0.0, %v1109
      %v1111 = vpop.f32.mrb[0].mxu0
      %1112 = vdwg.mxu0
      %1113 = vmatprep.subr.mxu0 0.0
      %1114 = vmatpush1.msra.mxu0 %v762
      %1115 = vmatprep.subr.mxu0 0.0
      %1116 = vmatpush1.msra.mxu0 %v763
      %1117 = vmatprep.subr.mxu0 0.0
      %1118 = vmatpush1.msra.mxu0 %v764
      %1119 = vmatprep.subr.mxu0 0.0
      %1120 = vmatpush1.msra.mxu0 %v765
      %1121 = vmatprep.subr.mxu0 0.0
      %1122 = vmatpush1.msra.mxu0 %v766
      %1123 = vmatprep.subr.mxu0 0.0
      %1124 = vmatpush1.msra.mxu0 %v767
      %1125 = vmatprep.subr.mxu0 0.0
      %1126 = vmatpush1.msra.mxu0 %v768
      %1127 = vmatprep.subr.mxu0 0.0
      %1128 = vmatpush1.msra.mxu0 %v769
      %1129 = vmatprep.subr.mxu0 0.0
      %1130 = vmatpush1.msra.mxu0 %v770
      %1131 = vmatprep.subr.mxu0 0.0
      %1132 = vmatpush1.msra.mxu0 %v771
      %1133 = vmatprep.subr.mxu0 0.0
      %1134 = vmatpush1.msra.mxu0 %v772
      %1135 = vmatprep.subr.mxu0 0.0
      %1136 = vmatpush1.msra.mxu0 %v773
      %1137 = vmatprep.subr.mxu0 0.0
      %1138 = vmatpush1.msra.mxu0 %v774
      %1139 = vmatprep.subr.mxu0 0.0
      %1140 = vmatpush1.msra.mxu0 %v775
      %1141 = vmatprep.subr.mxu0 0.0
      %1142 = vmatpush1.msra.mxu0 %v776
      %1143 = vmatprep.subr.mxu0 0.0
      %1144 = vmatpush1.msra.mxu0 %v777
      %1145 = vmatprep.subr.mxu0 0.0
      %1146 = vmatpush1.msra.mxu0 0.0
      %1147 = vmatprep.subr.mxu0 0.0
      %1148 = vmatpush1.msra.mxu0 0.0
      %1149 = vmatprep.subr.mxu0 0.0
      %1150 = vmatpush1.msra.mxu0 0.0
      %1151 = vmatprep.subr.mxu0 0.0
      %1152 = vmatpush1.msra.mxu0 0.0
      %1153 = vmatprep.subr.mxu0 0.0
      %1154 = vmatpush1.msra.mxu0 0.0
      %1155 = vmatprep.subr.mxu0 0.0
      %1156 = vmatpush1.msra.mxu0 0.0
      %1157 = vmatprep.subr.mxu0 0.0
      %1158 = vmatpush1.msra.mxu0 0.0
      %1159 = vmatprep.subr.mxu0 0.0
      %1160 = vmatpush1.msra.mxu0 0.0
      %1161 = vmatprep.subr.mxu0 0.0
      %1162 = vmatpush1.msra.mxu0 0.0
      %1163 = vmatprep.subr.mxu0 0.0
      %1164 = vmatpush1.msra.mxu0 0.0
      %1165 = vmatprep.subr.mxu0 0.0
      %1166 = vmatpush1.msra.mxu0 0.0
      %1167 = vmatprep.subr.mxu0 0.0
      %1168 = vmatpush1.msra.mxu0 0.0
      %1169 = vmatprep.subr.mxu0 0.0
      %1170 = vmatpush1.msra.mxu0 0.0
      %1171 = vmatprep.subr.mxu0 0.0
      %1172 = vmatpush1.msra.mxu0 0.0
      %1173 = vmatprep.subr.mxu0 0.0
      %1174 = vmatpush1.msra.mxu0 0.0
      %1175 = vmatprep.subr.mxu0 0.0
      %1176 = vmatpush1.msra.mxu0 0.0
      %1177 = vmatprep.mubr.f32.mxu0 0.0
      %1178 = vmatmul.mubr.f32.gmra.mrb[0].mxu0 %v758
      %v1179 = vpop.f32.mrb[0].mxu0
      %v1180 = vadd.f32 %v865, %v1179
      %v1181 = vpop.f32.mrb[0].mxu0
      %1182 = vmatprep.mubr.f32.mxu0 0.0
      %1183 = vmatmul.mubr.f32.gmra.mrb[0].mxu0 %v759
      %v1184 = vpop.f32.mrb[0].mxu0
      %v1185 = vadd.f32 %v870, %v1184
      %v1186 = vpop.f32.mrb[0].mxu0
      %1187 = vmatprep.mubr.f32.mxu0 0.0
      %1188 = vmatmul.mubr.f32.gmra.mrb[0].mxu0 %v760
      %v1189 = vpop.f32.mrb[0].mxu0
      %v1190 = vadd.f32 %v875, %v1189
      %v1191 = vpop.f32.mrb[0].mxu0
      %1192 = vmatprep.mubr.f32.mxu0 0.0
      %1193 = vmatmul.mubr.f32.gmra.mrb[0].mxu0 %v761
      %v1194 = vpop.f32.mrb[0].mxu0
      %v1195 = vadd.f32 %v880, %v1194
      %v1196 = vpop.f32.mrb[0].mxu0
      %1197 = vdwg.mxu0
      %1198 = vmatprep.subr.mxu0 0.0
      %1199 = vmatpush1.msra.mxu0 %v887
      %1200 = vmatprep.subr.mxu0 0.0
      %1201 = vmatpush1.msra.mxu0 %v888
      %1202 = vmatprep.subr.mxu0 0.0
      %1203 = vmatpush1.msra.mxu0 %v889
      %1204 = vmatprep.subr.mxu0 0.0
      %1205 = vmatpush1.msra.mxu0 %v890
      %1206 = vmatprep.subr.mxu0 0.0
      %1207 = vmatpush1.msra.mxu0 %v891
      %1208 = vmatprep.subr.mxu0 0.0
      %1209 = vmatpush1.msra.mxu0 %v892
      %1210 = vmatprep.subr.mxu0 0.0
      %1211 = vmatpush1.msra.mxu0 %v893
      %1212 = vmatprep.subr.mxu0 0.0
      %1213 = vmatpush1.msra.mxu0 %v894
      %1214 = vmatprep.subr.mxu0 0.0
      %1215 = vmatpush1.msra.mxu0 %v895
      %1216 = vmatprep.subr.mxu0 0.0
      %1217 = vmatpush1.msra.mxu0 %v896
      %1218 = vmatprep.subr.mxu0 0.0
      %1219 = vmatpush1.msra.mxu0 %v897
      %1220 = vmatprep.subr.mxu0 0.0
      %1221 = vmatpush1.msra.mxu0 %v898
      %1222 = vmatprep.subr.mxu0 0.0
      %1223 = vmatpush1.msra.mxu0 %v899
      %1224 = vmatprep.subr.mxu0 0.0
      %1225 = vmatpush1.msra.mxu0 %v900
      %1226 = vmatprep.subr.mxu0 0.0
      %1227 = vmatpush1.msra.mxu0 %v901
      %1228 = vmatprep.subr.mxu0 0.0
      %1229 = vmatpush1.msra.mxu0 %v902
      %1230 = vmatprep.subr.mxu0 0.0
      %1231 = vmatpush1.msra.mxu0 0.0
      %1232 = vmatprep.subr.mxu0 0.0
      %1233 = vmatpush1.msra.mxu0 0.0
      %1234 = vmatprep.subr.mxu0 0.0
      %1235 = vmatpush1.msra.mxu0 0.0
      %1236 = vmatprep.subr.mxu0 0.0
      %1237 = vmatpush1.msra.mxu0 0.0
      %1238 = vmatprep.subr.mxu0 0.0
      %1239 = vmatpush1.msra.mxu0 0.0
      %1240 = vmatprep.subr.mxu0 0.0
      %1241 = vmatpush1.msra.mxu0 0.0
      %1242 = vmatprep.subr.mxu0 0.0
      %1243 = vmatpush1.msra.mxu0 0.0
      %1244 = vmatprep.subr.mxu0 0.0
      %1245 = vmatpush1.msra.mxu0 0.0
      %1246 = vmatprep.subr.mxu0 0.0
      %1247 = vmatpush1.msra.mxu0 0.0
      %1248 = vmatprep.subr.mxu0 0.0
      %1249 = vmatpush1.msra.mxu0 0.0
      %1250 = vmatprep.subr.mxu0 0.0
      %1251 = vmatpush1.msra.mxu0 0.0
      %1252 = vmatprep.subr.mxu0 0.0
      %1253 = vmatpush1.msra.mxu0 0.0
      %1254 = vmatprep.subr.mxu0 0.0
      %1255 = vmatpush1.msra.mxu0 0.0
      %1256 = vmatprep.subr.mxu0 0.0
      %1257 = vmatpush1.msra.mxu0 0.0
      %1258 = vmatprep.subr.mxu0 0.0
      %1259 = vmatpush1.msra.mxu0 0.0
      %1260 = vmatprep.subr.mxu0 0.0
      %1261 = vmatpush1.msra.mxu0 0.0
      %1262 = vmatprep.mubr.f32.mxu0 0.0
      %1263 = vmatmul.mubr.f32.gmra.mrb[0].mxu0 %v883
      %v1264 = vpop.f32.mrb[0].mxu0
      %v1265 = vadd.f32 %v990, %v1264
      %v1266 = vpop.f32.mrb[0].mxu0
      %1267 = vmatprep.mubr.f32.mxu0 0.0
      %1268 = vmatmul.mubr.f32.gmra.mrb[0].mxu0 %v884
      %v1269 = vpop.f32.mrb[0].mxu0
      %v1270 = vadd.f32 %v995, %v1269
      %v1271 = vpop.f32.mrb[0].mxu0
      %1272 = vmatprep.mubr.f32.mxu0 0.0
      %1273 = vmatmul.mubr.f32.gmra.mrb[0].mxu0 %v885
      %v1274 = vpop.f32.mrb[0].mxu0
      %v1275 = vadd.f32 %v1000, %v1274
      %v1276 = vpop.f32.mrb[0].mxu0
      %1277 = vmatprep.mubr.f32.mxu0 0.0
      %1278 = vmatmul.mubr.f32.gmra.mrb[0].mxu0 %v886
      %v1279 = vpop.f32.mrb[0].mxu0
      %v1280 = vadd.f32 %v1005, %v1279
      %v1281 = vpop.f32.mrb[0].mxu0
      %1282 = vdwg.mxu0
      %v1283 = vadd.f32 %v1180, %v1265
      %v1284 = vadd.f32 %v1185, %v1270
      %v1285 = vadd.f32 %v1190, %v1275
      %v1286 = vadd.f32 %v1195, %v1280
      %v1287 = vadd.f32 %v1283, %v1095
      %v1288 = vadd.f32 %v1284, %v1100
      %v1289 = vadd.f32 %v1285, %v1105
      %v1290 = vadd.f32 %v1286, %v1110
      %v1291 = vld [vmem:[%s7] sm:$0x1]
      %v1293 = vlaneseq
      %v1294 = vshrl.u32 %v1293, 7
      %v1295 = vsub.s32 0, %v1294
      %v1296 = vrot.slane %v1291, %v1295
      %v1298 = vadd.f32 %v1287, %v1296
      %v1299 = vadd.f32 %v1288, %v1296
      %v1300 = vadd.f32 %v1289, %v1296
      %v1301 = vadd.f32 %v1290, %v1296
      %v1302 = vmax.f32 %v1298, 0.0
      %v1303 = vmax.f32 %v1299, 0.0
      %v1304 = vmax.f32 %v1300, 0.0
      %v1305 = vmax.f32 %v1301, 0.0
      %v1310 = vcombine.high %v1302, %v1302
      %v1312 = vunpack.c.l.s4 1983009808
      %v1313 = vunpack.c.0.s8 %v1312
      %v1314 = vlaneseq
      %v1315 = vshrl.u32 %v1314, 7
      %v1316 = vsub.s32 %v1313, %v1315
      %v1317 = vrot.slane %v1302, %v1316
      %v1319 = vunpack.c.l.s4 1983009808
      %v1320 = vunpack.c.0.s8 %v1319
      %v1321 = vlaneseq
      %v1322 = vshrl.u32 %v1321, 7
      %v1323 = vsub.s32 %v1320, %v1322
      %v1324 = vrot.slane %v1310, %v1323
      %v1325 = vcombine.high %v1317, %v1317
      %v1326 = vcombine.high %v1324, %v1324
      %v1327 = vcombine.high %v1303, %v1303
      %v1329 = vunpack.c.l.s4 1983009808
      %v1330 = vunpack.c.0.s8 %v1329
      %v1331 = vlaneseq
      %v1332 = vshrl.u32 %v1331, 7
      %v1333 = vsub.s32 %v1330, %v1332
      %v1334 = vrot.slane %v1303, %v1333
      %v1336 = vunpack.c.l.s4 1983009808
      %v1337 = vunpack.c.0.s8 %v1336
      %v1338 = vlaneseq
      %v1339 = vshrl.u32 %v1338, 7
      %v1340 = vsub.s32 %v1337, %v1339
      %v1341 = vrot.slane %v1327, %v1340
      %v1342 = vcombine.high %v1334, %v1334
      %v1343 = vcombine.high %v1341, %v1341
      %v1344 = vcombine.high %v1304, %v1304
      %v1346 = vunpack.c.l.s4 1983009808
      %v1347 = vunpack.c.0.s8 %v1346
      %v1348 = vlaneseq
      %v1349 = vshrl.u32 %v1348, 7
      %v1350 = vsub.s32 %v1347, %v1349
      %v1351 = vrot.slane %v1304, %v1350
      %v1353 = vunpack.c.l.s4 1983009808
      %v1354 = vunpack.c.0.s8 %v1353
      %v1355 = vlaneseq
      %v1356 = vshrl.u32 %v1355, 7
      %v1357 = vsub.s32 %v1354, %v1356
      %v1358 = vrot.slane %v1344, %v1357
      %v1359 = vcombine.high %v1351, %v1351
      %v1360 = vcombine.high %v1358, %v1358
      %v1361 = vcombine.high %v1305, %v1305
      %v1363 = vunpack.c.l.s4 1983009808
      %v1364 = vunpack.c.0.s8 %v1363
      %v1365 = vlaneseq
      %v1366 = vshrl.u32 %v1365, 7
      %v1367 = vsub.s32 %v1364, %v1366
      %v1368 = vrot.slane %v1305, %v1367
      %v1370 = vunpack.c.l.s4 1983009808
      %v1371 = vunpack.c.0.s8 %v1370
      %v1372 = vlaneseq
      %v1373 = vshrl.u32 %v1372, 7
      %v1374 = vsub.s32 %v1371, %v1373
      %v1375 = vrot.slane %v1361, %v1374
      %v1376 = vcombine.high %v1368, %v1368
      %v1377 = vcombine.high %v1375, %v1375
      %v1394 = vrot.slane %v1317, 7
      %v1395 = vrot.slane %v1394, 2
      %v1396 = vrot.slane %v1325, 7
      %v1397 = vrot.slane %v1396, 2
      %v1398 = vrot.slane %v1324, 7
      %v1399 = vrot.slane %v1398, 2
      %v1400 = vrot.slane %v1326, 7
      %v1401 = vrot.slane %v1400, 2
      %v1402 = vrot.slane %v1334, 7
      %v1403 = vrot.slane %v1402, 2
      %v1404 = vrot.slane %v1342, 7
      %v1405 = vrot.slane %v1404, 2
      %v1406 = vrot.slane %v1341, 7
      %v1407 = vrot.slane %v1406, 2
      %v1408 = vrot.slane %v1343, 7
      %v1409 = vrot.slane %v1408, 2
      %v1410 = vrot.slane %v1351, 7
      %v1411 = vrot.slane %v1410, 2
      %v1412 = vrot.slane %v1359, 7
      %v1413 = vrot.slane %v1412, 2
      %v1414 = vrot.slane %v1358, 7
      %v1415 = vrot.slane %v1414, 2
      %v1416 = vrot.slane %v1360, 7
      %v1417 = vrot.slane %v1416, 2
      %v1418 = vrot.slane %v1368, 7
      %v1419 = vrot.slane %v1418, 2
      %v1420 = vrot.slane %v1376, 7
      %v1421 = vrot.slane %v1420, 2
      %v1422 = vrot.slane %v1375, 7
      %v1423 = vrot.slane %v1422, 2
      %v1424 = vrot.slane %v1377, 7
      %v1425 = vrot.slane %v1424, 2
      %v1442 = vmax.f32 %v1317, %v1395
      %v1443 = vmax.f32 %v1325, %v1397
      %v1444 = vmax.f32 %v1324, %v1399
      %v1445 = vmax.f32 %v1326, %v1401
      %v1446 = vmax.f32 %v1334, %v1403
      %v1447 = vmax.f32 %v1342, %v1405
      %v1448 = vmax.f32 %v1341, %v1407
      %v1449 = vmax.f32 %v1343, %v1409
      %v1450 = vmax.f32 %v1351, %v1411
      %v1451 = vmax.f32 %v1359, %v1413
      %v1452 = vmax.f32 %v1358, %v1415
      %v1453 = vmax.f32 %v1360, %v1417
      %v1454 = vmax.f32 %v1368, %v1419
      %v1455 = vmax.f32 %v1376, %v1421
      %v1456 = vmax.f32 %v1375, %v1423
      %v1457 = vmax.f32 %v1377, %v1425
      %v1458 = vld [vmem:[%s12] sm:$0xff]
      %v1459 = vld [vmem:[%s12 + $0x8] sm:$0xff]
      %v1460 = vld [vmem:[%s12 + $0x10] sm:$0xff]
      %v1461 = vld [vmem:[%s12 + $0x18] sm:$0xff]
      %v1462 = vld [vmem:[%s12 + $0x20] sm:$0xff]
      %v1463 = vld [vmem:[%s12 + $0x28] sm:$0xff]
      %v1464 = vld [vmem:[%s12 + $0x30] sm:$0xff]
      %v1465 = vld [vmem:[%s12 + $0x38] sm:$0xff]
      %v1466 = vld [vmem:[%s12 + $0x40] sm:$0xff]
      %v1467 = vld [vmem:[%s12 + $0x48] sm:$0xff]
      %v1468 = vld [vmem:[%s12 + $0x50] sm:$0xff]
      %v1469 = vld [vmem:[%s12 + $0x58] sm:$0xff]
      %v1470 = vld [vmem:[%s12 + $0x60] sm:$0xff]
      %v1471 = vld [vmem:[%s12 + $0x68] sm:$0xff]
      %v1472 = vld [vmem:[%s12 + $0x70] sm:$0xff]
      %v1473 = vld [vmem:[%s12 + $0x78] sm:$0xff]
      %v1490 = vlaneseq
      %v1491 = vshrl.u32 %v1490, 7
      %v1492 = vsub.s32 0, %v1491
      %v1493 = vrot.slane %v1442, %v1492
      %v1494 = vlaneseq
      %v1495 = vshrl.u32 %v1494, 7
      %v1496 = vsub.s32 0, %v1495
      %v1497 = vrot.slane %v1443, %v1496
      %v1498 = vlaneseq
      %v1499 = vshrl.u32 %v1498, 7
      %v1500 = vsub.s32 0, %v1499
      %v1501 = vrot.slane %v1444, %v1500
      %v1502 = vlaneseq
      %v1503 = vshrl.u32 %v1502, 7
      %v1504 = vsub.s32 0, %v1503
      %v1505 = vrot.slane %v1445, %v1504
      %v1506 = vlaneseq
      %v1507 = vshrl.u32 %v1506, 7
      %v1508 = vsub.s32 0, %v1507
      %v1509 = vrot.slane %v1446, %v1508
      %v1510 = vlaneseq
      %v1511 = vshrl.u32 %v1510, 7
      %v1512 = vsub.s32 0, %v1511
      %v1513 = vrot.slane %v1447, %v1512
      %v1514 = vlaneseq
      %v1515 = vshrl.u32 %v1514, 7
      %v1516 = vsub.s32 0, %v1515
      %v1517 = vrot.slane %v1448, %v1516
      %v1518 = vlaneseq
      %v1519 = vshrl.u32 %v1518, 7
      %v1520 = vsub.s32 0, %v1519
      %v1521 = vrot.slane %v1449, %v1520
      %v1522 = vlaneseq
      %v1523 = vshrl.u32 %v1522, 7
      %v1524 = vsub.s32 0, %v1523
      %v1525 = vrot.slane %v1450, %v1524
      %v1526 = vlaneseq
      %v1527 = vshrl.u32 %v1526, 7
      %v1528 = vsub.s32 0, %v1527
      %v1529 = vrot.slane %v1451, %v1528
      %v1530 = vlaneseq
      %v1531 = vshrl.u32 %v1530, 7
      %v1532 = vsub.s32 0, %v1531
      %v1533 = vrot.slane %v1452, %v1532
      %v1534 = vlaneseq
      %v1535 = vshrl.u32 %v1534, 7
      %v1536 = vsub.s32 0, %v1535
      %v1537 = vrot.slane %v1453, %v1536
      %v1538 = vlaneseq
      %v1539 = vshrl.u32 %v1538, 7
      %v1540 = vsub.s32 0, %v1539
      %v1541 = vrot.slane %v1454, %v1540
      %v1542 = vlaneseq
      %v1543 = vshrl.u32 %v1542, 7
      %v1544 = vsub.s32 0, %v1543
      %v1545 = vrot.slane %v1455, %v1544
      %v1546 = vlaneseq
      %v1547 = vshrl.u32 %v1546, 7
      %v1548 = vsub.s32 0, %v1547
      %v1549 = vrot.slane %v1456, %v1548
      %v1550 = vlaneseq
      %v1551 = vshrl.u32 %v1550, 7
      %v1552 = vsub.s32 0, %v1551
      %v1553 = vrot.slane %v1457, %v1552
      %vm1554 = vcmask 1041409
      %v1555 = vsel %vm1554, %v1497, %v1493
      %vm1556 = vcmask 1042434
      %v1557 = vsel %vm1556, %v1501, %v1555
      %vm1558 = vcmask 1043459
      %v1559 = vsel %vm1558, %v1505, %v1557
      %vm1560 = vcmask 1044484
      %v1561 = vsel %vm1560, %v1509, %v1559
      %vm1562 = vcmask 1045509
      %v1563 = vsel %vm1562, %v1513, %v1561
      %vm1564 = vcmask 1046534
      %v1565 = vsel %vm1564, %v1517, %v1563
      %vm1566 = vcmask 1047559
      %v1567 = vsel %vm1566, %v1521, %v1565
      %v1568 = vsel %vm1554, %v1529, %v1525
      %v1569 = vsel %vm1556, %v1533, %v1568
      %v1570 = vsel %vm1558, %v1537, %v1569
      %v1571 = vsel %vm1560, %v1541, %v1570
      %v1572 = vsel %vm1562, %v1545, %v1571
      %v1573 = vsel %vm1564, %v1549, %v1572
      %v1574 = vsel %vm1566, %v1553, %v1573
      %1577 = vmatprep.subr.mxu0 0.0
      %1578 = vmatpush1.msra.mxu0 %v1458
      %1579 = vmatprep.subr.mxu0 0.0
      %1580 = vmatpush1.msra.mxu0 %v1459
      %1581 = vmatprep.subr.mxu0 0.0
      %1582 = vmatpush1.msra.mxu0 %v1460
      %1583 = vmatprep.subr.mxu0 0.0
      %1584 = vmatpush1.msra.mxu0 %v1461
      %1585 = vmatprep.subr.mxu0 0.0
      %1586 = vmatpush1.msra.mxu0 %v1462
      %1587 = vmatprep.subr.mxu0 0.0
      %1588 = vmatpush1.msra.mxu0 %v1463
      %1589 = vmatprep.subr.mxu0 0.0
      %1590 = vmatpush1.msra.mxu0 %v1464
      %1591 = vmatprep.subr.mxu0 0.0
      %1592 = vmatpush1.msra.mxu0 %v1465
      %1593 = vmatprep.subr.mxu0 0.0
      %1594 = vmatpush1.msra.mxu0 %v1466
      %1595 = vmatprep.subr.mxu0 0.0
      %1596 = vmatpush1.msra.mxu0 %v1467
      %1597 = vmatprep.subr.mxu0 0.0
      %1598 = vmatpush1.msra.mxu0 %v1468
      %1599 = vmatprep.subr.mxu0 0.0
      %1600 = vmatpush1.msra.mxu0 %v1469
      %1601 = vmatprep.subr.mxu0 0.0
      %1602 = vmatpush1.msra.mxu0 %v1470
      %1603 = vmatprep.subr.mxu0 0.0
      %1604 = vmatpush1.msra.mxu0 %v1471
      %1605 = vmatprep.subr.mxu0 0.0
      %1606 = vmatpush1.msra.mxu0 %v1472
      %1607 = vmatprep.subr.mxu0 0.0
      %1608 = vmatpush1.msra.mxu0 %v1473
      %1609 = vmatprep.subr.mxu0 0.0
      %1610 = vmatpush1.msra.mxu0 0.0
      %1611 = vmatprep.subr.mxu0 0.0
      %1612 = vmatpush1.msra.mxu0 0.0
      %1613 = vmatprep.subr.mxu0 0.0
      %1614 = vmatpush1.msra.mxu0 0.0
      %1615 = vmatprep.subr.mxu0 0.0
      %1616 = vmatpush1.msra.mxu0 0.0
      %1617 = vmatprep.subr.mxu0 0.0
      %1618 = vmatpush1.msra.mxu0 0.0
      %1619 = vmatprep.subr.mxu0 0.0
      %1620 = vmatpush1.msra.mxu0 0.0
      %1621 = vmatprep.subr.mxu0 0.0
      %1622 = vmatpush1.msra.mxu0 0.0
      %1623 = vmatprep.subr.mxu0 0.0
      %1624 = vmatpush1.msra.mxu0 0.0
      %1625 = vmatprep.subr.mxu0 0.0
      %1626 = vmatpush1.msra.mxu0 0.0
      %1627 = vmatprep.subr.mxu0 0.0
      %1628 = vmatpush1.msra.mxu0 0.0
      %1629 = vmatprep.subr.mxu0 0.0
      %1630 = vmatpush1.msra.mxu0 0.0
      %1631 = vmatprep.subr.mxu0 0.0
      %1632 = vmatpush1.msra.mxu0 0.0
      %1633 = vmatprep.subr.mxu0 0.0
      %1634 = vmatpush1.msra.mxu0 0.0
      %1635 = vmatprep.subr.mxu0 0.0
      %1636 = vmatpush1.msra.mxu0 0.0
      %1637 = vmatprep.subr.mxu0 0.0
      %1638 = vmatpush1.msra.mxu0 0.0
      %1639 = vmatprep.subr.mxu0 0.0
      %1640 = vmatpush1.msra.mxu0 0.0
      %1641 = vmatprep.mubr.f32.mxu0 0.0
      %1642 = vmatmul.mubr.f32.gmra.mrb[0].mxu0 %v1567
      %v1643 = vpop.f32.mrb[0].mxu0
      %v1644 = vadd.f32 0.0, %v1643
      %v1645 = vpop.f32.mrb[0].mxu0
      %1646 = vmatprep.mubr.f32.mxu0 0.0
      %1647 = vmatmul.mubr.f32.gmra.mrb[0].mxu0 %v1574
      %v1648 = vpop.f32.mrb[0].mxu0
      %v1649 = vadd.f32 0.0, %v1648
      %v1650 = vpop.f32.mrb[0].mxu0
      %1651 = vdwg.mxu0
      %v1652 = vld [vmem:[%s13] sm:$0xff]
      %v1653 = vld [vmem:[%s13 + $0x8] sm:$0xff]
      %v1654 = vld [vmem:[%s13 + $0x10] sm:$0xff]
      %v1655 = vld [vmem:[%s13 + $0x18] sm:$0xff]
      %v1656 = vld [vmem:[%s13 + $0x20] sm:$0xff]
      %v1657 = vld [vmem:[%s13 + $0x28] sm:$0xff]
      %v1658 = vld [vmem:[%s13 + $0x30] sm:$0xff]
      %v1659 = vld [vmem:[%s13 + $0x38] sm:$0xff]
      %v1660 = vld [vmem:[%s13 + $0x40] sm:$0xff]
      %v1661 = vld [vmem:[%s13 + $0x48] sm:$0xff]
      %v1662 = vld [vmem:[%s13 + $0x50] sm:$0xff]
      %v1663 = vld [vmem:[%s13 + $0x58] sm:$0xff]
      %v1664 = vld [vmem:[%s13 + $0x60] sm:$0xff]
      %v1665 = vld [vmem:[%s13 + $0x68] sm:$0xff]
      %v1666 = vld [vmem:[%s13 + $0x70] sm:$0xff]
      %v1667 = vld [vmem:[%s13 + $0x78] sm:$0xff]
      %1668 = vmatprep.subr.mxu0 0.0
      %1669 = vmatpush1.msra.mxu0 %v1652
      %1670 = vmatprep.subr.mxu0 0.0
      %1671 = vmatpush1.msra.mxu0 %v1653
      %1672 = vmatprep.subr.mxu0 0.0
      %1673 = vmatpush1.msra.mxu0 %v1654
      %1674 = vmatprep.subr.mxu0 0.0
      %1675 = vmatpush1.msra.mxu0 %v1655
      %1676 = vmatprep.subr.mxu0 0.0
      %1677 = vmatpush1.msra.mxu0 %v1656
      %1678 = vmatprep.subr.mxu0 0.0
      %1679 = vmatpush1.msra.mxu0 %v1657
      %1680 = vmatprep.subr.mxu0 0.0
      %1681 = vmatpush1.msra.mxu0 %v1658
      %1682 = vmatprep.subr.mxu0 0.0
      %1683 = vmatpush1.msra.mxu0 %v1659
      %1684 = vmatprep.subr.mxu0 0.0
      %1685 = vmatpush1.msra.mxu0 %v1660
      %1686 = vmatprep.subr.mxu0 0.0
      %1687 = vmatpush1.msra.mxu0 %v1661
      %1688 = vmatprep.subr.mxu0 0.0
      %1689 = vmatpush1.msra.mxu0 %v1662
      %1690 = vmatprep.subr.mxu0 0.0
      %1691 = vmatpush1.msra.mxu0 %v1663
      %1692 = vmatprep.subr.mxu0 0.0
      %1693 = vmatpush1.msra.mxu0 %v1664
      %1694 = vmatprep.subr.mxu0 0.0
      %1695 = vmatpush1.msra.mxu0 %v1665
      %1696 = vmatprep.subr.mxu0 0.0
      %1697 = vmatpush1.msra.mxu0 %v1666
      %1698 = vmatprep.subr.mxu0 0.0
      %1699 = vmatpush1.msra.mxu0 %v1667
      %1700 = vmatprep.subr.mxu0 0.0
      %1701 = vmatpush1.msra.mxu0 0.0
      %1702 = vmatprep.subr.mxu0 0.0
      %1703 = vmatpush1.msra.mxu0 0.0
      %1704 = vmatprep.subr.mxu0 0.0
      %1705 = vmatpush1.msra.mxu0 0.0
      %1706 = vmatprep.subr.mxu0 0.0
      %1707 = vmatpush1.msra.mxu0 0.0
      %1708 = vmatprep.subr.mxu0 0.0
      %1709 = vmatpush1.msra.mxu0 0.0
      %1710 = vmatprep.subr.mxu0 0.0
      %1711 = vmatpush1.msra.mxu0 0.0
      %1712 = vmatprep.subr.mxu0 0.0
      %1713 = vmatpush1.msra.mxu0 0.0
      %1714 = vmatprep.subr.mxu0 0.0
      %1715 = vmatpush1.msra.mxu0 0.0
      %1716 = vmatprep.subr.mxu0 0.0
      %1717 = vmatpush1.msra.mxu0 0.0
      %1718 = vmatprep.subr.mxu0 0.0
      %1719 = vmatpush1.msra.mxu0 0.0
      %1720 = vmatprep.subr.mxu0 0.0
      %1721 = vmatpush1.msra.mxu0 0.0
      %1722 = vmatprep.subr.mxu0 0.0
      %1723 = vmatpush1.msra.mxu0 0.0
      %1724 = vmatprep.subr.mxu0 0.0
      %1725 = vmatpush1.msra.mxu0 0.0
      %1726 = vmatprep.subr.mxu0 0.0
      %1727 = vmatpush1.msra.mxu0 0.0
      %1728 = vmatprep.subr.mxu0 0.0
      %1729 = vmatpush1.msra.mxu0 0.0
      %1730 = vmatprep.subr.mxu0 0.0
      %1731 = vmatpush1.msra.mxu0 0.0
      %1732 = vmatprep.mubr.f32.mxu0 0.0
      %1733 = vmatmul.mubr.f32.gmra.mrb[0].mxu0 %v1567
      %v1734 = vpop.f32.mrb[0].mxu0
      %v1735 = vadd.f32 0.0, %v1734
      %v1736 = vpop.f32.mrb[0].mxu0
      %1737 = vmatprep.mubr.f32.mxu0 0.0
      %1738 = vmatmul.mubr.f32.gmra.mrb[0].mxu0 %v1574
      %v1739 = vpop.f32.mrb[0].mxu0
      %v1740 = vadd.f32 0.0, %v1739
      %v1741 = vpop.f32.mrb[0].mxu0
      %1742 = vdwg.mxu0
      %v1743 = vmax.f32 %v1644, %v1735
      %v1744 = vmax.f32 %v1649, %v1740
      %1745 = vst [vmem:[#allocation3] sm:$0xff] 0.0
      %1746 = vst [vmem:[#allocation3 + $0x8] sm:$0x3] 0.0
      %v1749 = vcombine.high %v539, %v539
      %v1751 = vunpack.c.l.s4 1983009808
      %v1752 = vunpack.c.0.s8 %v1751
      %v1753 = vlaneseq
      %v1754 = vshrl.u32 %v1753, 7
      %v1755 = vsub.s32 %v1752, %v1754
      %v1756 = vrot.slane %v539, %v1755
      %v1758 = vunpack.c.l.s4 1983009808
      %v1759 = vunpack.c.0.s8 %v1758
      %v1760 = vlaneseq
      %v1761 = vshrl.u32 %v1760, 7
      %v1762 = vsub.s32 %v1759, %v1761
      %v1763 = vrot.slane %v1749, %v1762
      %v1764 = vcombine.high %v1756, %v1756
      %v1765 = vcombine.high %v1763, %v1763
      %v1766 = vcombine.high %v540, %v540
      %v1768 = vunpack.c.l.s4 1983009808
      %v1769 = vunpack.c.0.s8 %v1768
      %v1770 = vlaneseq
      %v1771 = vshrl.u32 %v1770, 7
      %v1772 = vsub.s32 %v1769, %v1771
      %v1773 = vrot.slane %v540, %v1772
      %v1775 = vunpack.c.l.s4 1983009808
      %v1776 = vunpack.c.0.s8 %v1775
      %v1777 = vlaneseq
      %v1778 = vshrl.u32 %v1777, 7
      %v1779 = vsub.s32 %v1776, %v1778
      %v1780 = vrot.slane %v1766, %v1779
      %v1781 = vcombine.high %v1773, %v1773
      %v1782 = vcombine.high %v1780, %v1780
      %v1791 = vrot.slane %v1756, 7
      %v1792 = vrot.slane %v1791, 2
      %v1793 = vrot.slane %v1764, 7
      %v1794 = vrot.slane %v1793, 2
      %v1795 = vrot.slane %v1763, 7
      %v1796 = vrot.slane %v1795, 2
      %v1797 = vrot.slane %v1765, 7
      %v1798 = vrot.slane %v1797, 2
      %v1799 = vrot.slane %v1773, 7
      %v1800 = vrot.slane %v1799, 2
      %v1801 = vrot.slane %v1781, 7
      %v1802 = vrot.slane %v1801, 2
      %v1803 = vrot.slane %v1780, 7
      %v1804 = vrot.slane %v1803, 2
      %v1805 = vrot.slane %v1782, 7
      %v1806 = vrot.slane %v1805, 2
      %v1815 = vmax.f32 %v1756, %v1792
      %v1816 = vmax.f32 %v1764, %v1794
      %v1817 = vmax.f32 %v1763, %v1796
      %v1818 = vmax.f32 %v1765, %v1798
      %v1819 = vmax.f32 %v1773, %v1800
      %v1820 = vmax.f32 %v1781, %v1802
      %v1821 = vmax.f32 %v1780, %v1804
      %v1822 = vmax.f32 %v1782, %v1806
      %v1823 = vld [vmem:[%s14] sm:$0xff]
      %v1824 = vld [vmem:[%s14 + $0x8] sm:$0xff]
      %v1825 = vld [vmem:[%s14 + $0x10] sm:$0xff]
      %v1826 = vld [vmem:[%s14 + $0x18] sm:$0xff]
      %v1827 = vld [vmem:[%s14 + $0x20] sm:$0xff]
      %v1828 = vld [vmem:[%s14 + $0x28] sm:$0xff]
      %v1829 = vld [vmem:[%s14 + $0x30] sm:$0xff]
      %v1830 = vld [vmem:[%s14 + $0x38] sm:$0xff]
      %v1839 = vlaneseq
      %v1840 = vshrl.u32 %v1839, 7
      %v1841 = vsub.s32 0, %v1840
      %v1842 = vrot.slane %v1815, %v1841
      %v1843 = vlaneseq
      %v1844 = vshrl.u32 %v1843, 7
      %v1845 = vsub.s32 0, %v1844
      %v1846 = vrot.slane %v1816, %v1845
      %v1847 = vlaneseq
      %v1848 = vshrl.u32 %v1847, 7
      %v1849 = vsub.s32 0, %v1848
      %v1850 = vrot.slane %v1817, %v1849
      %v1851 = vlaneseq
      %v1852 = vshrl.u32 %v1851, 7
      %v1853 = vsub.s32 0, %v1852
      %v1854 = vrot.slane %v1818, %v1853
      %v1855 = vlaneseq
      %v1856 = vshrl.u32 %v1855, 7
      %v1857 = vsub.s32 0, %v1856
      %v1858 = vrot.slane %v1819, %v1857
      %v1859 = vlaneseq
      %v1860 = vshrl.u32 %v1859, 7
      %v1861 = vsub.s32 0, %v1860
      %v1862 = vrot.slane %v1820, %v1861
      %v1863 = vlaneseq
      %v1864 = vshrl.u32 %v1863, 7
      %v1865 = vsub.s32 0, %v1864
      %v1866 = vrot.slane %v1821, %v1865
      %v1867 = vlaneseq
      %v1868 = vshrl.u32 %v1867, 7
      %v1869 = vsub.s32 0, %v1868
      %v1870 = vrot.slane %v1822, %v1869
      %v1871 = vsel %vm1554, %v1846, %v1842
      %v1872 = vsel %vm1556, %v1850, %v1871
      %v1873 = vsel %vm1558, %v1854, %v1872
      %v1874 = vsel %vm1560, %v1858, %v1873
      %v1875 = vsel %vm1562, %v1862, %v1874
      %v1876 = vsel %vm1564, %v1866, %v1875
      %v1877 = vsel %vm1566, %v1870, %v1876
      %v1878 = vsel %vm651, %v1877, 0
      %1880 = vmatprep.subr.mxu0 0.0
      %1881 = vmatpush1.msra.mxu0 %v1823
      %1882 = vmatprep.subr.mxu0 0.0
      %1883 = vmatpush1.msra.mxu0 %v1824
      %1884 = vmatprep.subr.mxu0 0.0
      %1885 = vmatpush1.msra.mxu0 %v1825
      %1886 = vmatprep.subr.mxu0 0.0
      %1887 = vmatpush1.msra.mxu0 %v1826
      %1888 = vmatprep.subr.mxu0 0.0
      %1889 = vmatpush1.msra.mxu0 %v1827
      %1890 = vmatprep.subr.mxu0 0.0
      %1891 = vmatpush1.msra.mxu0 %v1828
      %1892 = vmatprep.subr.mxu0 0.0
      %1893 = vmatpush1.msra.mxu0 %v1829
      %1894 = vmatprep.subr.mxu0 0.0
      %1895 = vmatpush1.msra.mxu0 %v1830
      %1896 = vmatprep.subr.mxu0 0.0
      %1897 = vmatpush1.msra.mxu0 0.0
      %1898 = vmatprep.subr.mxu0 0.0
      %1899 = vmatpush1.msra.mxu0 0.0
      %1900 = vmatprep.subr.mxu0 0.0
      %1901 = vmatpush1.msra.mxu0 0.0
      %1902 = vmatprep.subr.mxu0 0.0
      %1903 = vmatpush1.msra.mxu0 0.0
      %1904 = vmatprep.subr.mxu0 0.0
      %1905 = vmatpush1.msra.mxu0 0.0
      %1906 = vmatprep.subr.mxu0 0.0
      %1907 = vmatpush1.msra.mxu0 0.0
      %1908 = vmatprep.subr.mxu0 0.0
      %1909 = vmatpush1.msra.mxu0 0.0
      %1910 = vmatprep.subr.mxu0 0.0
      %1911 = vmatpush1.msra.mxu0 0.0
      %1912 = vmatprep.subr.mxu0 0.0
      %1913 = vmatpush1.msra.mxu0 0.0
      %1914 = vmatprep.subr.mxu0 0.0
      %1915 = vmatpush1.msra.mxu0 0.0
      %1916 = vmatprep.subr.mxu0 0.0
      %1917 = vmatpush1.msra.mxu0 0.0
      %1918 = vmatprep.subr.mxu0 0.0
      %1919 = vmatpush1.msra.mxu0 0.0
      %1920 = vmatprep.subr.mxu0 0.0
      %1921 = vmatpush1.msra.mxu0 0.0
      %1922 = vmatprep.subr.mxu0 0.0
      %1923 = vmatpush1.msra.mxu0 0.0
      %1924 = vmatprep.subr.mxu0 0.0
      %1925 = vmatpush1.msra.mxu0 0.0
      %1926 = vmatprep.subr.mxu0 0.0
      %1927 = vmatpush1.msra.mxu0 0.0
      %1928 = vmatprep.subr.mxu0 0.0
      %1929 = vmatpush1.msra.mxu0 0.0
      %1930 = vmatprep.subr.mxu0 0.0
      %1931 = vmatpush1.msra.mxu0 0.0
      %1932 = vmatprep.subr.mxu0 0.0
      %1933 = vmatpush1.msra.mxu0 0.0
      %1934 = vmatprep.subr.mxu0 0.0
      %1935 = vmatpush1.msra.mxu0 0.0
      %1936 = vmatprep.subr.mxu0 0.0
      %1937 = vmatpush1.msra.mxu0 0.0
      %1938 = vmatprep.subr.mxu0 0.0
      %1939 = vmatpush1.msra.mxu0 0.0
      %1940 = vmatprep.subr.mxu0 0.0
      %1941 = vmatpush1.msra.mxu0 0.0
      %1942 = vmatprep.subr.mxu0 0.0
      %1943 = vmatpush1.msra.mxu0 0.0
      %1944 = vmatprep.mubr.f32.mxu0 0.0
      %1945 = vmatmul.mubr.f32.gmra.mrb[0].mxu0 %v1878
      %v1946 = vpop.f32.mrb[0].mxu0
      %v1947 = vadd.f32 0.0, %v1946
      %v1948 = vpop.f32.mrb[0].mxu0
      %1949 = vdwg.mxu0
      %v1950 = vld [vmem:[%s15] sm:$0xff]
      %v1951 = vld [vmem:[%s15 + $0x8] sm:$0xff]
      %v1952 = vld [vmem:[%s15 + $0x10] sm:$0xff]
      %v1953 = vld [vmem:[%s15 + $0x18] sm:$0xff]
      %v1954 = vld [vmem:[%s15 + $0x20] sm:$0xff]
      %v1955 = vld [vmem:[%s15 + $0x28] sm:$0xff]
      %v1956 = vld [vmem:[%s15 + $0x30] sm:$0xff]
      %v1957 = vld [vmem:[%s15 + $0x38] sm:$0xff]
      %1958 = vmatprep.subr.mxu0 0.0
      %1959 = vmatpush1.msra.mxu0 %v1950
      %1960 = vmatprep.subr.mxu0 0.0
      %1961 = vmatpush1.msra.mxu0 %v1951
      %1962 = vmatprep.subr.mxu0 0.0
      %1963 = vmatpush1.msra.mxu0 %v1952
      %1964 = vmatprep.subr.mxu0 0.0
      %1965 = vmatpush1.msra.mxu0 %v1953
      %1966 = vmatprep.subr.mxu0 0.0
      %1967 = vmatpush1.msra.mxu0 %v1954
      %1968 = vmatprep.subr.mxu0 0.0
      %1969 = vmatpush1.msra.mxu0 %v1955
      %1970 = vmatprep.subr.mxu0 0.0
      %1971 = vmatpush1.msra.mxu0 %v1956
      %1972 = vmatprep.subr.mxu0 0.0
      %1973 = vmatpush1.msra.mxu0 %v1957
      %1974 = vmatprep.subr.mxu0 0.0
      %1975 = vmatpush1.msra.mxu0 0.0
      %1976 = vmatprep.subr.mxu0 0.0
      %1977 = vmatpush1.msra.mxu0 0.0
      %1978 = vmatprep.subr.mxu0 0.0
      %1979 = vmatpush1.msra.mxu0 0.0
      %1980 = vmatprep.subr.mxu0 0.0
      %1981 = vmatpush1.msra.mxu0 0.0
      %1982 = vmatprep.subr.mxu0 0.0
      %1983 = vmatpush1.msra.mxu0 0.0
      %1984 = vmatprep.subr.mxu0 0.0
      %1985 = vmatpush1.msra.mxu0 0.0
      %1986 = vmatprep.subr.mxu0 0.0
      %1987 = vmatpush1.msra.mxu0 0.0
      %1988 = vmatprep.subr.mxu0 0.0
      %1989 = vmatpush1.msra.mxu0 0.0
      %1990 = vmatprep.subr.mxu0 0.0
      %1991 = vmatpush1.msra.mxu0 0.0
      %1992 = vmatprep.subr.mxu0 0.0
      %1993 = vmatpush1.msra.mxu0 0.0
      %1994 = vmatprep.subr.mxu0 0.0
      %1995 = vmatpush1.msra.mxu0 0.0
      %1996 = vmatprep.subr.mxu0 0.0
      %1997 = vmatpush1.msra.mxu0 0.0
      %1998 = vmatprep.subr.mxu0 0.0
      %1999 = vmatpush1.msra.mxu0 0.0
      %2000 = vmatprep.subr.mxu0 0.0
      %2001 = vmatpush1.msra.mxu0 0.0
      %2002 = vmatprep.subr.mxu0 0.0
      %2003 = vmatpush1.msra.mxu0 0.0
      %2004 = vmatprep.subr.mxu0 0.0
      %2005 = vmatpush1.msra.mxu0 0.0
      %2006 = vmatprep.subr.mxu0 0.0
      %2007 = vmatpush1.msra.mxu0 0.0
      %2008 = vmatprep.subr.mxu0 0.0
      %2009 = vmatpush1.msra.mxu0 0.0
      %2010 = vmatprep.subr.mxu0 0.0
      %2011 = vmatpush1.msra.mxu0 0.0
      %2012 = vmatprep.subr.mxu0 0.0
      %2013 = vmatpush1.msra.mxu0 0.0
      %2014 = vmatprep.subr.mxu0 0.0
      %2015 = vmatpush1.msra.mxu0 0.0
      %2016 = vmatprep.subr.mxu0 0.0
      %2017 = vmatpush1.msra.mxu0 0.0
      %2018 = vmatprep.subr.mxu0 0.0
      %2019 = vmatpush1.msra.mxu0 0.0
      %2020 = vmatprep.subr.mxu0 0.0
      %2021 = vmatpush1.msra.mxu0 0.0
      %2022 = vmatprep.mubr.f32.mxu0 0.0
      %2023 = vmatmul.mubr.f32.gmra.mrb[0].mxu0 %v1878
      %v2024 = vpop.f32.mrb[0].mxu0
      %v2025 = vadd.f32 0.0, %v2024
      %v2026 = vpop.f32.mrb[0].mxu0
      %2027 = vdwg.mxu0
      %v2028 = vmax.f32 %v1947, %v2025
      %vm2029 = vcmask 261120
      %2030 = vst.msk [vmem:[#allocation3 + $0x1] sm:$0xff] %vm2029, %v2028
      %v2033 = vcombine.high %v1743, %v1743
      %v2035 = vunpack.c.l.s4 1983009808
      %v2036 = vunpack.c.0.s8 %v2035
      %v2037 = vlaneseq
      %v2038 = vshrl.u32 %v2037, 7
      %v2039 = vsub.s32 %v2036, %v2038
      %v2040 = vrot.slane %v1743, %v2039
      %v2042 = vunpack.c.l.s4 1983009808
      %v2043 = vunpack.c.0.s8 %v2042
      %v2044 = vlaneseq
      %v2045 = vshrl.u32 %v2044, 7
      %v2046 = vsub.s32 %v2043, %v2045
      %v2047 = vrot.slane %v2033, %v2046
      %v2048 = vcombine.high %v2040, %v2040
      %v2049 = vcombine.high %v2047, %v2047
      %v2050 = vcombine.high %v1744, %v1744
      %v2052 = vunpack.c.l.s4 1983009808
      %v2053 = vunpack.c.0.s8 %v2052
      %v2054 = vlaneseq
      %v2055 = vshrl.u32 %v2054, 7
      %v2056 = vsub.s32 %v2053, %v2055
      %v2057 = vrot.slane %v1744, %v2056
      %v2059 = vunpack.c.l.s4 1983009808
      %v2060 = vunpack.c.0.s8 %v2059
      %v2061 = vlaneseq
      %v2062 = vshrl.u32 %v2061, 7
      %v2063 = vsub.s32 %v2060, %v2062
      %v2064 = vrot.slane %v2050, %v2063
      %v2065 = vcombine.high %v2057, %v2057
      %v2066 = vcombine.high %v2064, %v2064
      %v2075 = vrot.slane %v2040, 7
      %v2076 = vrot.slane %v2075, 2
      %v2077 = vrot.slane %v2048, 7
      %v2078 = vrot.slane %v2077, 2
      %v2079 = vrot.slane %v2047, 7
      %v2080 = vrot.slane %v2079, 2
      %v2081 = vrot.slane %v2049, 7
      %v2082 = vrot.slane %v2081, 2
      %v2083 = vrot.slane %v2057, 7
      %v2084 = vrot.slane %v2083, 2
      %v2085 = vrot.slane %v2065, 7
      %v2086 = vrot.slane %v2085, 2
      %v2087 = vrot.slane %v2064, 7
      %v2088 = vrot.slane %v2087, 2
      %v2089 = vrot.slane %v2066, 7
      %v2090 = vrot.slane %v2089, 2
      %v2099 = vmax.f32 %v2040, %v2076
      %v2100 = vmax.f32 %v2048, %v2078
      %v2101 = vmax.f32 %v2047, %v2080
      %v2102 = vmax.f32 %v2049, %v2082
      %v2103 = vmax.f32 %v2057, %v2084
      %v2104 = vmax.f32 %v2065, %v2086
      %v2105 = vmax.f32 %v2064, %v2088
      %v2106 = vmax.f32 %v2066, %v2090
      %v2107 = vld [vmem:[%s14] sm:$0xff]
      %v2108 = vld [vmem:[%s14 + $0x8] sm:$0xff]
      %v2109 = vld [vmem:[%s14 + $0x10] sm:$0xff]
      %v2110 = vld [vmem:[%s14 + $0x18] sm:$0xff]
      %v2111 = vld [vmem:[%s14 + $0x20] sm:$0xff]
      %v2112 = vld [vmem:[%s14 + $0x28] sm:$0xff]
      %v2113 = vld [vmem:[%s14 + $0x30] sm:$0xff]
      %v2114 = vld [vmem:[%s14 + $0x38] sm:$0xff]
      %v2123 = vlaneseq
      %v2124 = vshrl.u32 %v2123, 7
      %v2125 = vsub.s32 0, %v2124
      %v2126 = vrot.slane %v2099, %v2125
      %v2127 = vlaneseq
      %v2128 = vshrl.u32 %v2127, 7
      %v2129 = vsub.s32 0, %v2128
      %v2130 = vrot.slane %v2100, %v2129
      %v2131 = vlaneseq
      %v2132 = vshrl.u32 %v2131, 7
      %v2133 = vsub.s32 0, %v2132
      %v2134 = vrot.slane %v2101, %v2133
      %v2135 = vlaneseq
      %v2136 = vshrl.u32 %v2135, 7
      %v2137 = vsub.s32 0, %v2136
      %v2138 = vrot.slane %v2102, %v2137
      %v2139 = vlaneseq
      %v2140 = vshrl.u32 %v2139, 7
      %v2141 = vsub.s32 0, %v2140
      %v2142 = vrot.slane %v2103, %v2141
      %v2143 = vlaneseq
      %v2144 = vshrl.u32 %v2143, 7
      %v2145 = vsub.s32 0, %v2144
      %v2146 = vrot.slane %v2104, %v2145
      %v2147 = vlaneseq
      %v2148 = vshrl.u32 %v2147, 7
      %v2149 = vsub.s32 0, %v2148
      %v2150 = vrot.slane %v2105, %v2149
      %v2151 = vlaneseq
      %v2152 = vshrl.u32 %v2151, 7
      %v2153 = vsub.s32 0, %v2152
      %v2154 = vrot.slane %v2106, %v2153
      %v2155 = vsel %vm1554, %v2130, %v2126
      %v2156 = vsel %vm1556, %v2134, %v2155
      %v2157 = vsel %vm1558, %v2138, %v2156
      %v2158 = vsel %vm1560, %v2142, %v2157
      %v2159 = vsel %vm1562, %v2146, %v2158
      %v2160 = vsel %vm1564, %v2150, %v2159
      %v2161 = vsel %vm1566, %v2154, %v2160
      %v2162 = vsel %vm651, %v2161, 0
      %2164 = vmatprep.subr.mxu0 0.0
      %2165 = vmatpush1.msra.mxu0 %v2107
      %2166 = vmatprep.subr.mxu0 0.0
      %2167 = vmatpush1.msra.mxu0 %v2108
      %2168 = vmatprep.subr.mxu0 0.0
      %2169 = vmatpush1.msra.mxu0 %v2109
      %2170 = vmatprep.subr.mxu0 0.0
      %2171 = vmatpush1.msra.mxu0 %v2110
      %2172 = vmatprep.subr.mxu0 0.0
      %2173 = vmatpush1.msra.mxu0 %v2111
      %2174 = vmatprep.subr.mxu0 0.0
      %2175 = vmatpush1.msra.mxu0 %v2112
      %2176 = vmatprep.subr.mxu0 0.0
      %2177 = vmatpush1.msra.mxu0 %v2113
      %2178 = vmatprep.subr.mxu0 0.0
      %2179 = vmatpush1.msra.mxu0 %v2114
      %2180 = vmatprep.subr.mxu0 0.0
      %2181 = vmatpush1.msra.mxu0 0.0
      %2182 = vmatprep.subr.mxu0 0.0
      %2183 = vmatpush1.msra.mxu0 0.0
      %2184 = vmatprep.subr.mxu0 0.0
      %2185 = vmatpush1.msra.mxu0 0.0
      %2186 = vmatprep.subr.mxu0 0.0
      %2187 = vmatpush1.msra.mxu0 0.0
      %2188 = vmatprep.subr.mxu0 0.0
      %2189 = vmatpush1.msra.mxu0 0.0
      %2190 = vmatprep.subr.mxu0 0.0
      %2191 = vmatpush1.msra.mxu0 0.0
      %2192 = vmatprep.subr.mxu0 0.0
      %2193 = vmatpush1.msra.mxu0 0.0
      %2194 = vmatprep.subr.mxu0 0.0
      %2195 = vmatpush1.msra.mxu0 0.0
      %2196 = vmatprep.subr.mxu0 0.0
      %2197 = vmatpush1.msra.mxu0 0.0
      %2198 = vmatprep.subr.mxu0 0.0
      %2199 = vmatpush1.msra.mxu0 0.0
      %2200 = vmatprep.subr.mxu0 0.0
      %2201 = vmatpush1.msra.mxu0 0.0
      %2202 = vmatprep.subr.mxu0 0.0
      %2203 = vmatpush1.msra.mxu0 0.0
      %2204 = vmatprep.subr.mxu0 0.0
      %2205 = vmatpush1.msra.mxu0 0.0
      %2206 = vmatprep.subr.mxu0 0.0
      %2207 = vmatpush1.msra.mxu0 0.0
      %2208 = vmatprep.subr.mxu0 0.0
      %2209 = vmatpush1.msra.mxu0 0.0
      %2210 = vmatprep.subr.mxu0 0.0
      %2211 = vmatpush1.msra.mxu0 0.0
      %2212 = vmatprep.subr.mxu0 0.0
      %2213 = vmatpush1.msra.mxu0 0.0
      %2214 = vmatprep.subr.mxu0 0.0
      %2215 = vmatpush1.msra.mxu0 0.0
      %2216 = vmatprep.subr.mxu0 0.0
      %2217 = vmatpush1.msra.mxu0 0.0
      %2218 = vmatprep.subr.mxu0 0.0
      %2219 = vmatpush1.msra.mxu0 0.0
      %2220 = vmatprep.subr.mxu0 0.0
      %2221 = vmatpush1.msra.mxu0 0.0
      %2222 = vmatprep.subr.mxu0 0.0
      %2223 = vmatpush1.msra.mxu0 0.0
      %2224 = vmatprep.subr.mxu0 0.0
      %2225 = vmatpush1.msra.mxu0 0.0
      %2226 = vmatprep.subr.mxu0 0.0
      %2227 = vmatpush1.msra.mxu0 0.0
      %2228 = vmatprep.mubr.f32.mxu0 0.0
      %2229 = vmatmul.mubr.f32.gmra.mrb[0].mxu0 %v2162
      %v2230 = vpop.f32.mrb[0].mxu0
      %v2231 = vadd.f32 0.0, %v2230
      %v2232 = vpop.f32.mrb[0].mxu0
      %2233 = vdwg.mxu0
      %v2234 = vld [vmem:[%s15] sm:$0xff]
      %v2235 = vld [vmem:[%s15 + $0x8] sm:$0xff]
      %v2236 = vld [vmem:[%s15 + $0x10] sm:$0xff]
      %v2237 = vld [vmem:[%s15 + $0x18] sm:$0xff]
      %v2238 = vld [vmem:[%s15 + $0x20] sm:$0xff]
      %v2239 = vld [vmem:[%s15 + $0x28] sm:$0xff]
      %v2240 = vld [vmem:[%s15 + $0x30] sm:$0xff]
      %v2241 = vld [vmem:[%s15 + $0x38] sm:$0xff]
      %2242 = vmatprep.subr.mxu0 0.0
      %2243 = vmatpush1.msra.mxu0 %v2234
      %2244 = vmatprep.subr.mxu0 0.0
      %2245 = vmatpush1.msra.mxu0 %v2235
      %2246 = vmatprep.subr.mxu0 0.0
      %2247 = vmatpush1.msra.mxu0 %v2236
      %2248 = vmatprep.subr.mxu0 0.0
      %2249 = vmatpush1.msra.mxu0 %v2237
      %2250 = vmatprep.subr.mxu0 0.0
      %2251 = vmatpush1.msra.mxu0 %v2238
      %2252 = vmatprep.subr.mxu0 0.0
      %2253 = vmatpush1.msra.mxu0 %v2239
      %2254 = vmatprep.subr.mxu0 0.0
      %2255 = vmatpush1.msra.mxu0 %v2240
      %2256 = vmatprep.subr.mxu0 0.0
      %2257 = vmatpush1.msra.mxu0 %v2241
      %2258 = vmatprep.subr.mxu0 0.0
      %2259 = vmatpush1.msra.mxu0 0.0
      %2260 = vmatprep.subr.mxu0 0.0
      %2261 = vmatpush1.msra.mxu0 0.0
      %2262 = vmatprep.subr.mxu0 0.0
      %2263 = vmatpush1.msra.mxu0 0.0
      %2264 = vmatprep.subr.mxu0 0.0
      %2265 = vmatpush1.msra.mxu0 0.0
      %2266 = vmatprep.subr.mxu0 0.0
      %2267 = vmatpush1.msra.mxu0 0.0
      %2268 = vmatprep.subr.mxu0 0.0
      %2269 = vmatpush1.msra.mxu0 0.0
      %2270 = vmatprep.subr.mxu0 0.0
      %2271 = vmatpush1.msra.mxu0 0.0
      %2272 = vmatprep.subr.mxu0 0.0
      %2273 = vmatpush1.msra.mxu0 0.0
      %2274 = vmatprep.subr.mxu0 0.0
      %2275 = vmatpush1.msra.mxu0 0.0
      %2276 = vmatprep.subr.mxu0 0.0
      %2277 = vmatpush1.msra.mxu0 0.0
      %2278 = vmatprep.subr.mxu0 0.0
      %2279 = vmatpush1.msra.mxu0 0.0
      %2280 = vmatprep.subr.mxu0 0.0
      %2281 = vmatpush1.msra.mxu0 0.0
      %2282 = vmatprep.subr.mxu0 0.0
      %2283 = vmatpush1.msra.mxu0 0.0
      %2284 = vmatprep.subr.mxu0 0.0
      %2285 = vmatpush1.msra.mxu0 0.0
      %2286 = vmatprep.subr.mxu0 0.0
      %2287 = vmatpush1.msra.mxu0 0.0
      %2288 = vmatprep.subr.mxu0 0.0
      %2289 = vmatpush1.msra.mxu0 0.0
      %2290 = vmatprep.subr.mxu0 0.0
      %2291 = vmatpush1.msra.mxu0 0.0
      %2292 = vmatprep.subr.mxu0 0.0
      %2293 = vmatpush1.msra.mxu0 0.0
      %2294 = vmatprep.subr.mxu0 0.0
      %2295 = vmatpush1.msra.mxu0 0.0
      %2296 = vmatprep.subr.mxu0 0.0
      %2297 = vmatpush1.msra.mxu0 0.0
      %2298 = vmatprep.subr.mxu0 0.0
      %2299 = vmatpush1.msra.mxu0 0.0
      %2300 = vmatprep.subr.mxu0 0.0
      %2301 = vmatpush1.msra.mxu0 0.0
      %2302 = vmatprep.subr.mxu0 0.0
      %2303 = vmatpush1.msra.mxu0 0.0
      %2304 = vmatprep.subr.mxu0 0.0
      %2305 = vmatpush1.msra.mxu0 0.0
      %2306 = vmatprep.mubr.f32.mxu0 0.0
      %2307 = vmatmul.mubr.f32.gmra.mrb[0].mxu0 %v2162
      %v2308 = vpop.f32.mrb[0].mxu0
      %v2309 = vadd.f32 0.0, %v2308
      %v2310 = vpop.f32.mrb[0].mxu0
      %2311 = vdwg.mxu0
      %v2312 = vmax.f32 %v2231, %v2309
      %2314 = vrot.lane.b32.xlu0 %v2312, 32
      %v2315 = vpop.permute.xlu0 %2314
      %vm2317 = vcmask 523520
      %2318 = vst.msk [vmem:[#allocation3 + $0x1] sm:$0xff] %vm2317, %v2315
      %v2319 = vld [vmem:[%s533] sm:$0xff]
      %2321 = vrot.lane.b32.xlu0 %v2319, 64
      %v2322 = vpop.permute.xlu0 %2321
      %vm2324 = vcmask 1048064
      %2325 = vst.msk [vmem:[#allocation3 + $0x1] sm:$0xff] %vm2324, %v2322
      %v2326 = vld [vmem:[#allocation3] sm:$0xff]
      %v2327 = vld [vmem:[%s8] sm:$0xff]
      %v2328 = vld [vmem:[%s8 + $0x8] sm:$0xff]
      %v2329 = vld [vmem:[%s8 + $0x10] sm:$0xff]
      %v2330 = vld [vmem:[%s8 + $0x18] sm:$0xff]
      %v2331 = vld [vmem:[%s8 + $0x20] sm:$0xff]
      %v2332 = vld [vmem:[%s8 + $0x28] sm:$0xff]
      %v2333 = vld [vmem:[%s8 + $0x30] sm:$0xff]
      %v2334 = vld [vmem:[%s8 + $0x38] sm:$0xff]
      %v2335 = vld [vmem:[%s8 + $0x40] sm:$0xff]
      %v2336 = vld [vmem:[%s8 + $0x48] sm:$0xff]
      %v2337 = vld [vmem:[%s8 + $0x50] sm:$0xff]
      %v2338 = vld [vmem:[%s8 + $0x58] sm:$0xff]
      %v2339 = vld [vmem:[%s8 + $0x60] sm:$0xff]
      %v2340 = vld [vmem:[%s8 + $0x68] sm:$0xff]
      %v2341 = vld [vmem:[%s8 + $0x70] sm:$0xff]
      %v2342 = vld [vmem:[%s8 + $0x78] sm:$0xff]
      %v2343 = vld [vmem:[#allocation3 + $0x1] sm:$0xff]
      %v2344 = vld [vmem:[%s8 + $0x80] sm:$0xff]
      %v2345 = vld [vmem:[%s8 + $0x88] sm:$0xff]
      %v2346 = vld [vmem:[%s8 + $0x90] sm:$0xff]
      %v2347 = vld [vmem:[%s8 + $0x98] sm:$0xff]
      %v2348 = vld [vmem:[%s8 + $0xa0] sm:$0xff]
      %v2349 = vld [vmem:[%s8 + $0xa8] sm:$0xff]
      %v2350 = vld [vmem:[%s8 + $0xb0] sm:$0xff]
      %v2351 = vld [vmem:[%s8 + $0xb8] sm:$0xff]
      %v2352 = vld [vmem:[%s8 + $0xc0] sm:$0xff]
      %v2353 = vld [vmem:[%s8 + $0xc8] sm:$0xff]
      %v2354 = vld [vmem:[%s8 + $0xd0] sm:$0xff]
      %v2355 = vld [vmem:[%s8 + $0xd8] sm:$0xff]
      %v2356 = vld [vmem:[%s8 + $0xe0] sm:$0xff]
      %v2357 = vld [vmem:[%s8 + $0xe8] sm:$0xff]
      %v2358 = vld [vmem:[%s8 + $0xf0] sm:$0xff]
      %v2359 = vld [vmem:[%s8 + $0xf8] sm:$0xff]
      %2360 = vmatprep.subr.mxu0 0.0
      %2361 = vmatpush1.msra.mxu0 %v2344
      %2362 = vmatprep.subr.mxu0 0.0
      %2363 = vmatpush1.msra.mxu0 %v2345
      %2364 = vmatprep.subr.mxu0 0.0
      %2365 = vmatpush1.msra.mxu0 %v2346
      %2366 = vmatprep.subr.mxu0 0.0
      %2367 = vmatpush1.msra.mxu0 %v2347
      %2368 = vmatprep.subr.mxu0 0.0
      %2369 = vmatpush1.msra.mxu0 %v2348
      %2370 = vmatprep.subr.mxu0 0.0
      %2371 = vmatpush1.msra.mxu0 %v2349
      %2372 = vmatprep.subr.mxu0 0.0
      %2373 = vmatpush1.msra.mxu0 %v2350
      %2374 = vmatprep.subr.mxu0 0.0
      %2375 = vmatpush1.msra.mxu0 %v2351
      %2376 = vmatprep.subr.mxu0 0.0
      %2377 = vmatpush1.msra.mxu0 %v2352
      %2378 = vmatprep.subr.mxu0 0.0
      %2379 = vmatpush1.msra.mxu0 %v2353
      %2380 = vmatprep.subr.mxu0 0.0
      %2381 = vmatpush1.msra.mxu0 %v2354
      %2382 = vmatprep.subr.mxu0 0.0
      %2383 = vmatpush1.msra.mxu0 %v2355
      %2384 = vmatprep.subr.mxu0 0.0
      %2385 = vmatpush1.msra.mxu0 %v2356
      %2386 = vmatprep.subr.mxu0 0.0
      %2387 = vmatpush1.msra.mxu0 %v2357
      %2388 = vmatprep.subr.mxu0 0.0
      %2389 = vmatpush1.msra.mxu0 %v2358
      %2390 = vmatprep.subr.mxu0 0.0
      %2391 = vmatpush1.msra.mxu0 %v2359
      %2392 = vmatprep.subr.mxu0 0.0
      %2393 = vmatpush1.msra.mxu0 0.0
      %2394 = vmatprep.subr.mxu0 0.0
      %2395 = vmatpush1.msra.mxu0 0.0
      %2396 = vmatprep.subr.mxu0 0.0
      %2397 = vmatpush1.msra.mxu0 0.0
      %2398 = vmatprep.subr.mxu0 0.0
      %2399 = vmatpush1.msra.mxu0 0.0
      %2400 = vmatprep.subr.mxu0 0.0
      %2401 = vmatpush1.msra.mxu0 0.0
      %2402 = vmatprep.subr.mxu0 0.0
      %2403 = vmatpush1.msra.mxu0 0.0
      %2404 = vmatprep.subr.mxu0 0.0
      %2405 = vmatpush1.msra.mxu0 0.0
      %2406 = vmatprep.subr.mxu0 0.0
      %2407 = vmatpush1.msra.mxu0 0.0
      %2408 = vmatprep.subr.mxu0 0.0
      %2409 = vmatpush1.msra.mxu0 0.0
      %2410 = vmatprep.subr.mxu0 0.0
      %2411 = vmatpush1.msra.mxu0 0.0
      %2412 = vmatprep.subr.mxu0 0.0
      %2413 = vmatpush1.msra.mxu0 0.0
      %2414 = vmatprep.subr.mxu0 0.0
      %2415 = vmatpush1.msra.mxu0 0.0
      %2416 = vmatprep.subr.mxu0 0.0
      %2417 = vmatpush1.msra.mxu0 0.0
      %2418 = vmatprep.subr.mxu0 0.0
      %2419 = vmatpush1.msra.mxu0 0.0
      %2420 = vmatprep.subr.mxu0 0.0
      %2421 = vmatpush1.msra.mxu0 0.0
      %2422 = vmatprep.subr.mxu0 0.0
      %2423 = vmatpush1.msra.mxu0 0.0
      %2424 = vmatprep.mubr.f32.mxu0 0.0
      %2425 = vmatmul.mubr.f32.gmra.mrb[0].mxu0 %v2343
      %v2426 = vpop.f32.mrb[0].mxu0
      %v2427 = vadd.f32 0.0, %v2426
      %v2428 = vpop.f32.mrb[0].mxu0
      %2429 = vdwg.mxu0
      %v2430 = vld [vmem:[#allocation3 + $0x2] sm:$0xff]
      %v2431 = vld [vmem:[%s8 + $0x100] sm:$0xff]
      %v2432 = vld [vmem:[%s8 + $0x108] sm:$0xff]
      %v2433 = vld [vmem:[%s8 + $0x110] sm:$0xff]
      %v2434 = vld [vmem:[%s8 + $0x118] sm:$0xff]
      %v2435 = vld [vmem:[%s8 + $0x120] sm:$0xff]
      %v2436 = vld [vmem:[%s8 + $0x128] sm:$0xff]
      %v2437 = vld [vmem:[%s8 + $0x130] sm:$0xff]
      %v2438 = vld [vmem:[%s8 + $0x138] sm:$0xff]
      %v2439 = vld [vmem:[%s8 + $0x140] sm:$0xff]
      %v2440 = vld [vmem:[%s8 + $0x148] sm:$0xff]
      %v2441 = vld [vmem:[%s8 + $0x150] sm:$0xff]
      %v2442 = vld [vmem:[%s8 + $0x158] sm:$0xff]
      %v2443 = vld [vmem:[%s8 + $0x160] sm:$0xff]
      %v2444 = vld [vmem:[%s8 + $0x168] sm:$0xff]
      %v2445 = vld [vmem:[%s8 + $0x170] sm:$0xff]
      %v2446 = vld [vmem:[%s8 + $0x178] sm:$0xff]
      %2447 = vmatprep.subr.mxu0 0.0
      %2448 = vmatpush1.msra.mxu0 %v2431
      %2449 = vmatprep.subr.mxu0 0.0
      %2450 = vmatpush1.msra.mxu0 %v2432
      %2451 = vmatprep.subr.mxu0 0.0
      %2452 = vmatpush1.msra.mxu0 %v2433
      %2453 = vmatprep.subr.mxu0 0.0
      %2454 = vmatpush1.msra.mxu0 %v2434
      %2455 = vmatprep.subr.mxu0 0.0
      %2456 = vmatpush1.msra.mxu0 %v2435
      %2457 = vmatprep.subr.mxu0 0.0
      %2458 = vmatpush1.msra.mxu0 %v2436
      %2459 = vmatprep.subr.mxu0 0.0
      %2460 = vmatpush1.msra.mxu0 %v2437
      %2461 = vmatprep.subr.mxu0 0.0
      %2462 = vmatpush1.msra.mxu0 %v2438
      %2463 = vmatprep.subr.mxu0 0.0
      %2464 = vmatpush1.msra.mxu0 %v2439
      %2465 = vmatprep.subr.mxu0 0.0
      %2466 = vmatpush1.msra.mxu0 %v2440
      %2467 = vmatprep.subr.mxu0 0.0
      %2468 = vmatpush1.msra.mxu0 %v2441
      %2469 = vmatprep.subr.mxu0 0.0
      %2470 = vmatpush1.msra.mxu0 %v2442
      %2471 = vmatprep.subr.mxu0 0.0
      %2472 = vmatpush1.msra.mxu0 %v2443
      %2473 = vmatprep.subr.mxu0 0.0
      %2474 = vmatpush1.msra.mxu0 %v2444
      %2475 = vmatprep.subr.mxu0 0.0
      %2476 = vmatpush1.msra.mxu0 %v2445
      %2477 = vmatprep.subr.mxu0 0.0
      %2478 = vmatpush1.msra.mxu0 %v2446
      %2479 = vmatprep.subr.mxu0 0.0
      %2480 = vmatpush1.msra.mxu0 0.0
      %2481 = vmatprep.subr.mxu0 0.0
      %2482 = vmatpush1.msra.mxu0 0.0
      %2483 = vmatprep.subr.mxu0 0.0
      %2484 = vmatpush1.msra.mxu0 0.0
      %2485 = vmatprep.subr.mxu0 0.0
      %2486 = vmatpush1.msra.mxu0 0.0
      %2487 = vmatprep.subr.mxu0 0.0
      %2488 = vmatpush1.msra.mxu0 0.0
      %2489 = vmatprep.subr.mxu0 0.0
      %2490 = vmatpush1.msra.mxu0 0.0
      %2491 = vmatprep.subr.mxu0 0.0
      %2492 = vmatpush1.msra.mxu0 0.0
      %2493 = vmatprep.subr.mxu0 0.0
      %2494 = vmatpush1.msra.mxu0 0.0
      %2495 = vmatprep.subr.mxu0 0.0
      %2496 = vmatpush1.msra.mxu0 0.0
      %2497 = vmatprep.subr.mxu0 0.0
      %2498 = vmatpush1.msra.mxu0 0.0
      %2499 = vmatprep.subr.mxu0 0.0
      %2500 = vmatpush1.msra.mxu0 0.0
      %2501 = vmatprep.subr.mxu0 0.0
      %2502 = vmatpush1.msra.mxu0 0.0
      %2503 = vmatprep.subr.mxu0 0.0
      %2504 = vmatpush1.msra.mxu0 0.0
      %2505 = vmatprep.subr.mxu0 0.0
      %2506 = vmatpush1.msra.mxu0 0.0
      %2507 = vmatprep.subr.mxu0 0.0
      %2508 = vmatpush1.msra.mxu0 0.0
      %2509 = vmatprep.subr.mxu0 0.0
      %2510 = vmatpush1.msra.mxu0 0.0
      %2511 = vmatprep.mubr.f32.mxu0 0.0
      %2512 = vmatmul.mubr.f32.gmra.mrb[0].mxu0 %v2430
      %v2513 = vpop.f32.mrb[0].mxu0
      %v2514 = vadd.f32 0.0, %v2513
      %v2515 = vpop.f32.mrb[0].mxu0
      %2516 = vdwg.mxu0
      %2517 = vmatprep.subr.mxu0 0.0
      %2518 = vmatpush1.msra.mxu0 %v2327
      %2519 = vmatprep.subr.mxu0 0.0
      %2520 = vmatpush1.msra.mxu0 %v2328
      %2521 = vmatprep.subr.mxu0 0.0
      %2522 = vmatpush1.msra.mxu0 %v2329
      %2523 = vmatprep.subr.mxu0 0.0
      %2524 = vmatpush1.msra.mxu0 %v2330
      %2525 = vmatprep.subr.mxu0 0.0
      %2526 = vmatpush1.msra.mxu0 %v2331
      %2527 = vmatprep.subr.mxu0 0.0
      %2528 = vmatpush1.msra.mxu0 %v2332
      %2529 = vmatprep.subr.mxu0 0.0
      %2530 = vmatpush1.msra.mxu0 %v2333
      %2531 = vmatprep.subr.mxu0 0.0
      %2532 = vmatpush1.msra.mxu0 %v2334
      %2533 = vmatprep.subr.mxu0 0.0
      %2534 = vmatpush1.msra.mxu0 %v2335
      %2535 = vmatprep.subr.mxu0 0.0
      %2536 = vmatpush1.msra.mxu0 %v2336
      %2537 = vmatprep.subr.mxu0 0.0
      %2538 = vmatpush1.msra.mxu0 %v2337
      %2539 = vmatprep.subr.mxu0 0.0
      %2540 = vmatpush1.msra.mxu0 %v2338
      %2541 = vmatprep.subr.mxu0 0.0
      %2542 = vmatpush1.msra.mxu0 %v2339
      %2543 = vmatprep.subr.mxu0 0.0
      %2544 = vmatpush1.msra.mxu0 %v2340
      %2545 = vmatprep.subr.mxu0 0.0
      %2546 = vmatpush1.msra.mxu0 %v2341
      %2547 = vmatprep.subr.mxu0 0.0
      %2548 = vmatpush1.msra.mxu0 %v2342
      %2549 = vmatprep.subr.mxu0 0.0
      %2550 = vmatpush1.msra.mxu0 0.0
      %2551 = vmatprep.subr.mxu0 0.0
      %2552 = vmatpush1.msra.mxu0 0.0
      %2553 = vmatprep.subr.mxu0 0.0
      %2554 = vmatpush1.msra.mxu0 0.0
      %2555 = vmatprep.subr.mxu0 0.0
      %2556 = vmatpush1.msra.mxu0 0.0
      %2557 = vmatprep.subr.mxu0 0.0
      %2558 = vmatpush1.msra.mxu0 0.0
      %2559 = vmatprep.subr.mxu0 0.0
      %2560 = vmatpush1.msra.mxu0 0.0
      %2561 = vmatprep.subr.mxu0 0.0
      %2562 = vmatpush1.msra.mxu0 0.0
      %2563 = vmatprep.subr.mxu0 0.0
      %2564 = vmatpush1.msra.mxu0 0.0
      %2565 = vmatprep.subr.mxu0 0.0
      %2566 = vmatpush1.msra.mxu0 0.0
      %2567 = vmatprep.subr.mxu0 0.0
      %2568 = vmatpush1.msra.mxu0 0.0
      %2569 = vmatprep.subr.mxu0 0.0
      %2570 = vmatpush1.msra.mxu0 0.0
      %2571 = vmatprep.subr.mxu0 0.0
      %2572 = vmatpush1.msra.mxu0 0.0
      %2573 = vmatprep.subr.mxu0 0.0
      %2574 = vmatpush1.msra.mxu0 0.0
      %2575 = vmatprep.subr.mxu0 0.0
      %2576 = vmatpush1.msra.mxu0 0.0
      %2577 = vmatprep.subr.mxu0 0.0
      %2578 = vmatpush1.msra.mxu0 0.0
      %2579 = vmatprep.subr.mxu0 0.0
      %2580 = vmatpush1.msra.mxu0 0.0
      %2581 = vmatprep.mubr.f32.mxu0 0.0
      %2582 = vmatmul.mubr.f32.gmra.mrb[0].mxu0 %v2326
      %v2583 = vpop.f32.mrb[0].mxu0
      %v2584 = vadd.f32 %v2427, %v2583
      %v2585 = vpop.f32.mrb[0].mxu0
      %2586 = vdwg.mxu0
      %v2587 = vadd.f32 %v2584, %v2514
      %v2588 = vld [vmem:[%s9] sm:$0x1]
      %v2590 = vlaneseq
      %v2591 = vshrl.u32 %v2590, 7
      %v2592 = vsub.s32 0, %v2591
      %v2593 = vrot.slane %v2588, %v2592
      %v2595 = vadd.f32 %v2587, %v2593
      %v2596 = vmax.f32 %v2595, 0.0
      %v2597 = vld [vmem:[%s4] sm:$0xff]
      %v2598 = vld [vmem:[%s4 + $0x8] sm:$0xff]
      %vm2599 = vcmask 64512
      %v2601 = vsel %vm2599, %v2597, 0
      %v2604 = vsel %vm2599, %v2598, 0
      %2606 = vmatprep.subr.mxu0 0.0
      %2607 = vmatpush1.msra.mxu0 %v2596
      %2608 = vmatprep.subr.mxu0 0.0
      %2609 = vmatpush1.msra.mxu0 0.0
      %2610 = vmatprep.subr.mxu0 0.0
      %2611 = vmatpush1.msra.mxu0 0.0
      %2612 = vmatprep.subr.mxu0 0.0
      %2613 = vmatpush1.msra.mxu0 0.0
      %2614 = vmatprep.subr.mxu0 0.0
      %2615 = vmatpush1.msra.mxu0 0.0
      %2616 = vmatprep.subr.mxu0 0.0
      %2617 = vmatpush1.msra.mxu0 0.0
      %2618 = vmatprep.subr.mxu0 0.0
      %2619 = vmatpush1.msra.mxu0 0.0
      %2620 = vmatprep.subr.mxu0 0.0
      %2621 = vmatpush1.msra.mxu0 0.0
      %2622 = vmatprep.subr.mxu0 0.0
      %2623 = vmatpush1.msra.mxu0 0.0
      %2624 = vmatprep.subr.mxu0 0.0
      %2625 = vmatpush1.msra.mxu0 0.0
      %2626 = vmatprep.subr.mxu0 0.0
      %2627 = vmatpush1.msra.mxu0 0.0
      %2628 = vmatprep.subr.mxu0 0.0
      %2629 = vmatpush1.msra.mxu0 0.0
      %2630 = vmatprep.subr.mxu0 0.0
      %2631 = vmatpush1.msra.mxu0 0.0
      %2632 = vmatprep.subr.mxu0 0.0
      %2633 = vmatpush1.msra.mxu0 0.0
      %2634 = vmatprep.subr.mxu0 0.0
      %2635 = vmatpush1.msra.mxu0 0.0
      %2636 = vmatprep.subr.mxu0 0.0
      %2637 = vmatpush1.msra.mxu0 0.0
      %2638 = vmatprep.subr.mxu0 0.0
      %2639 = vmatpush1.msra.mxu0 0.0
      %2640 = vmatprep.subr.mxu0 0.0
      %2641 = vmatpush1.msra.mxu0 0.0
      %2642 = vmatprep.subr.mxu0 0.0
      %2643 = vmatpush1.msra.mxu0 0.0
      %2644 = vmatprep.subr.mxu0 0.0
      %2645 = vmatpush1.msra.mxu0 0.0
      %2646 = vmatprep.subr.mxu0 0.0
      %2647 = vmatpush1.msra.mxu0 0.0
      %2648 = vmatprep.subr.mxu0 0.0
      %2649 = vmatpush1.msra.mxu0 0.0
      %2650 = vmatprep.subr.mxu0 0.0
      %2651 = vmatpush1.msra.mxu0 0.0
      %2652 = vmatprep.subr.mxu0 0.0
      %2653 = vmatpush1.msra.mxu0 0.0
      %2654 = vmatprep.subr.mxu0 0.0
      %2655 = vmatpush1.msra.mxu0 0.0
      %2656 = vmatprep.subr.mxu0 0.0
      %2657 = vmatpush1.msra.mxu0 0.0
      %2658 = vmatprep.subr.mxu0 0.0
      %2659 = vmatpush1.msra.mxu0 0.0
      %2660 = vmatprep.subr.mxu0 0.0
      %2661 = vmatpush1.msra.mxu0 0.0
      %2662 = vmatprep.subr.mxu0 0.0
      %2663 = vmatpush1.msra.mxu0 0.0
      %2664 = vmatprep.subr.mxu0 0.0
      %2665 = vmatpush1.msra.mxu0 0.0
      %2666 = vmatprep.subr.mxu0 0.0
      %2667 = vmatpush1.msra.mxu0 0.0
      %2668 = vmatprep.subr.mxu0 0.0
      %2669 = vmatpush1.msra.mxu0 0.0
      %2670 = vmatprep.mubr.f32.mxu0 0.0
      %2671 = vmatmul.mubr.f32.gmra.mrb[0].mxu0 %v2601
      %v2672 = vpop.f32.mrb[0].mxu0
      %v2673 = vadd.f32 0.0, %v2672
      %v2674 = vpop.f32.mrb[0].mxu0
      %2675 = vmatprep.mubr.f32.mxu0 0.0
      %2676 = vmatmul.mubr.f32.gmra.mrb[0].mxu0 %v2604
      %v2677 = vpop.f32.mrb[0].mxu0
      %v2678 = vadd.f32 0.0, %v2677
      %v2679 = vpop.f32.mrb[0].mxu0
      %2680 = vdwg.mxu0
      %v2681 = vld [vmem:[%s5] sm:$0xff]
      %v2682 = vld [vmem:[%s5 + $0x8] sm:$0xff]
      %v2683 = vld [vmem:[%s5 + $0x10] sm:$0xff]
      %v2684 = vld [vmem:[%s5 + $0x18] sm:$0xff]
      %v2686 = vsel %vm2029, %v2673, 0
      %v2689 = vsel %vm2029, %v2678, 0
      %2691 = vmatprep.subr.mxu0 0.0
      %2692 = vmatpush1.msra.mxu0 %v2681
      %2693 = vmatprep.subr.mxu0 0.0
      %2694 = vmatpush1.msra.mxu0 %v2682
      %2695 = vmatprep.subr.mxu0 0.0
      %2696 = vmatpush1.msra.mxu0 %v2683
      %2697 = vmatprep.subr.mxu0 0.0
      %2698 = vmatpush1.msra.mxu0 %v2684
      %2699 = vmatprep.subr.mxu0 0.0
      %2700 = vmatpush1.msra.mxu0 0.0
      %2701 = vmatprep.subr.mxu0 0.0
      %2702 = vmatpush1.msra.mxu0 0.0
      %2703 = vmatprep.subr.mxu0 0.0
      %2704 = vmatpush1.msra.mxu0 0.0
      %2705 = vmatprep.subr.mxu0 0.0
      %2706 = vmatpush1.msra.mxu0 0.0
      %2707 = vmatprep.subr.mxu0 0.0
      %2708 = vmatpush1.msra.mxu0 0.0
      %2709 = vmatprep.subr.mxu0 0.0
      %2710 = vmatpush1.msra.mxu0 0.0
      %2711 = vmatprep.subr.mxu0 0.0
      %2712 = vmatpush1.msra.mxu0 0.0
      %2713 = vmatprep.subr.mxu0 0.0
      %2714 = vmatpush1.msra.mxu0 0.0
      %2715 = vmatprep.subr.mxu0 0.0
      %2716 = vmatpush1.msra.mxu0 0.0
      %2717 = vmatprep.subr.mxu0 0.0
      %2718 = vmatpush1.msra.mxu0 0.0
      %2719 = vmatprep.subr.mxu0 0.0
      %2720 = vmatpush1.msra.mxu0 0.0
      %2721 = vmatprep.subr.mxu0 0.0
      %2722 = vmatpush1.msra.mxu0 0.0
      %2723 = vmatprep.subr.mxu0 0.0
      %2724 = vmatpush1.msra.mxu0 0.0
      %2725 = vmatprep.subr.mxu0 0.0
      %2726 = vmatpush1.msra.mxu0 0.0
      %2727 = vmatprep.subr.mxu0 0.0
      %2728 = vmatpush1.msra.mxu0 0.0
      %2729 = vmatprep.subr.mxu0 0.0
      %2730 = vmatpush1.msra.mxu0 0.0
      %2731 = vmatprep.subr.mxu0 0.0
      %2732 = vmatpush1.msra.mxu0 0.0
      %2733 = vmatprep.subr.mxu0 0.0
      %2734 = vmatpush1.msra.mxu0 0.0
      %2735 = vmatprep.subr.mxu0 0.0
      %2736 = vmatpush1.msra.mxu0 0.0
      %2737 = vmatprep.subr.mxu0 0.0
      %2738 = vmatpush1.msra.mxu0 0.0
      %2739 = vmatprep.subr.mxu0 0.0
      %2740 = vmatpush1.msra.mxu0 0.0
      %2741 = vmatprep.subr.mxu0 0.0
      %2742 = vmatpush1.msra.mxu0 0.0
      %2743 = vmatprep.subr.mxu0 0.0
      %2744 = vmatpush1.msra.mxu0 0.0
      %2745 = vmatprep.subr.mxu0 0.0
      %2746 = vmatpush1.msra.mxu0 0.0
      %2747 = vmatprep.subr.mxu0 0.0
      %2748 = vmatpush1.msra.mxu0 0.0
      %2749 = vmatprep.subr.mxu0 0.0
      %2750 = vmatpush1.msra.mxu0 0.0
      %2751 = vmatprep.subr.mxu0 0.0
      %2752 = vmatpush1.msra.mxu0 0.0
      %2753 = vmatprep.subr.mxu0 0.0
      %2754 = vmatpush1.msra.mxu0 0.0
      %2755 = vmatprep.mubr.f32.mxu0 0.0
      %2756 = vmatmul.mubr.f32.gmra.mrb[0].mxu0 %v2686
      %v2757 = vpop.f32.mrb[0].mxu0
      %v2758 = vadd.f32 0.0, %v2757
      %v2759 = vpop.f32.mrb[0].mxu0
      %2760 = vmatprep.mubr.f32.mxu0 0.0
      %2761 = vmatmul.mubr.f32.gmra.mrb[0].mxu0 %v2689
      %v2762 = vpop.f32.mrb[0].mxu0
      %v2763 = vadd.f32 0.0, %v2762
      %v2764 = vpop.f32.mrb[0].mxu0
      %2765 = vdwg.mxu0
      %v2766 = vld [vmem:[%s10] sm:$0xff]
      %v2767 = vld [vmem:[%s10 + $0x8] sm:$0xff]
      %v2768 = vld [vmem:[%s10 + $0x10] sm:$0xff]
      %v2769 = vld [vmem:[%s10 + $0x18] sm:$0xff]
      %v2770 = vld [vmem:[%s10 + $0x20] sm:$0xff]
      %v2771 = vld [vmem:[%s10 + $0x28] sm:$0xff]
      %v2772 = vld [vmem:[%s10 + $0x30] sm:$0xff]
      %v2773 = vld [vmem:[%s10 + $0x38] sm:$0xff]
      %v2774 = vld [vmem:[%s10 + $0x40] sm:$0xff]
      %v2775 = vld [vmem:[%s10 + $0x48] sm:$0xff]
      %v2776 = vld [vmem:[%s10 + $0x50] sm:$0xff]
      %v2777 = vld [vmem:[%s10 + $0x58] sm:$0xff]
      %v2778 = vld [vmem:[%s10 + $0x60] sm:$0xff]
      %v2779 = vld [vmem:[%s10 + $0x68] sm:$0xff]
      %v2780 = vld [vmem:[%s10 + $0x70] sm:$0xff]
      %v2781 = vld [vmem:[%s10 + $0x78] sm:$0xff]
      %v2782 = vsel %vm651, %v1743, 0
      %v2784 = vsel %vm651, %v1744, 0
      %2786 = vmatprep.subr.mxu0 0.0
      %2787 = vmatpush1.msra.mxu0 %v2774
      %2788 = vmatprep.subr.mxu0 0.0
      %2789 = vmatpush1.msra.mxu0 %v2775
      %2790 = vmatprep.subr.mxu0 0.0
      %2791 = vmatpush1.msra.mxu0 %v2776
      %2792 = vmatprep.subr.mxu0 0.0
      %2793 = vmatpush1.msra.mxu0 %v2777
      %2794 = vmatprep.subr.mxu0 0.0
      %2795 = vmatpush1.msra.mxu0 %v2778
      %2796 = vmatprep.subr.mxu0 0.0
      %2797 = vmatpush1.msra.mxu0 %v2779
      %2798 = vmatprep.subr.mxu0 0.0
      %2799 = vmatpush1.msra.mxu0 %v2780
      %2800 = vmatprep.subr.mxu0 0.0
      %2801 = vmatpush1.msra.mxu0 %v2781
      %2802 = vmatprep.subr.mxu0 0.0
      %2803 = vmatpush1.msra.mxu0 0.0
      %2804 = vmatprep.subr.mxu0 0.0
      %2805 = vmatpush1.msra.mxu0 0.0
      %2806 = vmatprep.subr.mxu0 0.0
      %2807 = vmatpush1.msra.mxu0 0.0
      %2808 = vmatprep.subr.mxu0 0.0
      %2809 = vmatpush1.msra.mxu0 0.0
      %2810 = vmatprep.subr.mxu0 0.0
      %2811 = vmatpush1.msra.mxu0 0.0
      %2812 = vmatprep.subr.mxu0 0.0
      %2813 = vmatpush1.msra.mxu0 0.0
      %2814 = vmatprep.subr.mxu0 0.0
      %2815 = vmatpush1.msra.mxu0 0.0
      %2816 = vmatprep.subr.mxu0 0.0
      %2817 = vmatpush1.msra.mxu0 0.0
      %2818 = vmatprep.subr.mxu0 0.0
      %2819 = vmatpush1.msra.mxu0 0.0
      %2820 = vmatprep.subr.mxu0 0.0
      %2821 = vmatpush1.msra.mxu0 0.0
      %2822 = vmatprep.subr.mxu0 0.0
      %2823 = vmatpush1.msra.mxu0 0.0
      %2824 = vmatprep.subr.mxu0 0.0
      %2825 = vmatpush1.msra.mxu0 0.0
      %2826 = vmatprep.subr.mxu0 0.0
      %2827 = vmatpush1.msra.mxu0 0.0
      %2828 = vmatprep.subr.mxu0 0.0
      %2829 = vmatpush1.msra.mxu0 0.0
      %2830 = vmatprep.subr.mxu0 0.0
      %2831 = vmatpush1.msra.mxu0 0.0
      %2832 = vmatprep.subr.mxu0 0.0
      %2833 = vmatpush1.msra.mxu0 0.0
      %2834 = vmatprep.subr.mxu0 0.0
      %2835 = vmatpush1.msra.mxu0 0.0
      %2836 = vmatprep.subr.mxu0 0.0
      %2837 = vmatpush1.msra.mxu0 0.0
      %2838 = vmatprep.subr.mxu0 0.0
      %2839 = vmatpush1.msra.mxu0 0.0
      %2840 = vmatprep.subr.mxu0 0.0
      %2841 = vmatpush1.msra.mxu0 0.0
      %2842 = vmatprep.subr.mxu0 0.0
      %2843 = vmatpush1.msra.mxu0 0.0
      %2844 = vmatprep.subr.mxu0 0.0
      %2845 = vmatpush1.msra.mxu0 0.0
      %2846 = vmatprep.subr.mxu0 0.0
      %2847 = vmatpush1.msra.mxu0 0.0
      %2848 = vmatprep.subr.mxu0 0.0
      %2849 = vmatpush1.msra.mxu0 0.0
      %2850 = vmatprep.mubr.f32.mxu0 0.0
      %2851 = vmatmul.mubr.f32.gmra.mrb[0].mxu0 %v2782
      %v2852 = vpop.f32.mrb[0].mxu0
      %v2853 = vadd.f32 0.0, %v2852
      %v2854 = vpop.f32.mrb[0].mxu0
      %2855 = vmatprep.mubr.f32.mxu0 0.0
      %2856 = vmatmul.mubr.f32.gmra.mrb[0].mxu0 %v2784
      %v2857 = vpop.f32.mrb[0].mxu0
      %v2858 = vadd.f32 0.0, %v2857
      %v2859 = vpop.f32.mrb[0].mxu0
      %2860 = vdwg.mxu0
      %v2861 = vsel %vm651, %v539, 0
      %v2863 = vsel %vm651, %v540, 0
      %2865 = vmatprep.subr.mxu0 0.0
      %2866 = vmatpush1.msra.mxu0 %v2766
      %2867 = vmatprep.subr.mxu0 0.0
      %2868 = vmatpush1.msra.mxu0 %v2767
      %2869 = vmatprep.subr.mxu0 0.0
      %2870 = vmatpush1.msra.mxu0 %v2768
      %2871 = vmatprep.subr.mxu0 0.0
      %2872 = vmatpush1.msra.mxu0 %v2769
      %2873 = vmatprep.subr.mxu0 0.0
      %2874 = vmatpush1.msra.mxu0 %v2770
      %2875 = vmatprep.subr.mxu0 0.0
      %2876 = vmatpush1.msra.mxu0 %v2771
      %2877 = vmatprep.subr.mxu0 0.0
      %2878 = vmatpush1.msra.mxu0 %v2772
      %2879 = vmatprep.subr.mxu0 0.0
      %2880 = vmatpush1.msra.mxu0 %v2773
      %2881 = vmatprep.subr.mxu0 0.0
      %2882 = vmatpush1.msra.mxu0 0.0
      %2883 = vmatprep.subr.mxu0 0.0
      %2884 = vmatpush1.msra.mxu0 0.0
      %2885 = vmatprep.subr.mxu0 0.0
      %2886 = vmatpush1.msra.mxu0 0.0
      %2887 = vmatprep.subr.mxu0 0.0
      %2888 = vmatpush1.msra.mxu0 0.0
      %2889 = vmatprep.subr.mxu0 0.0
      %2890 = vmatpush1.msra.mxu0 0.0
      %2891 = vmatprep.subr.mxu0 0.0
      %2892 = vmatpush1.msra.mxu0 0.0
      %2893 = vmatprep.subr.mxu0 0.0
      %2894 = vmatpush1.msra.mxu0 0.0
      %2895 = vmatprep.subr.mxu0 0.0
      %2896 = vmatpush1.msra.mxu0 0.0
      %2897 = vmatprep.subr.mxu0 0.0
      %2898 = vmatpush1.msra.mxu0 0.0
      %2899 = vmatprep.subr.mxu0 0.0
      %2900 = vmatpush1.msra.mxu0 0.0
      %2901 = vmatprep.subr.mxu0 0.0
      %2902 = vmatpush1.msra.mxu0 0.0
      %2903 = vmatprep.subr.mxu0 0.0
      %2904 = vmatpush1.msra.mxu0 0.0
      %2905 = vmatprep.subr.mxu0 0.0
      %2906 = vmatpush1.msra.mxu0 0.0
      %2907 = vmatprep.subr.mxu0 0.0
      %2908 = vmatpush1.msra.mxu0 0.0
      %2909 = vmatprep.subr.mxu0 0.0
      %2910 = vmatpush1.msra.mxu0 0.0
      %2911 = vmatprep.subr.mxu0 0.0
      %2912 = vmatpush1.msra.mxu0 0.0
      %2913 = vmatprep.subr.mxu0 0.0
      %2914 = vmatpush1.msra.mxu0 0.0
      %2915 = vmatprep.subr.mxu0 0.0
      %2916 = vmatpush1.msra.mxu0 0.0
      %2917 = vmatprep.subr.mxu0 0.0
      %2918 = vmatpush1.msra.mxu0 0.0
      %2919 = vmatprep.subr.mxu0 0.0
      %2920 = vmatpush1.msra.mxu0 0.0
      %2921 = vmatprep.subr.mxu0 0.0
      %2922 = vmatpush1.msra.mxu0 0.0
      %2923 = vmatprep.subr.mxu0 0.0
      %2924 = vmatpush1.msra.mxu0 0.0
      %2925 = vmatprep.subr.mxu0 0.0
      %2926 = vmatpush1.msra.mxu0 0.0
      %2927 = vmatprep.subr.mxu0 0.0
      %2928 = vmatpush1.msra.mxu0 0.0
      %2929 = vmatprep.mubr.f32.mxu0 0.0
      %2930 = vmatmul.mubr.f32.gmra.mrb[0].mxu0 %v2861
      %v2931 = vpop.f32.mrb[0].mxu0
      %v2932 = vadd.f32 %v2853, %v2931
      %v2933 = vpop.f32.mrb[0].mxu0
      %2934 = vmatprep.mubr.f32.mxu0 0.0
      %2935 = vmatmul.mubr.f32.gmra.mrb[0].mxu0 %v2863
      %v2936 = vpop.f32.mrb[0].mxu0
      %v2937 = vadd.f32 %v2858, %v2936
      %v2938 = vpop.f32.mrb[0].mxu0
      %2939 = vdwg.mxu0
      %v2940 = vld [vmem:[%s10 + $0x80] sm:$0xff]
      %v2941 = vld [vmem:[%s10 + $0x88] sm:$0xff]
      %v2942 = vld [vmem:[%s10 + $0x90] sm:$0xff]
      %v2943 = vld [vmem:[%s10 + $0x98] sm:$0xff]
      %v2944 = vld [vmem:[%s10 + $0xa0] sm:$0xff]
      %v2945 = vld [vmem:[%s10 + $0xa8] sm:$0xff]
      %v2946 = vld [vmem:[%s10 + $0xb0] sm:$0xff]
      %v2947 = vld [vmem:[%s10 + $0xb8] sm:$0xff]
      %v2949 = vsel %vm651, %v2758, 0
      %v2952 = vsel %vm651, %v2763, 0
      %2954 = vmatprep.subr.mxu0 0.0
      %2955 = vmatpush1.msra.mxu0 %v2940
      %2956 = vmatprep.subr.mxu0 0.0
      %2957 = vmatpush1.msra.mxu0 %v2941
      %2958 = vmatprep.subr.mxu0 0.0
      %2959 = vmatpush1.msra.mxu0 %v2942
      %2960 = vmatprep.subr.mxu0 0.0
      %2961 = vmatpush1.msra.mxu0 %v2943
      %2962 = vmatprep.subr.mxu0 0.0
      %2963 = vmatpush1.msra.mxu0 %v2944
      %2964 = vmatprep.subr.mxu0 0.0
      %2965 = vmatpush1.msra.mxu0 %v2945
      %2966 = vmatprep.subr.mxu0 0.0
      %2967 = vmatpush1.msra.mxu0 %v2946
      %2968 = vmatprep.subr.mxu0 0.0
      %2969 = vmatpush1.msra.mxu0 %v2947
      %2970 = vmatprep.subr.mxu0 0.0
      %2971 = vmatpush1.msra.mxu0 0.0
      %2972 = vmatprep.subr.mxu0 0.0
      %2973 = vmatpush1.msra.mxu0 0.0
      %2974 = vmatprep.subr.mxu0 0.0
      %2975 = vmatpush1.msra.mxu0 0.0
      %2976 = vmatprep.subr.mxu0 0.0
      %2977 = vmatpush1.msra.mxu0 0.0
      %2978 = vmatprep.subr.mxu0 0.0
      %2979 = vmatpush1.msra.mxu0 0.0
      %2980 = vmatprep.subr.mxu0 0.0
      %2981 = vmatpush1.msra.mxu0 0.0
      %2982 = vmatprep.subr.mxu0 0.0
      %2983 = vmatpush1.msra.mxu0 0.0
      %2984 = vmatprep.subr.mxu0 0.0
      %2985 = vmatpush1.msra.mxu0 0.0
      %2986 = vmatprep.subr.mxu0 0.0
      %2987 = vmatpush1.msra.mxu0 0.0
      %2988 = vmatprep.subr.mxu0 0.0
      %2989 = vmatpush1.msra.mxu0 0.0
      %2990 = vmatprep.subr.mxu0 0.0
      %2991 = vmatpush1.msra.mxu0 0.0
      %2992 = vmatprep.subr.mxu0 0.0
      %2993 = vmatpush1.msra.mxu0 0.0
      %2994 = vmatprep.subr.mxu0 0.0
      %2995 = vmatpush1.msra.mxu0 0.0
      %2996 = vmatprep.subr.mxu0 0.0
      %2997 = vmatpush1.msra.mxu0 0.0
      %2998 = vmatprep.subr.mxu0 0.0
      %2999 = vmatpush1.msra.mxu0 0.0
      %3000 = vmatprep.subr.mxu0 0.0
      %3001 = vmatpush1.msra.mxu0 0.0
      %3002 = vmatprep.subr.mxu0 0.0
      %3003 = vmatpush1.msra.mxu0 0.0
      %3004 = vmatprep.subr.mxu0 0.0
      %3005 = vmatpush1.msra.mxu0 0.0
      %3006 = vmatprep.subr.mxu0 0.0
      %3007 = vmatpush1.msra.mxu0 0.0
      %3008 = vmatprep.subr.mxu0 0.0
      %3009 = vmatpush1.msra.mxu0 0.0
      %3010 = vmatprep.subr.mxu0 0.0
      %3011 = vmatpush1.msra.mxu0 0.0
      %3012 = vmatprep.subr.mxu0 0.0
      %3013 = vmatpush1.msra.mxu0 0.0
      %3014 = vmatprep.subr.mxu0 0.0
      %3015 = vmatpush1.msra.mxu0 0.0
      %3016 = vmatprep.subr.mxu0 0.0
      %3017 = vmatpush1.msra.mxu0 0.0
      %3018 = vmatprep.mubr.f32.mxu0 0.0
      %3019 = vmatmul.mubr.f32.gmra.mrb[0].mxu0 %v2949
      %v3020 = vpop.f32.mrb[0].mxu0
      %v3021 = vadd.f32 0.0, %v3020
      %v3022 = vpop.f32.mrb[0].mxu0
      %3023 = vmatprep.mubr.f32.mxu0 0.0
      %3024 = vmatmul.mubr.f32.gmra.mrb[0].mxu0 %v2952
      %v3025 = vpop.f32.mrb[0].mxu0
      %v3026 = vadd.f32 0.0, %v3025
      %v3027 = vpop.f32.mrb[0].mxu0
      %3028 = vdwg.mxu0
      %v3029 = vadd.f32 %v2932, %v3021
      %v3030 = vadd.f32 %v2937, %v3026
      %v3031 = vld [vmem:[%s11] sm:$0x1]
      %v3033 = vlaneseq
      %v3034 = vshrl.u32 %v3033, 7
      %v3035 = vsub.s32 0, %v3034
      %v3036 = vrot.slane %v3031, %v3035
      %v3038 = vadd.f32 %v3029, %v3036
      %v3039 = vadd.f32 %v3030, %v3036
      %3040 = vst.msk [vmem:[%s538] sm:$0xff] %vm651, %v3038
      %3041 = vst.msk [vmem:[%s538 + $0x8] sm:$0xff] %vm651, %v3039
      %p3042 = scmp.lt.s32.totalorder %s27, 1
      %s3043 = scalar_select %p3042, %s27, 1
      %s3044 = smul.addr %s3043, 2
      %s3045 = smul.addr %s3044, 8
      %s3046 = scalar_lea.vmem %s16, %s3045
      // Predicated region
      $region85: #{ded4_forward.1} parent=83 // pred_check
        %p3047 = pneg %p391
      $region86: #{ded4_forward.1} parent=83 // pred_check_branch
        %3049 = sbr.rel (%p3047) target = $region88
      $region87: #{ded4_forward.1} parent=83 // pred_region
        _
      $region88: #{ded4_forward.1} parent=83 // pred_fallthru
        _
    $region84: #{ded4_forward.1} parent=5 // pred_fallthru
      _
    %p3050 = scmp.le.s32.totalorder 2, %s22
    // Predicated region
    $region89: #{ded4_forward.1} parent=5 // pred_check
      %p3051 = pneg %p3050
    $region90: #{ded4_forward.1} parent=5 // pred_check_branch
      %3053 = sbr.rel (%p3051) target = $region92
    $region91: #{ded4_forward.1} parent=5 // pred_region
      %s3054 = ssub.s32 %s22, 2
      // Predicated region
      $region93: #{ded4_forward.1} parent=91 // pred_check
        %p3055 = pneg %p397
      $region94: #{ded4_forward.1} parent=91 // pred_check_branch
        %3057 = sbr.rel (%p3055) target = $region96
      $region95: #{ded4_forward.1} parent=91 // pred_region
        %p3058 = scmp.lt.s32.totalorder %s28, 1
        %s3059 = scalar_select %p3058, %s28, 1
        %s3060 = smul.addr %s3059, 2
        %s3061 = smul.addr %s3060, 8
        %s3062 = scalar_lea.vmem %s16, %s3061
      $region96: #{ded4_forward.1} parent=91 // pred_fallthru
        _
    $region92: #{ded4_forward.1} parent=5 // pred_fallthru
      _
  $region6: #{ded4_forward.1} parent=0 // loop_footer
    %s26 = sadd.s32 1, %s22
  $region7: #{ded4_forward.1} parent=0 // loop_footer_branch
    %21 = sbr.rel target = $region3
  $region8: #{ded4_forward.1} parent=0 // loop_exit
    _

</llo_original>
